<compile_context>
chip_gen: v5e
topology: v5e:2x2
jax: 0.10.0
libtpu: 0.0.40
codegen_flags: <defaults>
</compile_context>

<pallas_src>
import math
from functools import partial

import jax
import jax.numpy as jnp
from jax import lax
from jax.experimental import pallas as pl
from jax.experimental.pallas import tpu as pltpu


def _mosaic_params(**kw):
    cls = getattr(pltpu, "CompilerParams", None) or getattr(pltpu, "TPUCompilerParams", None)
    return cls(**kw) if cls is not None else None


# -----------------------------------------------------------------------------
# Packed parameter slab layouts (shared by host-side packing and kernel slicing)
# -----------------------------------------------------------------------------
def _wa_layout(D, E):
    """Column layout of slab A: every per-block matrix with D rows, concatenated."""
    offs, c = {}, 0
    for name, w in (("ff1_w1", E * D), ("att_wqkv", 3 * D), ("att_wpos", D),
                    ("att_wo", D), ("cv_pw1", 2 * D), ("cv_pw2", D), ("ff2_w1", E * D)):
        offs[name] = (c, w)
        c += w
    return offs, c


def _vec_layout(D, K, E):
    """Row layout of slab C: LN pairs / biases / u,v / folded BN / depthwise taps."""
    rows = (("ff1_ln", 2, D), ("ff1_b1", 1, E * D), ("ff1_b2", 1, D),
            ("att_ln", 2, D), ("att_bqkv", 1, 3 * D), ("att_u", 1, D), ("att_v", 1, D),
            ("att_bo", 1, D),
            ("cv_ln", 2, D), ("cv_pw1b", 1, 2 * D), ("cv_dw", K, D), ("cv_bn", 2, D),
            ("cv_pw2b", 1, D),
            ("ff2_ln", 2, D), ("ff2_b1", 1, E * D), ("ff2_b2", 1, D),
            ("fin_ln", 2, D))
    offs, r = {}, 0
    width = max(w for _, _, w in rows)
    for name, n, w in rows:
        offs[name] = (r, n, w)
        r += n
    return offs, r, width


def _pack_layer(blk, D, K, E):
    ff1, mh, cv, ff2 = blk['ff1'], blk['mhsa'], blk['conv'], blk['ff2']
    wa = jnp.concatenate([ff1['w1'], mh['wq'], mh['wk'], mh['wv'], mh['wpos'], mh['wo'],
                          cv['pw1_w'], cv['pw2_w'], ff2['w1']], axis=1)      # (D, 2E*D + 8D)
    wb = jnp.concatenate([ff1['w2'], ff2['w2']], axis=1)                     # (E*D, 2D)

    bn_scale = cv['bn_g'] * lax.rsqrt(cv['bn_var'] + 1e-5)                   # eval-mode BN fold
    bn_shift = cv['bn_b'] - cv['bn_mean'] * bn_scale
    pieces = {
        "ff1_ln": jnp.stack([ff1['ln_g'], ff1['ln_b']]),
        "ff1_b1": ff1['b1'], "ff1_b2": ff1['b2'],
        "att_ln": jnp.stack([mh['ln_g'], mh['ln_b']]),
        "att_bqkv": jnp.concatenate([mh['bq'], mh['bk'], mh['bv']]),
        "att_u": mh['u'].reshape(-1), "att_v": mh['v'].reshape(-1), "att_bo": mh['bo'],
        "cv_ln": jnp.stack([cv['ln_g'], cv['ln_b']]),
        "cv_pw1b": cv['pw1_b'], "cv_dw": cv['dw_w'].T,
        "cv_bn": jnp.stack([bn_scale, bn_shift]), "cv_pw2b": cv['pw2_b'],
        "ff2_ln": jnp.stack([ff2['ln_g'], ff2['ln_b']]),
        "ff2_b1": ff2['b1'], "ff2_b2": ff2['b2'],
        "fin_ln": jnp.stack([blk['ln_g'], blk['ln_b']]),
    }
    offs, _, width = _vec_layout(D, K, E)
    rows = []
    for name in offs:
        v = pieces[name]
        v2 = v if v.ndim == 2 else v.reshape(1, -1)
        rows.append(jnp.pad(v2, ((0, 0), (0, width - v2.shape[1]))))
    vec = jnp.concatenate(rows, axis=0)
    return (wa.astype(jnp.float32), wb.astype(jnp.float32), vec.astype(jnp.float32))


def _pack_stack(blocks, D, K, E):
    per = [_pack_layer(b, D, K, E) for b in blocks]
    return (jnp.stack([t[0] for t in per]),          # (L, D, 2E*D + 8D)
            jnp.stack([t[1] for t in per]),          # (L, E*D, 2D)
            jnp.stack([t[2] for t in per]))          # (L, R, max_width)


# -----------------------------------------------------------------------------
# In-kernel helpers
# -----------------------------------------------------------------------------
def _sigmoid(x):
    return 1.0 / (1.0 + jnp.exp(-x))


def _softmax_rows(x):
    m = jnp.max(x, axis=-1, keepdims=True)
    e = jnp.exp(x - m)
    return e * pl.reciprocal(jnp.sum(e, axis=-1, keepdims=True), approx=True)


def _rel_shift(p):
    """Transformer-XL relative shift of a (H, T, T) score tensor, batched over heads.

    out[:, i, j] = p[:, i, T-1-i+j] (j <= i); 0 (j == i+1); p[:, i+1, j-i-2] (j >= i+2)
    which matches torch's pad-one-zero-column + reshape trick exactly.  Built from static
    slices/concats (robust Mosaic lowering); a single pass handles every head at once.
    """
    Hn, T, _ = p.shape
    zero = jnp.zeros((Hn, 1, 1), p.dtype)
    rows = []
    for i in range(T - 1):
        pieces = [p[:, i:i + 1, T - 1 - i:], zero]
        if T - 2 - i > 0:
            pieces.append(p[:, i + 1:i + 2, :T - 2 - i])
        rows.append(jnp.concatenate(pieces, axis=2))
    rows.append(p[:, T - 1:T, :])
    return jnp.concatenate(rows, axis=1)


# -----------------------------------------------------------------------------
# Fused per-stage kernel: grid=(B, L); one grid step = one ConformerBlock on one batch
# -----------------------------------------------------------------------------
def _stack_kernel(x_ref, pos_ref, wa_ref, wb_ref, vec_ref, o_ref,
                  *, T, D, H, K, E, ff_res):
    dh = D // H
    pad = (K - 1) // 2
    inv_sqrt_d = 1.0 / math.sqrt(D)
    wa_offs, _ = _wa_layout(D, E)
    v_offs, _, _ = _vec_layout(D, K, E)

    l = pl.program_id(1)

    @pl.when(l == 0)                           # layer 0: seed the carried activation
    def _():
        o_ref[...] = x_ref[...]

    x = o_ref[...]                             # (T, D), VMEM-resident across all layers
    wa = wa_ref[...]                           # packed D-row matrices (this layer)
    wb = wb_ref[...]                           # packed E*D-row matrices
    vec = vec_ref[...]                         # packed vector rows

    def wm(name):
        c0, w = wa_offs[name]
        return wa[:, c0:c0 + w]

    def vrow(name):
        r0, n, w = v_offs[name]
        return vec[r0:r0 + n, :w]

    def layer_norm(h, name):
        prm = vrow(name)
        mu = jnp.mean(h, axis=-1, keepdims=True)
        hc = h - mu
        var = jnp.mean(hc * hc, axis=-1, keepdims=True)
        return hc * lax.rsqrt(var + 1e-5) * prm[0:1, :] + prm[1:2, :]

    def feed_forward(h, tag, w2):
        h = layer_norm(h, tag + "_ln")
        h = jnp.dot(h, wm(tag + "_w1"), preferred_element_type=jnp.float32) + vrow(tag + "_b1")
        h = h * _sigmoid(h)                    # Swish
        return jnp.dot(h, w2, preferred_element_type=jnp.float32) + vrow(tag + "_b2")

    # ---- feed-forward module #1 (half-step residual) --------------------------
    x = x + ff_res * feed_forward(x, "ff1", wb[:, :D])

    # ---- relative multi-head self-attention (batched over heads) --------------
    xn = layer_norm(x, "att_ln")
    qkv = jnp.dot(xn, wm("att_wqkv"), preferred_element_type=jnp.float32) + vrow("att_bqkv")
    pe = jnp.dot(pos_ref[...], wm("att_wpos"), preferred_element_type=jnp.float32)   # (T, D)
    u_row, v_row = vrow("att_u"), vrow("att_v")

    q3 = jnp.stack([qkv[:, h * dh:(h + 1) * dh] for h in range(H)], axis=0)           # (H,T,dh)
    k3 = jnp.stack([qkv[:, D + h * dh:D + (h + 1) * dh] for h in range(H)], axis=0)
    v3 = jnp.stack([qkv[:, 2 * D + h * dh:2 * D + (h + 1) * dh] for h in range(H)], axis=0)
    p3 = jnp.stack([pe[:, h * dh:(h + 1) * dh] for h in range(H)], axis=0)
    u3 = jnp.stack([u_row[:, h * dh:(h + 1) * dh] for h in range(H)], axis=0)          # (H,1,dh)
    ub3 = jnp.stack([v_row[:, h * dh:(h + 1) * dh] for h in range(H)], axis=0)

    content = jnp.einsum('htd,hsd->hts', q3 + u3, k3, preferred_element_type=jnp.float32)
    pscore = jnp.einsum('htd,hsd->hts', q3 + ub3, p3, preferred_element_type=jnp.float32)
    score = (content + _rel_shift(pscore)) * inv_sqrt_d
    mx = jnp.max(score, axis=-1, keepdims=True)
    ex = jnp.exp(score - mx)
    attn = ex * pl.reciprocal(jnp.sum(ex, axis=-1, keepdims=True), approx=True)
    ctx3 = jnp.einsum('hts,hsd->htd', attn, v3, preferred_element_type=jnp.float32)    # (H,T,dh)
    ctx = jnp.concatenate([ctx3[h] for h in range(H)], axis=1)                         # (T, D)
    x = x + jnp.dot(ctx, wm("att_wo"), preferred_element_type=jnp.float32) + vrow("att_bo")

    # ---- convolution module ----------------------------------------------------
    h = layer_norm(x, "cv_ln")
    h = jnp.dot(h, wm("cv_pw1"), preferred_element_type=jnp.float32) + vrow("cv_pw1b")  # (T,2D)
    h = h[:, :D] * _sigmoid(h[:, D:])                       # GLU over channels
    dw = vrow("cv_dw")                                      # (K, D) depthwise taps
    zpad = jnp.zeros((pad, D), jnp.float32)
    hp = jnp.concatenate([zpad, h, zpad], axis=0)           # (T + K - 1, D)
    acc = hp[0:T, :] * dw[0:1, :]
    for tap in range(1, K):                                 # K static sublane shifts + MAC
        acc = acc + hp[tap:tap + T, :] * dw[tap:tap + 1, :]
    bn = vrow("cv_bn")
    h = acc * bn[0:1, :] + bn[1:2, :]                       # folded BatchNorm (eval)
    h = h * _sigmoid(h)                                     # Swish
    h = jnp.dot(h, wm("cv_pw2"), preferred_element_type=jnp.float32) + vrow("cv_pw2b")
    x = x + h

    # ---- feed-forward module #2 + final layer norm ------------------------------
    x = x + ff_res * feed_forward(x, "ff2", wb[:, D:2 * D])
    o_ref[...] = layer_norm(x, "fin_ln")


def conformer_stack(x, pos, packed, *, num_heads, kernel_size, ffe, ff_res):
    """Run all L conformer blocks of one stage in a single pallas_call.

    grid=(B, L): batch axis "parallel" (uses both TCs on v7x), layer axis "arbitrary"
    with the activation carried in the revisited (B-indexed) output block.
    """
    B, T, D = x.shape
    wa, wb, vec = packed
    L, _, WAW = wa.shape
    R, VW = vec.shape[1], vec.shape[2]
    kern = partial(_stack_kernel, T=T, D=D, H=num_heads, K=kernel_size, E=ffe, ff_res=ff_res)
    out = pl.pallas_call(
        kern,
        out_shape=jax.ShapeDtypeStruct((B * T, D), jnp.float32),
        grid=(B, L),
        in_specs=[
            pl.BlockSpec((T, D), lambda b, l: (b, 0)),                    # activations (per b)
            pl.BlockSpec((T, D), lambda b, l: (0, 0)),                    # positional encoding
            pl.BlockSpec((None, D, WAW), lambda b, l: (l, 0, 0)),         # slab A (layer l)
            pl.BlockSpec((None, ffe * D, 2 * D), lambda b, l: (l, 0, 0)),  # slab B (layer l)
            pl.BlockSpec((None, R, VW), lambda b, l: (l, 0, 0)),          # slab C (layer l)
        ],
        out_specs=pl.BlockSpec((T, D), lambda b, l: (b, 0)),
        compiler_params=_mosaic_params(dimension_semantics=("parallel", "arbitrary")),
    )(x.reshape(B * T, D).astype(jnp.float32), pos.astype(jnp.float32), wa, wb, vec)
    return out.reshape(B, T, D)


# -----------------------------------------------------------------------------
# Small fused helper kernels (linear(+ReLU), fused conv2+flatten+proj, decoder stem)
# -----------------------------------------------------------------------------
def _linear_kernel(x_ref, w_ref, b_ref, o_ref, *, relu):
    y = jnp.dot(x_ref[...], w_ref[...], preferred_element_type=jnp.float32) + b_ref[...]
    if relu:
        y = jnp.maximum(y, 0.0)
    o_ref[...] = y


def pallas_linear(x2, w, b=None, relu=False):
    M, N = x2.shape[0], w.shape[1]
    if b is None:
        b = jnp.zeros((N,), jnp.float32)
    return pl.pallas_call(
        partial(_linear_kernel, relu=relu),
        out_shape=jax.ShapeDtypeStruct((M, N), jnp.float32),
    )(x2.astype(jnp.float32), w.astype(jnp.float32), b.reshape(1, N).astype(jnp.float32))


def _conv2_proj_kernel(p_ref, w2_ref, b2_ref, wp_ref, bp_ref, o_ref, *, F2, rows_per_f, C):
    # conv2 (im2col'd) + ReLU, then the (channel, freq) flatten + input projection are
    # realised as a sum over frequency positions of small matmuls -> one fused kernel.
    y = jnp.dot(p_ref[...], w2_ref[...], preferred_element_type=jnp.float32) + b2_ref[...]
    y = jnp.maximum(y, 0.0)                                   # (F2*B*T2, C)
    wp = wp_ref[...]
    out = jnp.dot(y[0:rows_per_f, :], wp[0:C, :], preferred_element_type=jnp.float32)
    for f in range(1, F2):
        out = out + jnp.dot(y[f * rows_per_f:(f + 1) * rows_per_f, :],
                            wp[f * C:(f + 1) * C, :], preferred_element_type=jnp.float32)
    o_ref[...] = out + bp_ref[...]


def pallas_conv2_proj(patches, w2m, b2, wproj_f, bproj, *, F2, rows_per_f, C, Dout):
    return pl.pallas_call(
        partial(_conv2_proj_kernel, F2=F2, rows_per_f=rows_per_f, C=C),
        out_shape=jax.ShapeDtypeStruct((rows_per_f, Dout), jnp.float32),
    )(patches.astype(jnp.float32), w2m.astype(jnp.float32),
      b2.reshape(1, -1).astype(jnp.float32), wproj_f.astype(jnp.float32),
      bproj.reshape(1, -1).astype(jnp.float32))


def _dec_stem_kernel(logits_ref, enc_ref, w_ref, b_ref, o_ref):
    prob = _softmax_rows(logits_ref[...])
    o_ref[...] = (jnp.dot(prob, w_ref[...], preferred_element_type=jnp.float32)
                  + b_ref[...] + enc_ref[...])


def pallas_decoder_stem(logits2, enc2, emb_w, emb_b):
    M, D = enc2.shape
    return pl.pallas_call(
        _dec_stem_kernel,
        out_shape=jax.ShapeDtypeStruct((M, D), jnp.float32),
    )(logits2.astype(jnp.float32), enc2.astype(jnp.float32),
      emb_w.astype(jnp.float32), emb_b.reshape(1, D).astype(jnp.float32))


# -----------------------------------------------------------------------------
# Model glue (one-shot XLA ops: im2col, transposes, interpolate) around the kernels
# -----------------------------------------------------------------------------
def sinusoid_pos_encoding(length, d_model):
    pos = jnp.arange(length, dtype=jnp.float32)[:, None]
    div = jnp.exp(jnp.arange(0, d_model, 2, dtype=jnp.float32) * -(math.log(10000.0) / d_model))
    pe = jnp.zeros((length, d_model), jnp.float32)
    pe = pe.at[:, 0::2].set(jnp.sin(pos * div))
    pe = pe.at[:, 1::2].set(jnp.cos(pos * div))
    return pe


def _im2col_s2(x_nchw, k=3, s=2):
    B, C, Hh, W = x_nchw.shape
    Ho = (Hh - k) // s + 1
    Wo = (W - k) // s + 1
    cols = []
    for di in range(k):
        for dj in range(k):
            cols.append(x_nchw[:, :, di:di + s * Ho:s, dj:dj + s * Wo:s])
    p = jnp.stack(cols, axis=2)                                 # (B, C, 9, Ho, Wo)
    p = p.transpose(0, 3, 4, 1, 2).reshape(B * Ho * Wo, C * k * k)
    return p, Ho, Wo


def _im2col_s2_fmajor(x_nchw, k=3, s=2):
    """im2col with rows ordered (wo, b, ho): for each output-frequency index f2 all
    (batch, time) rows form one contiguous block, so the fused conv2+projection kernel
    only needs static row slices."""
    B, C, Hh, W = x_nchw.shape
    Ho = (Hh - k) // s + 1
    Wo = (W - k) // s + 1
    cols = []
    for di in range(k):
        for dj in range(k):
            cols.append(x_nchw[:, :, di:di + s * Ho:s, dj:dj + s * Wo:s])
    p = jnp.stack(cols, axis=2)                                 # (B, C, 9, Ho, Wo)
    p = p.transpose(4, 0, 3, 1, 2).reshape(Wo * B * Ho, C * k * k)
    return p, Ho, Wo


def encoder_forward(x, p, cfg):
    B, T0, D = x.shape
    # --- Conv2dSubsampling stem: conv1 (im2col + fused matmul/ReLU kernel), then
    #     conv2 + (channel,freq) flatten + input projection fused in a single kernel. ---
    h = x[:, None, :, :]                                        # (B, 1, T0, D) NCHW
    p1, T1, F1 = _im2col_s2(h)
    c1 = pallas_linear(p1, p['sub1_w'].reshape(D, -1).T, p['sub1_b'], relu=True)
    c1 = c1.reshape(B, T1, F1, D).transpose(0, 3, 1, 2)         # NCHW (B, D, T1, F1)

    p2, T2, F2 = _im2col_s2_fmajor(c1)
    # reorder proj weight so rows for a given f2 are contiguous (channel-major inside)
    wproj_f = p['proj_w'].reshape(D, F2, D).transpose(1, 0, 2).reshape(F2 * D, D)
    h = pallas_conv2_proj(p2, p['sub2_w'].reshape(D, -1).T, p['sub2_b'], wproj_f,
                          p['proj_b'], F2=F2, rows_per_f=B * T2, C=D, Dout=D)
    h = h.reshape(B, T2, D)

    pos = sinusoid_pos_encoding(T2, D)
    packed = _pack_stack(p['blocks'], D, cfg['conv_kernel_size'],
                         cfg['feed_forward_expansion_factor'])
    ff_res = 0.5 if cfg['half_step_residual'] else 1.0
    return conformer_stack(h, pos, packed, num_heads=cfg['num_attention_heads'],
                           kernel_size=cfg['conv_kernel_size'],
                           ffe=cfg['feed_forward_expansion_factor'], ff_res=ff_res)


def decoder_forward(out_logits, enc, p, cfg):
    # TODO(synk): ConformerDecoder internals are not in the provided source; reconstructed as
    #             class-prob embedding fused additively with encoder features + conformer
    #             blocks + linear classification head.
    B, T, D = enc.shape
    x = pallas_decoder_stem(out_logits.reshape(B * T, -1), enc.reshape(B * T, D),
                            p['emb_w'], p['emb_b']).reshape(B, T, D)
    pos = sinusoid_pos_encoding(T, D)
    packed = _pack_stack(p['blocks'], D, cfg['conv_kernel_size'],
                         cfg['feed_forward_expansion_factor'])
    ff_res = 0.5 if cfg['half_step_residual'] else 1.0
    x = conformer_stack(x, pos, packed, num_heads=cfg['num_attention_heads'],
                        kernel_size=cfg['conv_kernel_size'],
                        ffe=cfg['feed_forward_expansion_factor'], ff_res=ff_res)
    return pallas_linear(x.reshape(B * T, D), p['cls_w']).reshape(B, T, -1)


def interpolate_nearest_2d(x, out_h, out_w):
    # matches F.interpolate(mode='nearest') on NCHW: src = floor(dst * in / out)
    N, C, Hh, W = x.shape
    hi = (jnp.arange(out_h) * Hh) // out_h
    wi = (jnp.arange(out_w) * W) // out_w
    return x[:, :, hi, :][:, :, :, wi]


def conformer_forward(params, inputs, masks, cfg):
    assert cfg['conv_expansion_factor'] == 2        # GLU halves the expansion (as in reference)
    B, Cin, T = inputs.shape
    D = cfg['encoder_dim']
    # embedding Conv1d(k=1) == per-frame linear, then (B, T, D)
    x = pallas_linear(inputs.transpose(0, 2, 1).reshape(B * T, Cin),
                      params['emb_w'], params['emb_b']).reshape(B, T, D)
    enc = encoder_forward(x, params['encoder'], cfg)                       # (B, T', D)
    Bp, Tp, _ = enc.shape
    out = pallas_linear(enc.reshape(Bp * Tp, D), params['cls_w']).reshape(Bp, Tp, -1)
    outputs = [out]
    for dec_p in params['decoders']:
        out = decoder_forward(out, enc, dec_p, cfg)
        outputs.append(out)
    outputs = jnp.stack(outputs, axis=0)                                   # (stages, B, T', C)
    outputs = outputs.transpose(0, 1, 3, 2)                                # (stages, B, C, T')
    outputs = interpolate_nearest_2d(outputs, cfg['num_classes'], masks.shape[-1])
    return outputs * masks[:, 0:1, :]


# -----------------------------------------------------------------------------
# Deterministic parameter init (synthetic weights; shapes match the PyTorch module)
# -----------------------------------------------------------------------------
def _nrm(key, shape, scale=0.05):
    return scale * jax.random.normal(key, shape, dtype=jnp.float32)


def _init_ff(key, D, ffe):
    k1, k2 = jax.random.split(key)
    return dict(ln_g=jnp.ones((D,), jnp.float32), ln_b=jnp.zeros((D,), jnp.float32),
                w1=_nrm(k1, (D, D * ffe)), b1=jnp.zeros((D * ffe,), jnp.float32),
                w2=_nrm(k2, (D * ffe, D)), b2=jnp.zeros((D,), jnp.float32))


def _init_mhsa(key, D, H):
    dh = D // H
    ks = jax.random.split(key, 7)
    return dict(ln_g=jnp.ones((D,), jnp.float32), ln_b=jnp.zeros((D,), jnp.float32),
                wq=_nrm(ks[0], (D, D)), bq=jnp.zeros((D,), jnp.float32),
                wk=_nrm(ks[1], (D, D)), bk=jnp.zeros((D,), jnp.float32),
                wv=_nrm(ks[2], (D, D)), bv=jnp.zeros((D,), jnp.float32),
                wpos=_nrm(ks[3], (D, D)),
                u=_nrm(ks[4], (H, dh)), v=_nrm(ks[5], (H, dh)),
                wo=_nrm(ks[6], (D, D)), bo=jnp.zeros((D,), jnp.float32))


def _init_conv(key, D, ce, K):
    ks = jax.random.split(key, 3)
    return dict(ln_g=jnp.ones((D,), jnp.float32), ln_b=jnp.zeros((D,), jnp.float32),
                pw1_w=_nrm(ks[0], (D, D * ce)), pw1_b=jnp.zeros((D * ce,), jnp.float32),
                dw_w=_nrm(ks[1], (D, K)),
                bn_g=jnp.ones((D,), jnp.float32), bn_b=jnp.zeros((D,), jnp.float32),
                bn_mean=jnp.zeros((D,), jnp.float32), bn_var=jnp.ones((D,), jnp.float32),
                pw2_w=_nrm(ks[2], (D, D)), pw2_b=jnp.zeros((D,), jnp.float32))


def _init_block(key, cfg):
    D = cfg['encoder_dim']
    ks = jax.random.split(key, 4)
    return dict(ff1=_init_ff(ks[0], D, cfg['feed_forward_expansion_factor']),
                mhsa=_init_mhsa(ks[1], D, cfg['num_attention_heads']),
                conv=_init_conv(ks[2], D, cfg['conv_expansion_factor'], cfg['conv_kernel_size']),
                ff2=_init_ff(ks[3], D, cfg['feed_forward_expansion_factor']),
                ln_g=jnp.ones((D,), jnp.float32), ln_b=jnp.zeros((D,), jnp.float32))


def _init_encoder(key, cfg):
    D = cfg['encoder_dim']
    L = cfg['num_encoder_layers']
    F2 = (((D - 1) // 2) - 1) // 2      # freq dim after two stride-2 3x3 convs
    ks = jax.random.split(key, L + 3)
    blocks = [_init_block(ks[i], cfg) for i in range(L)]
    return dict(sub1_w=_nrm(ks[L], (D, 1, 3, 3)), sub1_b=jnp.zeros((D,), jnp.float32),
                sub2_w=_nrm(ks[L + 1], (D, D, 3, 3)), sub2_b=jnp.zeros((D,), jnp.float32),
                proj_w=_nrm(ks[L + 2], (D * F2, D)), proj_b=jnp.zeros((D,), jnp.float32),
                blocks=blocks)


def _init_decoder(key, cfg):
    D, C, L = cfg['encoder_dim'], cfg['num_classes'], cfg['num_encoder_layers']
    ks = jax.random.split(key, L + 2)
    blocks = [_init_block(ks[i], cfg) for i in range(L)]
    return dict(emb_w=_nrm(ks[L], (C, D)), emb_b=jnp.zeros((D,), jnp.float32),
                cls_w=_nrm(ks[L + 1], (D, C)),
                blocks=blocks)


def init_params(key, cfg):
    ks = jax.random.split(key, 3 + cfg['num_stages'] - 1)
    return dict(emb_w=_nrm(ks[0], (cfg['input_dim'], cfg['encoder_dim'])),
                emb_b=jnp.zeros((cfg['encoder_dim'],), jnp.float32),
                encoder=_init_encoder(ks[1], cfg),
                cls_w=_nrm(ks[2], (cfg['encoder_dim'], cfg['num_classes'])),
                decoders=[_init_decoder(ks[3 + i], cfg) for i in range(cfg['num_stages'] - 1)])


CFG = dict(
    num_classes=12,
    input_dim=16,
    encoder_dim=16,
    num_encoder_layers=2,
    num_stages=2,                   # -> 1 decoder stage
    num_attention_heads=2,
    feed_forward_expansion_factor=4,
    conv_expansion_factor=2,
    conv_kernel_size=7,
    half_step_residual=True,
    need_subsampling=True,
)


if __name__ == "__main__":
    key = jax.random.PRNGKey(0)
    pkey, xkey = jax.random.split(key)
    params = init_params(pkey, CFG)

    # input T chosen so the post-subsample length (36 -> 17 -> 8) is sublane-aligned.
    B, T = 2, 36
    inputs = jax.random.normal(xkey, (B, CFG['input_dim'], T), dtype=jnp.float32)  # (B, C, T)
    masks = jnp.ones((B, 1, T), jnp.float32).at[1, :, 28:].set(0.0)                # (B, 1, T)

    fwd = jax.jit(lambda p, x, m: conformer_forward(p, x, m, CFG))
    out = fwd(params, inputs, masks)
    jax.block_until_ready(out)

    assert out.shape == (CFG['num_stages'], B, CFG['num_classes'], T), out.shape
    assert bool(jnp.all(jnp.isfinite(out)))
    print("KERNEL_OK")
</pallas_src>

<mosaic_0001>
module attributes {stable_mosaic.version = 11 : i64} {
  func.func @_linear_kernel(%arg0: memref<72x16xf32, #tpu.memory_space<vmem>>, %arg1: memref<16x16xf32, #tpu.memory_space<vmem>>, %arg2: memref<1x16xf32, #tpu.memory_space<vmem>>, %arg3: memref<72x16xf32, #tpu.memory_space<vmem>>) attributes {dimension_semantics = [], scalar_prefetch = 0 : i64, scratch_operands = 0 : i64, tpu.core_type = #tpu.core_type<tc>} {
    %c0 = arith.constant 0 : index
    %c0_0 = arith.constant 0 : index
    %0 = vector.load %arg0[%c0, %c0_0] : memref<72x16xf32, #tpu.memory_space<vmem>>, vector<72x16xf32>
    %c0_1 = arith.constant 0 : index
    %c0_2 = arith.constant 0 : index
    %1 = vector.load %arg1[%c0_1, %c0_2] : memref<16x16xf32, #tpu.memory_space<vmem>>, vector<16x16xf32>
    %cst = arith.constant dense<0.000000e+00> : vector<72x16xf32>
    %2 = tpu.matmul %0, %1, %cst {dimension_numbers = #tpu.dot_dimension_numbers<[1], [0], [0], [1], [0, 0, 1, 1], [], []>} : vector<72x16xf32>, vector<16x16xf32>, vector<72x16xf32> -> vector<72x16xf32>
    %c0_3 = arith.constant 0 : index
    %c0_4 = arith.constant 0 : index
    %3 = vector.load %arg2[%c0_3, %c0_4] : memref<1x16xf32, #tpu.memory_space<vmem>>, vector<1x16xf32>
    %4 = vector.broadcast %3 : vector<1x16xf32> to vector<72x16xf32>
    %5 = arith.addf %2, %4 : vector<72x16xf32>
    %c0_5 = arith.constant 0 : index
    %c0_6 = arith.constant 0 : index
    %6 = vector.load %arg3[%c0_5, %c0_6] : memref<72x16xf32, #tpu.memory_space<vmem>>, vector<72x16xf32>
    tpu.vector_store %arg3[%c0_5, %c0_6], %5 {strides = array<i32>} : memref<72x16xf32, #tpu.memory_space<vmem>>, vector<72x16xf32>,
    return
  }
}

module attributes {stable_mosaic.version = 11 : i64} {
  func.func @_linear_kernel(%arg0: memref<238x9xf32, #tpu.memory_space<vmem>>, %arg1: memref<9x16xf32, #tpu.memory_space<vmem>>, %arg2: memref<1x16xf32, #tpu.memory_space<vmem>>, %arg3: memref<238x16xf32, #tpu.memory_space<vmem>>) attributes {dimension_semantics = [], scalar_prefetch = 0 : i64, scratch_operands = 0 : i64, tpu.core_type = #tpu.core_type<tc>} {
    %c0 = arith.constant 0 : index
    %c0_0 = arith.constant 0 : index
    %0 = vector.load %arg0[%c0, %c0_0] : memref<238x9xf32, #tpu.memory_space<vmem>>, vector<238x9xf32>
    %c0_1 = arith.constant 0 : index
    %c0_2 = arith.constant 0 : index
    %1 = vector.load %arg1[%c0_1, %c0_2] : memref<9x16xf32, #tpu.memory_space<vmem>>, vector<9x16xf32>
    %cst = arith.constant dense<0.000000e+00> : vector<238x16xf32>
    %2 = tpu.matmul %0, %1, %cst {dimension_numbers = #tpu.dot_dimension_numbers<[1], [0], [0], [1], [0, 0, 1, 1], [], []>} : vector<238x9xf32>, vector<9x16xf32>, vector<238x16xf32> -> vector<238x16xf32>
    %c0_3 = arith.constant 0 : index
    %c0_4 = arith.constant 0 : index
    %3 = vector.load %arg2[%c0_3, %c0_4] : memref<1x16xf32, #tpu.memory_space<vmem>>, vector<1x16xf32>
    %4 = vector.broadcast %3 : vector<1x16xf32> to vector<238x16xf32>
    %5 = arith.addf %2, %4 : vector<238x16xf32>
    %cst_5 = arith.constant 0.000000e+00 : f32
    %6 = vector.broadcast %cst_5 : f32 to vector<238x16xf32>
    %7 = arith.maximumf %5, %6 : vector<238x16xf32>
    %c0_6 = arith.constant 0 : index
    %c0_7 = arith.constant 0 : index
    %8 = vector.load %arg3[%c0_6, %c0_7] : memref<238x16xf32, #tpu.memory_space<vmem>>, vector<238x16xf32>
    tpu.vector_store %arg3[%c0_6, %c0_7], %7 {strides = array<i32>} : memref<238x16xf32, #tpu.memory_space<vmem>>, vector<238x16xf32>,
    return
  }
}

module attributes {stable_mosaic.version = 11 : i64} {
  func.func @_conv2_proj_kernel(%arg0: memref<48x144xf32, #tpu.memory_space<vmem>>, %arg1: memref<144x16xf32, #tpu.memory_space<vmem>>, %arg2: memref<1x16xf32, #tpu.memory_space<vmem>>, %arg3: memref<48x16xf32, #tpu.memory_space<vmem>>, %arg4: memref<1x16xf32, #tpu.memory_space<vmem>>, %arg5: memref<16x16xf32, #tpu.memory_space<vmem>>) attributes {dimension_semantics = [], scalar_prefetch = 0 : i64, scratch_operands = 0 : i64, tpu.core_type = #tpu.core_type<tc>} {
    %c0 = arith.constant 0 : index
    %c0_0 = arith.constant 0 : index
    %0 = vector.load %arg0[%c0, %c0_0] : memref<48x144xf32, #tpu.memory_space<vmem>>, vector<48x144xf32>
    %c0_1 = arith.constant 0 : index
    %c0_2 = arith.constant 0 : index
    %1 = vector.load %arg1[%c0_1, %c0_2] : memref<144x16xf32, #tpu.memory_space<vmem>>, vector<144x16xf32>
    %cst = arith.constant dense<0.000000e+00> : vector<48x16xf32>
    %2 = tpu.matmul %0, %1, %cst {dimension_numbers = #tpu.dot_dimension_numbers<[1], [0], [0], [1], [0, 0, 1, 1], [], []>} : vector<48x144xf32>, vector<144x16xf32>, vector<48x16xf32> -> vector<48x16xf32>
    %c0_3 = arith.constant 0 : index
    %c0_4 = arith.constant 0 : index
    %3 = vector.load %arg2[%c0_3, %c0_4] : memref<1x16xf32, #tpu.memory_space<vmem>>, vector<1x16xf32>
    %4 = vector.broadcast %3 : vector<1x16xf32> to vector<48x16xf32>
    %5 = arith.addf %2, %4 : vector<48x16xf32>
    %cst_5 = arith.constant 0.000000e+00 : f32
    %6 = vector.broadcast %cst_5 : f32 to vector<48x16xf32>
    %7 = arith.maximumf %5, %6 : vector<48x16xf32>
    %c0_6 = arith.constant 0 : index
    %c0_7 = arith.constant 0 : index
    %8 = vector.load %arg3[%c0_6, %c0_7] : memref<48x16xf32, #tpu.memory_space<vmem>>, vector<48x16xf32>
    %9 = vector.extract_strided_slice %7 {offsets = [0, 0], sizes = [16, 16], strides = [1, 1]} : vector<48x16xf32> to vector<16x16xf32>
    %10 = vector.extract_strided_slice %8 {offsets = [0, 0], sizes = [16, 16], strides = [1, 1]} : vector<48x16xf32> to vector<16x16xf32>
    %cst_8 = arith.constant dense<0.000000e+00> : vector<16x16xf32>
    %11 = tpu.matmul %9, %10, %cst_8 {dimension_numbers = #tpu.dot_dimension_numbers<[1], [0], [0], [1], [0, 0, 1, 1], [], []>} : vector<16x16xf32>, vector<16x16xf32>, vector<16x16xf32> -> vector<16x16xf32>
    %12 = vector.extract_strided_slice %7 {offsets = [16, 0], sizes = [16, 16], strides = [1, 1]} : vector<48x16xf32> to vector<16x16xf32>
    %13 = vector.extract_strided_slice %8 {offsets = [16, 0], sizes = [16, 16], strides = [1, 1]} : vector<48x16xf32> to vector<16x16xf32>
    %cst_9 = arith.constant dense<0.000000e+00> : vector<16x16xf32>
    %14 = tpu.matmul %12, %13, %cst_9 {dimension_numbers = #tpu.dot_dimension_numbers<[1], [0], [0], [1], [0, 0, 1, 1], [], []>} : vector<16x16xf32>, vector<16x16xf32>, vector<16x16xf32> -> vector<16x16xf32>
    %15 = arith.addf %11, %14 : vector<16x16xf32>
    %16 = vector.extract_strided_slice %7 {offsets = [32, 0], sizes = [16, 16], strides = [1, 1]} : vector<48x16xf32> to vector<16x16xf32>
    %17 = vector.extract_strided_slice %8 {offsets = [32, 0], sizes = [16, 16], strides = [1, 1]} : vector<48x16xf32> to vector<16x16xf32>
    %cst_10 = arith.constant dense<0.000000e+00> : vector<16x16xf32>
    %18 = tpu.matmul %16, %17, %cst_10 {dimension_numbers = #tpu.dot_dimension_numbers<[1], [0], [0], [1], [0, 0, 1, 1], [], []>} : vector<16x16xf32>, vector<16x16xf32>, vector<16x16xf32> -> vector<16x16xf32>
    %19 = arith.addf %15, %18 : vector<16x16xf32>
    %c0_11 = arith.constant 0 : index
    %c0_12 = arith.constant 0 : index
    %20 = vector.load %arg4[%c0_11, %c0_12] : memref<1x16xf32, #tpu.memory_space<vmem>>, vector<1x16xf32>
    %21 = vector.broadcast %20 : vector<1x16xf32> to vector<16x16xf32>
    %22 = arith.addf %19, %21 : vector<16x16xf32>
    %c0_13 = arith.constant 0 : index
    %c0_14 = arith.constant 0 : index
    %23 = vector.load %arg5[%c0_13, %c0_14] : memref<16x16xf32, #tpu.memory_space<vmem>>, vector<16x16xf32>
    tpu.vector_store %arg5[%c0_13, %c0_14], %22 {strides = array<i32>} : memref<16x16xf32, #tpu.memory_space<vmem>>, vector<16x16xf32>,
    return
  }
}

module attributes {stable_mosaic.version = 11 : i64} {
  func.func @_dec_stem_kernel(%arg0: memref<16x12xf32, #tpu.memory_space<vmem>>, %arg1: memref<16x16xf32, #tpu.memory_space<vmem>>, %arg2: memref<12x16xf32, #tpu.memory_space<vmem>>, %arg3: memref<1x16xf32, #tpu.memory_space<vmem>>, %arg4: memref<16x16xf32, #tpu.memory_space<vmem>>) attributes {dimension_semantics = [], scalar_prefetch = 0 : i64, scratch_operands = 0 : i64, tpu.core_type = #tpu.core_type<tc>} {
    %c0 = arith.constant 0 : index
    %c0_0 = arith.constant 0 : index
    %0 = vector.load %arg0[%c0, %c0_0] : memref<16x12xf32, #tpu.memory_space<vmem>>, vector<16x12xf32>
    %cst = arith.constant dense<0xFF800000> : vector<16xf32>
    %1 = vector.multi_reduction <maximumf>, %0, %cst [1] : vector<16x12xf32> to vector<16xf32>
    %2 = vector.shape_cast %1 : vector<16xf32> to vector<16x1xf32>
    %3 = vector.broadcast %2 : vector<16x1xf32> to vector<16x12xf32>
    %4 = arith.subf %0, %3 : vector<16x12xf32>
    %5 = math.exp %4 : vector<16x12xf32>
    %cst_1 = arith.constant dense<0.000000e+00> : vector<16xf32>
    %6 = vector.multi_reduction <add>, %5, %cst_1 [1] : vector<16x12xf32> to vector<16xf32>
    %7 = vector.shape_cast %6 : vector<16xf32> to vector<16x1xf32>
    %8 = tpu.reciprocal %7 {approx = true} : vector<16x1xf32> -> vector<16x1xf32>
    %9 = vector.broadcast %8 : vector<16x1xf32> to vector<16x12xf32>
    %10 = arith.mulf %5, %9 : vector<16x12xf32>
    %c0_2 = arith.constant 0 : index
    %c0_3 = arith.constant 0 : index
    %11 = vector.load %arg2[%c0_2, %c0_3] : memref<12x16xf32, #tpu.memory_space<vmem>>, vector<12x16xf32>
    %cst_4 = arith.constant dense<0.000000e+00> : vector<16x16xf32>
    %12 = tpu.matmul %10, %11, %cst_4 {dimension_numbers = #tpu.dot_dimension_numbers<[1], [0], [0], [1], [0, 0, 1, 1], [], []>} : vector<16x12xf32>, vector<12x16xf32>, vector<16x16xf32> -> vector<16x16xf32>
    %c0_5 = arith.constant 0 : index
    %c0_6 = arith.constant 0 : index
    %13 = vector.load %arg3[%c0_5, %c0_6] : memref<1x16xf32, #tpu.memory_space<vmem>>, vector<1x16xf32>
    %14 = vector.broadcast %13 : vector<1x16xf32> to vector<16x16xf32>
    %15 = arith.addf %12, %14 : vector<16x16xf32>
    %c0_7 = arith.constant 0 : index
    %c0_8 = arith.constant 0 : index
    %16 = vector.load %arg1[%c0_7, %c0_8] : memref<16x16xf32, #tpu.memory_space<vmem>>, vector<16x16xf32>
    %17 = arith.addf %15, %16 : vector<16x16xf32>
    %c0_9 = arith.constant 0 : index
    %c0_10 = arith.constant 0 : index
    %18 = vector.load %arg4[%c0_9, %c0_10] : memref<16x16xf32, #tpu.memory_space<vmem>>, vector<16x16xf32>
    tpu.vector_store %arg4[%c0_9, %c0_10], %17 {strides = array<i32>} : memref<16x16xf32, #tpu.memory_space<vmem>>, vector<16x16xf32>,
    return
  }
}

module attributes {stable_mosaic.version = 11 : i64} {
  func.func @_linear_kernel(%arg0: memref<16x16xf32, #tpu.memory_space<vmem>>, %arg1: memref<16x12xf32, #tpu.memory_space<vmem>>, %arg2: memref<1x12xf32, #tpu.memory_space<vmem>>, %arg3: memref<16x12xf32, #tpu.memory_space<vmem>>) attributes {dimension_semantics = [], scalar_prefetch = 0 : i64, scratch_operands = 0 : i64, tpu.core_type = #tpu.core_type<tc>} {
    %c0 = arith.constant 0 : index
    %c0_0 = arith.constant 0 : index
    %0 = vector.load %arg0[%c0, %c0_0] : memref<16x16xf32, #tpu.memory_space<vmem>>, vector<16x16xf32>
    %c0_1 = arith.constant 0 : index
    %c0_2 = arith.constant 0 : index
    %1 = vector.load %arg1[%c0_1, %c0_2] : memref<16x12xf32, #tpu.memory_space<vmem>>, vector<16x12xf32>
    %cst = arith.constant dense<0.000000e+00> : vector<16x12xf32>
    %2 = tpu.matmul %0, %1, %cst {dimension_numbers = #tpu.dot_dimension_numbers<[1], [0], [0], [1], [0, 0, 1, 1], [], []>} : vector<16x16xf32>, vector<16x12xf32>, vector<16x12xf32> -> vector<16x12xf32>
    %c0_3 = arith.constant 0 : index
    %c0_4 = arith.constant 0 : index
    %3 = vector.load %arg2[%c0_3, %c0_4] : memref<1x12xf32, #tpu.memory_space<vmem>>, vector<1x12xf32>
    %4 = vector.broadcast %3 : vector<1x12xf32> to vector<16x12xf32>
    %5 = arith.addf %2, %4 : vector<16x12xf32>
    %c0_5 = arith.constant 0 : index
    %c0_6 = arith.constant 0 : index
    %6 = vector.load %arg3[%c0_5, %c0_6] : memref<16x12xf32, #tpu.memory_space<vmem>>, vector<16x12xf32>
    tpu.vector_store %arg3[%c0_5, %c0_6], %5 {strides = array<i32>} : memref<16x12xf32, #tpu.memory_space<vmem>>, vector<16x12xf32>,
    return
  }
}

module attributes {stable_mosaic.version = 11 : i64} {
  func.func @_stack_kernel(%arg0: i32, %arg1: i32, %arg2: memref<8x16xf32, #tpu.memory_space<vmem>>, %arg3: memref<8x16xf32, #tpu.memory_space<vmem>>, %arg4: memref<1x16x256xf32, #tpu.memory_space<vmem>>, %arg5: memref<1x64x32xf32, #tpu.memory_space<vmem>>, %arg6: memref<1x29x64xf32, #tpu.memory_space<vmem>>, %arg7: memref<8x16xf32, #tpu.memory_space<vmem>>) attributes {dimension_semantics = [#tpu.dimension_semantics<parallel>, #tpu.dimension_semantics<arbitrary>], iteration_bounds = array<i64: 2, 2>, scalar_prefetch = 0 : i64, scratch_operands = 0 : i64, tpu.core_type = #tpu.core_type<tc>, window_params = [{transform_indices = @transform_0, window_bounds = array<i64: 8, 16>}, {pipeline_mode = #tpu.pipeline_mode<synchronous>, transform_indices = @transform_1, window_bounds = array<i64: 8, 16>}, {transform_indices = @transform_2, window_bounds = array<i64: 1, 16, 256>}, {transform_indices = @transform_3, window_bounds = array<i64: 1, 64, 32>}, {transform_indices = @transform_4, window_bounds = array<i64: 1, 29, 64>}, {transform_indices = @transform_5, window_bounds = array<i64: 8, 16>}]} {
    %c0_i32 = arith.constant 0 : i32
    %0 = arith.cmpi eq, %arg1, %c0_i32 : i32
    %1 = arith.extui %0 : i1 to i32
    %c0_i32_0 = arith.constant 0 : i32
    %2 = arith.cmpi ne, %1, %c0_i32_0 : i32
    scf.if %2 {
      %c0_70 = arith.constant 0 : index
      %c0_71 = arith.constant 0 : index
      %335 = vector.load %arg2[%c0_70, %c0_71] : memref<8x16xf32, #tpu.memory_space<vmem>>, vector<8x16xf32>
      %c0_72 = arith.constant 0 : index
      %c0_73 = arith.constant 0 : index
      %336 = vector.load %arg7[%c0_72, %c0_73] : memref<8x16xf32, #tpu.memory_space<vmem>>, vector<8x16xf32>
      tpu.vector_store %arg7[%c0_72, %c0_73], %335 {strides = array<i32>} : memref<8x16xf32, #tpu.memory_space<vmem>>, vector<8x16xf32>,
    } else {
    }
    %c0 = arith.constant 0 : index
    %c0_1 = arith.constant 0 : index
    %3 = vector.load %arg7[%c0, %c0_1] : memref<8x16xf32, #tpu.memory_space<vmem>>, vector<8x16xf32>
    %c0_2 = arith.constant 0 : index
    %c0_3 = arith.constant 0 : index
    %c0_4 = arith.constant 0 : index
    %4 = vector.load %arg4[%c0_2, %c0_3, %c0_4] : memref<1x16x256xf32, #tpu.memory_space<vmem>>, vector<1x16x256xf32>
    %5 = vector.shape_cast %4 : vector<1x16x256xf32> to vector<16x256xf32>
    %c0_5 = arith.constant 0 : index
    %c0_6 = arith.constant 0 : index
    %c0_7 = arith.constant 0 : index
    %6 = vector.load %arg5[%c0_5, %c0_6, %c0_7] : memref<1x64x32xf32, #tpu.memory_space<vmem>>, vector<1x64x32xf32>
    %7 = vector.shape_cast %6 : vector<1x64x32xf32> to vector<64x32xf32>
    %c0_8 = arith.constant 0 : index
    %c0_9 = arith.constant 0 : index
    %c0_10 = arith.constant 0 : index
    %8 = vector.load %arg6[%c0_8, %c0_9, %c0_10] : memref<1x29x64xf32, #tpu.memory_space<vmem>>, vector<1x29x64xf32>
    %9 = vector.shape_cast %8 : vector<1x29x64xf32> to vector<29x64xf32>
    %10 = vector.extract_strided_slice %7 {offsets = [0, 0], sizes = [64, 16], strides = [1, 1]} : vector<64x32xf32> to vector<64x16xf32>
    %11 = vector.extract_strided_slice %9 {offsets = [0, 0], sizes = [2, 16], strides = [1, 1]} : vector<29x64xf32> to vector<2x16xf32>
    %cst = arith.constant dense<0.000000e+00> : vector<8xf32>
    %12 = vector.multi_reduction <add>, %3, %cst [1] : vector<8x16xf32> to vector<8xf32>
    %13 = vector.shape_cast %12 : vector<8xf32> to vector<8x1xf32>
    %cst_11 = arith.constant 1.600000e+01 : f32
    %14 = vector.broadcast %cst_11 : f32 to vector<8x1xf32>
    %15 = arith.divf %13, %14 : vector<8x1xf32>
    %16 = vector.broadcast %15 : vector<8x1xf32> to vector<8x16xf32>
    %17 = arith.subf %3, %16 : vector<8x16xf32>
    %18 = arith.mulf %17, %17 : vector<8x16xf32>
    %cst_12 = arith.constant dense<0.000000e+00> : vector<8xf32>
    %19 = vector.multi_reduction <add>, %18, %cst_12 [1] : vector<8x16xf32> to vector<8xf32>
    %20 = vector.shape_cast %19 : vector<8xf32> to vector<8x1xf32>
    %cst_13 = arith.constant 1.600000e+01 : f32
    %21 = vector.broadcast %cst_13 : f32 to vector<8x1xf32>
    %22 = arith.divf %20, %21 : vector<8x1xf32>
    %cst_14 = arith.constant 9.99999974E-6 : f32
    %23 = vector.broadcast %cst_14 : f32 to vector<8x1xf32>
    %24 = arith.addf %22, %23 : vector<8x1xf32>
    %25 = math.rsqrt %24 : vector<8x1xf32>
    %26 = vector.broadcast %25 : vector<8x1xf32> to vector<8x16xf32>
    %27 = arith.mulf %17, %26 : vector<8x16xf32>
    %28 = vector.extract_strided_slice %11 {offsets = [0, 0], sizes = [1, 16], strides = [1, 1]} : vector<2x16xf32> to vector<1x16xf32>
    %29 = vector.broadcast %28 : vector<1x16xf32> to vector<8x16xf32>
    %30 = arith.mulf %27, %29 : vector<8x16xf32>
    %31 = vector.extract_strided_slice %11 {offsets = [1, 0], sizes = [1, 16], strides = [1, 1]} : vector<2x16xf32> to vector<1x16xf32>
    %32 = vector.broadcast %31 : vector<1x16xf32> to vector<8x16xf32>
    %33 = arith.addf %30, %32 : vector<8x16xf32>
    %34 = vector.extract_strided_slice %5 {offsets = [0, 0], sizes = [16, 64], strides = [1, 1]} : vector<16x256xf32> to vector<16x64xf32>
    %cst_15 = arith.constant dense<0.000000e+00> : vector<8x64xf32>
    %35 = tpu.matmul %33, %34, %cst_15 {dimension_numbers = #tpu.dot_dimension_numbers<[1], [0], [0], [1], [0, 0, 1, 1], [], []>} : vector<8x16xf32>, vector<16x64xf32>, vector<8x64xf32> -> vector<8x64xf32>
    %36 = vector.extract_strided_slice %9 {offsets = [2, 0], sizes = [1, 64], strides = [1, 1]} : vector<29x64xf32> to vector<1x64xf32>
    %37 = vector.broadcast %36 : vector<1x64xf32> to vector<8x64xf32>
    %38 = arith.addf %35, %37 : vector<8x64xf32>
    %cst_16 = arith.constant 0.000000e+00 : f32
    %39 = vector.broadcast %cst_16 : f32 to vector<8x64xf32>
    %40 = arith.subf %39, %38 : vector<8x64xf32>
    %41 = math.exp %40 : vector<8x64xf32>
    %cst_17 = arith.constant 1.000000e+00 : f32
    %42 = vector.broadcast %cst_17 : f32 to vector<8x64xf32>
    %43 = arith.addf %42, %41 : vector<8x64xf32>
    %cst_18 = arith.constant 1.000000e+00 : f32
    %44 = vector.broadcast %cst_18 : f32 to vector<8x64xf32>
    %45 = arith.divf %44, %43 : vector<8x64xf32>
    %46 = arith.mulf %38, %45 : vector<8x64xf32>
    %cst_19 = arith.constant dense<0.000000e+00> : vector<8x16xf32>
    %47 = tpu.matmul %46, %10, %cst_19 {dimension_numbers = #tpu.dot_dimension_numbers<[1], [0], [0], [1], [0, 0, 1, 1], [], []>} : vector<8x64xf32>, vector<64x16xf32>, vector<8x16xf32> -> vector<8x16xf32>
    %48 = vector.extract_strided_slice %9 {offsets = [3, 0], sizes = [1, 16], strides = [1, 1]} : vector<29x64xf32> to vector<1x16xf32>
    %49 = vector.broadcast %48 : vector<1x16xf32> to vector<8x16xf32>
    %50 = arith.addf %47, %49 : vector<8x16xf32>
    %cst_20 = arith.constant 5.000000e-01 : f32
    %51 = vector.broadcast %cst_20 : f32 to vector<8x16xf32>
    %52 = arith.mulf %51, %50 : vector<8x16xf32>
    %53 = arith.addf %3, %52 : vector<8x16xf32>
    %54 = vector.extract_strided_slice %9 {offsets = [4, 0], sizes = [2, 16], strides = [1, 1]} : vector<29x64xf32> to vector<2x16xf32>
    %cst_21 = arith.constant dense<0.000000e+00> : vector<8xf32>
    %55 = vector.multi_reduction <add>, %53, %cst_21 [1] : vector<8x16xf32> to vector<8xf32>
    %56 = vector.shape_cast %55 : vector<8xf32> to vector<8x1xf32>
    %cst_22 = arith.constant 1.600000e+01 : f32
    %57 = vector.broadcast %cst_22 : f32 to vector<8x1xf32>
    %58 = arith.divf %56, %57 : vector<8x1xf32>
    %59 = vector.broadcast %58 : vector<8x1xf32> to vector<8x16xf32>
    %60 = arith.subf %53, %59 : vector<8x16xf32>
    %61 = arith.mulf %60, %60 : vector<8x16xf32>
    %cst_23 = arith.constant dense<0.000000e+00> : vector<8xf32>
    %62 = vector.multi_reduction <add>, %61, %cst_23 [1] : vector<8x16xf32> to vector<8xf32>
    %63 = vector.shape_cast %62 : vector<8xf32> to vector<8x1xf32>
    %cst_24 = arith.constant 1.600000e+01 : f32
    %64 = vector.broadcast %cst_24 : f32 to vector<8x1xf32>
    %65 = arith.divf %63, %64 : vector<8x1xf32>
    %cst_25 = arith.constant 9.99999974E-6 : f32
    %66 = vector.broadcast %cst_25 : f32 to vector<8x1xf32>
    %67 = arith.addf %65, %66 : vector<8x1xf32>
    %68 = math.rsqrt %67 : vector<8x1xf32>
    %69 = vector.broadcast %68 : vector<8x1xf32> to vector<8x16xf32>
    %70 = arith.mulf %60, %69 : vector<8x16xf32>
    %71 = vector.extract_strided_slice %54 {offsets = [0, 0], sizes = [1, 16], strides = [1, 1]} : vector<2x16xf32> to vector<1x16xf32>
    %72 = vector.broadcast %71 : vector<1x16xf32> to vector<8x16xf32>
    %73 = arith.mulf %70, %72 : vector<8x16xf32>
    %74 = vector.extract_strided_slice %54 {offsets = [1, 0], sizes = [1, 16], strides = [1, 1]} : vector<2x16xf32> to vector<1x16xf32>
    %75 = vector.broadcast %74 : vector<1x16xf32> to vector<8x16xf32>
    %76 = arith.addf %73, %75 : vector<8x16xf32>
    %77 = vector.extract_strided_slice %5 {offsets = [0, 64], sizes = [16, 48], strides = [1, 1]} : vector<16x256xf32> to vector<16x48xf32>
    %cst_26 = arith.constant dense<0.000000e+00> : vector<8x48xf32>
    %78 = tpu.matmul %76, %77, %cst_26 {dimension_numbers = #tpu.dot_dimension_numbers<[1], [0], [0], [1], [0, 0, 1, 1], [], []>} : vector<8x16xf32>, vector<16x48xf32>, vector<8x48xf32> -> vector<8x48xf32>
    %79 = vector.extract_strided_slice %9 {offsets = [6, 0], sizes = [1, 48], strides = [1, 1]} : vector<29x64xf32> to vector<1x48xf32>
    %80 = vector.broadcast %79 : vector<1x48xf32> to vector<8x48xf32>
    %81 = arith.addf %78, %80 : vector<8x48xf32>
    %c0_27 = arith.constant 0 : index
    %c0_28 = arith.constant 0 : index
    %82 = vector.load %arg3[%c0_27, %c0_28] : memref<8x16xf32, #tpu.memory_space<vmem>>, vector<8x16xf32>
    %83 = vector.extract_strided_slice %5 {offsets = [0, 112], sizes = [16, 16], strides = [1, 1]} : vector<16x256xf32> to vector<16x16xf32>
    %cst_29 = arith.constant dense<0.000000e+00> : vector<8x16xf32>
    %84 = tpu.matmul %82, %83, %cst_29 {dimension_numbers = #tpu.dot_dimension_numbers<[1], [0], [0], [1], [0, 0, 1, 1], [], []>} : vector<8x16xf32>, vector<16x16xf32>, vector<8x16xf32> -> vector<8x16xf32>
    %85 = vector.extract_strided_slice %9 {offsets = [7, 0], sizes = [1, 16], strides = [1, 1]} : vector<29x64xf32> to vector<1x16xf32>
    %86 = vector.extract_strided_slice %9 {offsets = [8, 0], sizes = [1, 16], strides = [1, 1]} : vector<29x64xf32> to vector<1x16xf32>
    %87 = vector.extract_strided_slice %81 {offsets = [0, 0], sizes = [8, 8], strides = [1, 1]} : vector<8x48xf32> to vector<8x8xf32>
    %88 = vector.extract_strided_slice %81 {offsets = [0, 8], sizes = [8, 8], strides = [1, 1]} : vector<8x48xf32> to vector<8x8xf32>
    %89 = vector.shape_cast %87 : vector<8x8xf32> to vector<1x8x8xf32>
    %90 = vector.shape_cast %88 : vector<8x8xf32> to vector<1x8x8xf32>
    %91 = tpu.concatenate %89, %90 in 0 : vector<1x8x8xf32>, vector<1x8x8xf32> -> vector<2x8x8xf32>
    %92 = vector.extract_strided_slice %81 {offsets = [0, 16], sizes = [8, 8], strides = [1, 1]} : vector<8x48xf32> to vector<8x8xf32>
    %93 = vector.extract_strided_slice %81 {offsets = [0, 24], sizes = [8, 8], strides = [1, 1]} : vector<8x48xf32> to vector<8x8xf32>
    %94 = vector.shape_cast %92 : vector<8x8xf32> to vector<1x8x8xf32>
    %95 = vector.shape_cast %93 : vector<8x8xf32> to vector<1x8x8xf32>
    %96 = tpu.concatenate %94, %95 in 0 : vector<1x8x8xf32>, vector<1x8x8xf32> -> vector<2x8x8xf32>
    %97 = vector.extract_strided_slice %81 {offsets = [0, 32], sizes = [8, 8], strides = [1, 1]} : vector<8x48xf32> to vector<8x8xf32>
    %98 = vector.extract_strided_slice %81 {offsets = [0, 40], sizes = [8, 8], strides = [1, 1]} : vector<8x48xf32> to vector<8x8xf32>
    %99 = vector.shape_cast %97 : vector<8x8xf32> to vector<1x8x8xf32>
    %100 = vector.shape_cast %98 : vector<8x8xf32> to vector<1x8x8xf32>
    %101 = tpu.concatenate %99, %100 in 0 : vector<1x8x8xf32>, vector<1x8x8xf32> -> vector<2x8x8xf32>
    %102 = vector.extract_strided_slice %84 {offsets = [0, 0], sizes = [8, 8], strides = [1, 1]} : vector<8x16xf32> to vector<8x8xf32>
    %103 = vector.extract_strided_slice %84 {offsets = [0, 8], sizes = [8, 8], strides = [1, 1]} : vector<8x16xf32> to vector<8x8xf32>
    %104 = vector.shape_cast %102 : vector<8x8xf32> to vector<1x8x8xf32>
    %105 = vector.shape_cast %103 : vector<8x8xf32> to vector<1x8x8xf32>
    %106 = tpu.concatenate %104, %105 in 0 : vector<1x8x8xf32>, vector<1x8x8xf32> -> vector<2x8x8xf32>
    %107 = vector.extract_strided_slice %85 {offsets = [0, 0], sizes = [1, 8], strides = [1, 1]} : vector<1x16xf32> to vector<1x8xf32>
    %108 = vector.extract_strided_slice %85 {offsets = [0, 8], sizes = [1, 8], strides = [1, 1]} : vector<1x16xf32> to vector<1x8xf32>
    %109 = vector.shape_cast %107 : vector<1x8xf32> to vector<1x1x8xf32>
    %110 = vector.shape_cast %108 : vector<1x8xf32> to vector<1x1x8xf32>
    %111 = tpu.concatenate %109, %110 in 0 : vector<1x1x8xf32>, vector<1x1x8xf32> -> vector<2x1x8xf32>
    %112 = vector.extract_strided_slice %86 {offsets = [0, 0], sizes = [1, 8], strides = [1, 1]} : vector<1x16xf32> to vector<1x8xf32>
    %113 = vector.extract_strided_slice %86 {offsets = [0, 8], sizes = [1, 8], strides = [1, 1]} : vector<1x16xf32> to vector<1x8xf32>
    %114 = vector.shape_cast %112 : vector<1x8xf32> to vector<1x1x8xf32>
    %115 = vector.shape_cast %113 : vector<1x8xf32> to vector<1x1x8xf32>
    %116 = tpu.concatenate %114, %115 in 0 : vector<1x1x8xf32>, vector<1x1x8xf32> -> vector<2x1x8xf32>
    %117 = vector.broadcast %111 : vector<2x1x8xf32> to vector<2x8x8xf32>
    %118 = arith.addf %91, %117 : vector<2x8x8xf32>
    "tpu.trace_start"() <{level = 10 : i32, message = "htd,hsd->hts"}> : () -> ()
    %cst_30 = arith.constant dense<0.000000e+00> : vector<2x8x8xf32>
    %119 = tpu.matmul %118, %96, %cst_30 {dimension_numbers = #tpu.dot_dimension_numbers<[2], [2], [1], [1], [0, 0, 0, 1, 1, 1], [0], [0]>} : vector<2x8x8xf32>, vector<2x8x8xf32>, vector<2x8x8xf32> -> vector<2x8x8xf32>
    "tpu.trace_stop"() : () -> ()
    %120 = vector.broadcast %116 : vector<2x1x8xf32> to vector<2x8x8xf32>
    %121 = arith.addf %91, %120 : vector<2x8x8xf32>
    "tpu.trace_start"() <{level = 10 : i32, message = "htd,hsd->hts"}> : () -> ()
    %cst_31 = arith.constant dense<0.000000e+00> : vector<2x8x8xf32>
    %122 = tpu.matmul %121, %106, %cst_31 {dimension_numbers = #tpu.dot_dimension_numbers<[2], [2], [1], [1], [0, 0, 0, 1, 1, 1], [0], [0]>} : vector<2x8x8xf32>, vector<2x8x8xf32>, vector<2x8x8xf32> -> vector<2x8x8xf32>
    %cst_32 = arith.constant 0.000000e+00 : f32
    "tpu.trace_stop"() : () -> ()
    %123 = vector.broadcast %cst_32 : f32 to vector<2x1x1xf32>
    %124 = vector.extract_strided_slice %122 {offsets = [0, 0, 7], sizes = [2, 1, 1], strides = [1, 1, 1]} : vector<2x8x8xf32> to vector<2x1x1xf32>
    %125 = vector.extract_strided_slice %122 {offsets = [0, 1, 0], sizes = [2, 1, 6], strides = [1, 1, 1]} : vector<2x8x8xf32> to vector<2x1x6xf32>
    %126 = tpu.concatenate %124, %123, %125 in 2 : vector<2x1x1xf32>, vector<2x1x1xf32>, vector<2x1x6xf32> -> vector<2x1x8xf32>
    %127 = vector.extract_strided_slice %122 {offsets = [0, 1, 6], sizes = [2, 1, 2], strides = [1, 1, 1]} : vector<2x8x8xf32> to vector<2x1x2xf32>
    %128 = vector.extract_strided_slice %122 {offsets = [0, 2, 0], sizes = [2, 1, 5], strides = [1, 1, 1]} : vector<2x8x8xf32> to vector<2x1x5xf32>
    %129 = tpu.concatenate %127, %123, %128 in 2 : vector<2x1x2xf32>, vector<2x1x1xf32>, vector<2x1x5xf32> -> vector<2x1x8xf32>
    %130 = vector.extract_strided_slice %122 {offsets = [0, 2, 5], sizes = [2, 1, 3], strides = [1, 1, 1]} : vector<2x8x8xf32> to vector<2x1x3xf32>
    %131 = vector.extract_strided_slice %122 {offsets = [0, 3, 0], sizes = [2, 1, 4], strides = [1, 1, 1]} : vector<2x8x8xf32> to vector<2x1x4xf32>
    %132 = tpu.concatenate %130, %123, %131 in 2 : vector<2x1x3xf32>, vector<2x1x1xf32>, vector<2x1x4xf32> -> vector<2x1x8xf32>
    %133 = vector.extract_strided_slice %122 {offsets = [0, 3, 4], sizes = [2, 1, 4], strides = [1, 1, 1]} : vector<2x8x8xf32> to vector<2x1x4xf32>
    %134 = vector.extract_strided_slice %122 {offsets = [0, 4, 0], sizes = [2, 1, 3], strides = [1, 1, 1]} : vector<2x8x8xf32> to vector<2x1x3xf32>
    %135 = tpu.concatenate %133, %123, %134 in 2 : vector<2x1x4xf32>, vector<2x1x1xf32>, vector<2x1x3xf32> -> vector<2x1x8xf32>
    %136 = vector.extract_strided_slice %122 {offsets = [0, 4, 3], sizes = [2, 1, 5], strides = [1, 1, 1]} : vector<2x8x8xf32> to vector<2x1x5xf32>
    %137 = vector.extract_strided_slice %122 {offsets = [0, 5, 0], sizes = [2, 1, 2], strides = [1, 1, 1]} : vector<2x8x8xf32> to vector<2x1x2xf32>
    %138 = tpu.concatenate %136, %123, %137 in 2 : vector<2x1x5xf32>, vector<2x1x1xf32>, vector<2x1x2xf32> -> vector<2x1x8xf32>
    %139 = vector.extract_strided_slice %122 {offsets = [0, 5, 2], sizes = [2, 1, 6], strides = [1, 1, 1]} : vector<2x8x8xf32> to vector<2x1x6xf32>
    %140 = vector.extract_strided_slice %122 {offsets = [0, 6, 0], sizes = [2, 1, 1], strides = [1, 1, 1]} : vector<2x8x8xf32> to vector<2x1x1xf32>
    %141 = tpu.concatenate %139, %123, %140 in 2 : vector<2x1x6xf32>, vector<2x1x1xf32>, vector<2x1x1xf32> -> vector<2x1x8xf32>
    %142 = vector.extract_strided_slice %122 {offsets = [0, 6, 1], sizes = [2, 1, 7], strides = [1, 1, 1]} : vector<2x8x8xf32> to vector<2x1x7xf32>
    %143 = tpu.concatenate %142, %123 in 2 : vector<2x1x7xf32>, vector<2x1x1xf32> -> vector<2x1x8xf32>
    %144 = vector.extract_strided_slice %122 {offsets = [0, 7, 0], sizes = [2, 1, 8], strides = [1, 1, 1]} : vector<2x8x8xf32> to vector<2x1x8xf32>
    %145 = tpu.concatenate %126, %129, %132, %135, %138, %141, %143, %144 in 1 : vector<2x1x8xf32>, vector<2x1x8xf32>, vector<2x1x8xf32>, vector<2x1x8xf32>, vector<2x1x8xf32>, vector<2x1x8xf32>, vector<2x1x8xf32>, vector<2x1x8xf32> -> vector<2x8x8xf32>
    %146 = arith.addf %119, %145 : vector<2x8x8xf32>
    %cst_33 = arith.constant 2.500000e-01 : f32
    %147 = vector.broadcast %cst_33 : f32 to vector<2x8x8xf32>
    %148 = arith.mulf %146, %147 : vector<2x8x8xf32>
    %cst_34 = arith.constant dense<0xFF800000> : vector<2x8xf32>
    %149 = vector.multi_reduction <maximumf>, %148, %cst_34 [2] : vector<2x8x8xf32> to vector<2x8xf32>
    %150 = vector.shape_cast %149 : vector<2x8xf32> to vector<2x8x1xf32>
    %151 = vector.broadcast %150 : vector<2x8x1xf32> to vector<2x8x8xf32>
    %152 = arith.subf %148, %151 : vector<2x8x8xf32>
    %153 = math.exp %152 : vector<2x8x8xf32>
    %cst_35 = arith.constant dense<0.000000e+00> : vector<2x8xf32>
    %154 = vector.multi_reduction <add>, %153, %cst_35 [2] : vector<2x8x8xf32> to vector<2x8xf32>
    %155 = vector.shape_cast %154 : vector<2x8xf32> to vector<2x8x1xf32>
    %156 = tpu.reciprocal %155 {approx = true} : vector<2x8x1xf32> -> vector<2x8x1xf32>
    %157 = vector.broadcast %156 : vector<2x8x1xf32> to vector<2x8x8xf32>
    %158 = arith.mulf %153, %157 : vector<2x8x8xf32>
    "tpu.trace_start"() <{level = 10 : i32, message = "hts,hsd->htd"}> : () -> ()
    %cst_36 = arith.constant dense<0.000000e+00> : vector<2x8x8xf32>
    %159 = tpu.matmul %158, %101, %cst_36 {dimension_numbers = #tpu.dot_dimension_numbers<[2], [1], [1], [2], [0, 0, 0, 1, 1, 2], [0], [0]>} : vector<2x8x8xf32>, vector<2x8x8xf32>, vector<2x8x8xf32> -> vector<2x8x8xf32>
    "tpu.trace_stop"() : () -> ()
    %160 = vector.extract_strided_slice %159 {offsets = [0, 0, 0], sizes = [1, 8, 8], strides = [1, 1, 1]} : vector<2x8x8xf32> to vector<1x8x8xf32>
    %161 = vector.shape_cast %160 : vector<1x8x8xf32> to vector<8x8xf32>
    %162 = vector.extract_strided_slice %159 {offsets = [1, 0, 0], sizes = [1, 8, 8], strides = [1, 1, 1]} : vector<2x8x8xf32> to vector<1x8x8xf32>
    %163 = vector.shape_cast %162 : vector<1x8x8xf32> to vector<8x8xf32>
    %164 = tpu.concatenate %161, %163 in 1 : vector<8x8xf32>, vector<8x8xf32> -> vector<8x16xf32>
    %165 = vector.extract_strided_slice %5 {offsets = [0, 128], sizes = [16, 16], strides = [1, 1]} : vector<16x256xf32> to vector<16x16xf32>
    %cst_37 = arith.constant dense<0.000000e+00> : vector<8x16xf32>
    %166 = tpu.matmul %164, %165, %cst_37 {dimension_numbers = #tpu.dot_dimension_numbers<[1], [0], [0], [1], [0, 0, 1, 1], [], []>} : vector<8x16xf32>, vector<16x16xf32>, vector<8x16xf32> -> vector<8x16xf32>
    %167 = arith.addf %53, %166 : vector<8x16xf32>
    %168 = vector.extract_strided_slice %9 {offsets = [9, 0], sizes = [1, 16], strides = [1, 1]} : vector<29x64xf32> to vector<1x16xf32>
    %169 = vector.broadcast %168 : vector<1x16xf32> to vector<8x16xf32>
    %170 = arith.addf %167, %169 : vector<8x16xf32>
    %171 = vector.extract_strided_slice %9 {offsets = [10, 0], sizes = [2, 16], strides = [1, 1]} : vector<29x64xf32> to vector<2x16xf32>
    %cst_38 = arith.constant dense<0.000000e+00> : vector<8xf32>
    %172 = vector.multi_reduction <add>, %170, %cst_38 [1] : vector<8x16xf32> to vector<8xf32>
    %173 = vector.shape_cast %172 : vector<8xf32> to vector<8x1xf32>
    %cst_39 = arith.constant 1.600000e+01 : f32
    %174 = vector.broadcast %cst_39 : f32 to vector<8x1xf32>
    %175 = arith.divf %173, %174 : vector<8x1xf32>
    %176 = vector.broadcast %175 : vector<8x1xf32> to vector<8x16xf32>
    %177 = arith.subf %170, %176 : vector<8x16xf32>
    %178 = arith.mulf %177, %177 : vector<8x16xf32>
    %cst_40 = arith.constant dense<0.000000e+00> : vector<8xf32>
    %179 = vector.multi_reduction <add>, %178, %cst_40 [1] : vector<8x16xf32> to vector<8xf32>
    %180 = vector.shape_cast %179 : vector<8xf32> to vector<8x1xf32>
    %cst_41 = arith.constant 1.600000e+01 : f32
    %181 = vector.broadcast %cst_41 : f32 to vector<8x1xf32>
    %182 = arith.divf %180, %181 : vector<8x1xf32>
    %cst_42 = arith.constant 9.99999974E-6 : f32
    %183 = vector.broadcast %cst_42 : f32 to vector<8x1xf32>
    %184 = arith.addf %182, %183 : vector<8x1xf32>
    %185 = math.rsqrt %184 : vector<8x1xf32>
    %186 = vector.broadcast %185 : vector<8x1xf32> to vector<8x16xf32>
    %187 = arith.mulf %177, %186 : vector<8x16xf32>
    %188 = vector.extract_strided_slice %171 {offsets = [0, 0], sizes = [1, 16], strides = [1, 1]} : vector<2x16xf32> to vector<1x16xf32>
    %189 = vector.broadcast %188 : vector<1x16xf32> to vector<8x16xf32>
    %190 = arith.mulf %187, %189 : vector<8x16xf32>
    %191 = vector.extract_strided_slice %171 {offsets = [1, 0], sizes = [1, 16], strides = [1, 1]} : vector<2x16xf32> to vector<1x16xf32>
    %192 = vector.broadcast %191 : vector<1x16xf32> to vector<8x16xf32>
    %193 = arith.addf %190, %192 : vector<8x16xf32>
    %194 = vector.extract_strided_slice %5 {offsets = [0, 144], sizes = [16, 32], strides = [1, 1]} : vector<16x256xf32> to vector<16x32xf32>
    %cst_43 = arith.constant dense<0.000000e+00> : vector<8x32xf32>
    %195 = tpu.matmul %193, %194, %cst_43 {dimension_numbers = #tpu.dot_dimension_numbers<[1], [0], [0], [1], [0, 0, 1, 1], [], []>} : vector<8x16xf32>, vector<16x32xf32>, vector<8x32xf32> -> vector<8x32xf32>
    %196 = vector.extract_strided_slice %9 {offsets = [12, 0], sizes = [1, 32], strides = [1, 1]} : vector<29x64xf32> to vector<1x32xf32>
    %197 = vector.broadcast %196 : vector<1x32xf32> to vector<8x32xf32>
    %198 = arith.addf %195, %197 : vector<8x32xf32>
    %199 = vector.extract_strided_slice %198 {offsets = [0, 0], sizes = [8, 16], strides = [1, 1]} : vector<8x32xf32> to vector<8x16xf32>
    %200 = vector.extract_strided_slice %198 {offsets = [0, 16], sizes = [8, 16], strides = [1, 1]} : vector<8x32xf32> to vector<8x16xf32>
    %cst_44 = arith.constant 0.000000e+00 : f32
    %201 = vector.broadcast %cst_44 : f32 to vector<8x16xf32>
    %202 = arith.subf %201, %200 : vector<8x16xf32>
    %203 = math.exp %202 : vector<8x16xf32>
    %cst_45 = arith.constant 1.000000e+00 : f32
    %204 = vector.broadcast %cst_45 : f32 to vector<8x16xf32>
    %205 = arith.addf %204, %203 : vector<8x16xf32>
    %cst_46 = arith.constant 1.000000e+00 : f32
    %206 = vector.broadcast %cst_46 : f32 to vector<8x16xf32>
    %207 = arith.divf %206, %205 : vector<8x16xf32>
    %208 = arith.mulf %199, %207 : vector<8x16xf32>
    %209 = vector.extract_strided_slice %9 {offsets = [13, 0], sizes = [7, 16], strides = [1, 1]} : vector<29x64xf32> to vector<7x16xf32>
    %cst_47 = arith.constant 0.000000e+00 : f32
    %210 = vector.broadcast %cst_47 : f32 to vector<3x16xf32>
    %211 = tpu.concatenate %210, %208, %210 in 0 : vector<3x16xf32>, vector<8x16xf32>, vector<3x16xf32> -> vector<14x16xf32>
    %212 = vector.extract_strided_slice %211 {offsets = [0, 0], sizes = [8, 16], strides = [1, 1]} : vector<14x16xf32> to vector<8x16xf32>
    %213 = vector.extract_strided_slice %209 {offsets = [0, 0], sizes = [1, 16], strides = [1, 1]} : vector<7x16xf32> to vector<1x16xf32>
    %214 = vector.broadcast %213 : vector<1x16xf32> to vector<8x16xf32>
    %215 = arith.mulf %212, %214 : vector<8x16xf32>
    %216 = vector.extract_strided_slice %211 {offsets = [1, 0], sizes = [8, 16], strides = [1, 1]} : vector<14x16xf32> to vector<8x16xf32>
    %217 = vector.extract_strided_slice %209 {offsets = [1, 0], sizes = [1, 16], strides = [1, 1]} : vector<7x16xf32> to vector<1x16xf32>
    %218 = vector.broadcast %217 : vector<1x16xf32> to vector<8x16xf32>
    %219 = arith.mulf %216, %218 : vector<8x16xf32>
    %220 = arith.addf %215, %219 : vector<8x16xf32>
    %221 = vector.extract_strided_slice %211 {offsets = [2, 0], sizes = [8, 16], strides = [1, 1]} : vector<14x16xf32> to vector<8x16xf32>
    %222 = vector.extract_strided_slice %209 {offsets = [2, 0], sizes = [1, 16], strides = [1, 1]} : vector<7x16xf32> to vector<1x16xf32>
    %223 = vector.broadcast %222 : vector<1x16xf32> to vector<8x16xf32>
    %224 = arith.mulf %221, %223 : vector<8x16xf32>
    %225 = arith.addf %220, %224 : vector<8x16xf32>
    %226 = vector.extract_strided_slice %211 {offsets = [3, 0], sizes = [8, 16], strides = [1, 1]} : vector<14x16xf32> to vector<8x16xf32>
    %227 = vector.extract_strided_slice %209 {offsets = [3, 0], sizes = [1, 16], strides = [1, 1]} : vector<7x16xf32> to vector<1x16xf32>
    %228 = vector.broadcast %227 : vector<1x16xf32> to vector<8x16xf32>
    %229 = arith.mulf %226, %228 : vector<8x16xf32>
    %230 = arith.addf %225, %229 : vector<8x16xf32>
    %231 = vector.extract_strided_slice %211 {offsets = [4, 0], sizes = [8, 16], strides = [1, 1]} : vector<14x16xf32> to vector<8x16xf32>
    %232 = vector.extract_strided_slice %209 {offsets = [4, 0], sizes = [1, 16], strides = [1, 1]} : vector<7x16xf32> to vector<1x16xf32>
    %233 = vector.broadcast %232 : vector<1x16xf32> to vector<8x16xf32>
    %234 = arith.mulf %231, %233 : vector<8x16xf32>
    %235 = arith.addf %230, %234 : vector<8x16xf32>
    %236 = vector.extract_strided_slice %211 {offsets = [5, 0], sizes = [8, 16], strides = [1, 1]} : vector<14x16xf32> to vector<8x16xf32>
    %237 = vector.extract_strided_slice %209 {offsets = [5, 0], sizes = [1, 16], strides = [1, 1]} : vector<7x16xf32> to vector<1x16xf32>
    %238 = vector.broadcast %237 : vector<1x16xf32> to vector<8x16xf32>
    %239 = arith.mulf %236, %238 : vector<8x16xf32>
    %240 = arith.addf %235, %239 : vector<8x16xf32>
    %241 = vector.extract_strided_slice %211 {offsets = [6, 0], sizes = [8, 16], strides = [1, 1]} : vector<14x16xf32> to vector<8x16xf32>
    %242 = vector.extract_strided_slice %209 {offsets = [6, 0], sizes = [1, 16], strides = [1, 1]} : vector<7x16xf32> to vector<1x16xf32>
    %243 = vector.broadcast %242 : vector<1x16xf32> to vector<8x16xf32>
    %244 = arith.mulf %241, %243 : vector<8x16xf32>
    %245 = arith.addf %240, %244 : vector<8x16xf32>
    %246 = vector.extract_strided_slice %9 {offsets = [20, 0], sizes = [2, 16], strides = [1, 1]} : vector<29x64xf32> to vector<2x16xf32>
    %247 = vector.extract_strided_slice %246 {offsets = [0, 0], sizes = [1, 16], strides = [1, 1]} : vector<2x16xf32> to vector<1x16xf32>
    %248 = vector.broadcast %247 : vector<1x16xf32> to vector<8x16xf32>
    %249 = arith.mulf %245, %248 : vector<8x16xf32>
    %250 = vector.extract_strided_slice %246 {offsets = [1, 0], sizes = [1, 16], strides = [1, 1]} : vector<2x16xf32> to vector<1x16xf32>
    %251 = vector.broadcast %250 : vector<1x16xf32> to vector<8x16xf32>
    %252 = arith.addf %249, %251 : vector<8x16xf32>
    %cst_48 = arith.constant 0.000000e+00 : f32
    %253 = vector.broadcast %cst_48 : f32 to vector<8x16xf32>
    %254 = arith.subf %253, %252 : vector<8x16xf32>
    %255 = math.exp %254 : vector<8x16xf32>
    %cst_49 = arith.constant 1.000000e+00 : f32
    %256 = vector.broadcast %cst_49 : f32 to vector<8x16xf32>
    %257 = arith.addf %256, %255 : vector<8x16xf32>
    %cst_50 = arith.constant 1.000000e+00 : f32
    %258 = vector.broadcast %cst_50 : f32 to vector<8x16xf32>
    %259 = arith.divf %258, %257 : vector<8x16xf32>
    %260 = arith.mulf %252, %259 : vector<8x16xf32>
    %261 = vector.extract_strided_slice %5 {offsets = [0, 176], sizes = [16, 16], strides = [1, 1]} : vector<16x256xf32> to vector<16x16xf32>
    %cst_51 = arith.constant dense<0.000000e+00> : vector<8x16xf32>
    %262 = tpu.matmul %260, %261, %cst_51 {dimension_numbers = #tpu.dot_dimension_numbers<[1], [0], [0], [1], [0, 0, 1, 1], [], []>} : vector<8x16xf32>, vector<16x16xf32>, vector<8x16xf32> -> vector<8x16xf32>
    %263 = vector.extract_strided_slice %9 {offsets = [22, 0], sizes = [1, 16], strides = [1, 1]} : vector<29x64xf32> to vector<1x16xf32>
    %264 = vector.broadcast %263 : vector<1x16xf32> to vector<8x16xf32>
    %265 = arith.addf %262, %264 : vector<8x16xf32>
    %266 = arith.addf %170, %265 : vector<8x16xf32>
    %267 = vector.extract_strided_slice %7 {offsets = [0, 16], sizes = [64, 16], strides = [1, 1]} : vector<64x32xf32> to vector<64x16xf32>
    %268 = vector.extract_strided_slice %9 {offsets = [23, 0], sizes = [2, 16], strides = [1, 1]} : vector<29x64xf32> to vector<2x16xf32>
    %cst_52 = arith.constant dense<0.000000e+00> : vector<8xf32>
    %269 = vector.multi_reduction <add>, %266, %cst_52 [1] : vector<8x16xf32> to vector<8xf32>
    %270 = vector.shape_cast %269 : vector<8xf32> to vector<8x1xf32>
    %cst_53 = arith.constant 1.600000e+01 : f32
    %271 = vector.broadcast %cst_53 : f32 to vector<8x1xf32>
    %272 = arith.divf %270, %271 : vector<8x1xf32>
    %273 = vector.broadcast %272 : vector<8x1xf32> to vector<8x16xf32>
    %274 = arith.subf %266, %273 : vector<8x16xf32>
    %275 = arith.mulf %274, %274 : vector<8x16xf32>
    %cst_54 = arith.constant dense<0.000000e+00> : vector<8xf32>
    %276 = vector.multi_reduction <add>, %275, %cst_54 [1] : vector<8x16xf32> to vector<8xf32>
    %277 = vector.shape_cast %276 : vector<8xf32> to vector<8x1xf32>
    %cst_55 = arith.constant 1.600000e+01 : f32
    %278 = vector.broadcast %cst_55 : f32 to vector<8x1xf32>
    %279 = arith.divf %277, %278 : vector<8x1xf32>
    %cst_56 = arith.constant 9.99999974E-6 : f32
    %280 = vector.broadcast %cst_56 : f32 to vector<8x1xf32>
    %281 = arith.addf %279, %280 : vector<8x1xf32>
    %282 = math.rsqrt %281 : vector<8x1xf32>
    %283 = vector.broadcast %282 : vector<8x1xf32> to vector<8x16xf32>
    %284 = arith.mulf %274, %283 : vector<8x16xf32>
    %285 = vector.extract_strided_slice %268 {offsets = [0, 0], sizes = [1, 16], strides = [1, 1]} : vector<2x16xf32> to vector<1x16xf32>
    %286 = vector.broadcast %285 : vector<1x16xf32> to vector<8x16xf32>
    %287 = arith.mulf %284, %286 : vector<8x16xf32>
    %288 = vector.extract_strided_slice %268 {offsets = [1, 0], sizes = [1, 16], strides = [1, 1]} : vector<2x16xf32> to vector<1x16xf32>
    %289 = vector.broadcast %288 : vector<1x16xf32> to vector<8x16xf32>
    %290 = arith.addf %287, %289 : vector<8x16xf32>
    %291 = vector.extract_strided_slice %5 {offsets = [0, 192], sizes = [16, 64], strides = [1, 1]} : vector<16x256xf32> to vector<16x64xf32>
    %cst_57 = arith.constant dense<0.000000e+00> : vector<8x64xf32>
    %292 = tpu.matmul %290, %291, %cst_57 {dimension_numbers = #tpu.dot_dimension_numbers<[1], [0], [0], [1], [0, 0, 1, 1], [], []>} : vector<8x16xf32>, vector<16x64xf32>, vector<8x64xf32> -> vector<8x64xf32>
    %293 = vector.extract_strided_slice %9 {offsets = [25, 0], sizes = [1, 64], strides = [1, 1]} : vector<29x64xf32> to vector<1x64xf32>
    %294 = vector.broadcast %293 : vector<1x64xf32> to vector<8x64xf32>
    %295 = arith.addf %292, %294 : vector<8x64xf32>
    %cst_58 = arith.constant 0.000000e+00 : f32
    %296 = vector.broadcast %cst_58 : f32 to vector<8x64xf32>
    %297 = arith.subf %296, %295 : vector<8x64xf32>
    %298 = math.exp %297 : vector<8x64xf32>
    %cst_59 = arith.constant 1.000000e+00 : f32
    %299 = vector.broadcast %cst_59 : f32 to vector<8x64xf32>
    %300 = arith.addf %299, %298 : vector<8x64xf32>
    %cst_60 = arith.constant 1.000000e+00 : f32
    %301 = vector.broadcast %cst_60 : f32 to vector<8x64xf32>
    %302 = arith.divf %301, %300 : vector<8x64xf32>
    %303 = arith.mulf %295, %302 : vector<8x64xf32>
    %cst_61 = arith.constant dense<0.000000e+00> : vector<8x16xf32>
    %304 = tpu.matmul %303, %267, %cst_61 {dimension_numbers = #tpu.dot_dimension_numbers<[1], [0], [0], [1], [0, 0, 1, 1], [], []>} : vector<8x64xf32>, vector<64x16xf32>, vector<8x16xf32> -> vector<8x16xf32>
    %305 = vector.extract_strided_slice %9 {offsets = [26, 0], sizes = [1, 16], strides = [1, 1]} : vector<29x64xf32> to vector<1x16xf32>
    %306 = vector.broadcast %305 : vector<1x16xf32> to vector<8x16xf32>
    %307 = arith.addf %304, %306 : vector<8x16xf32>
    %cst_62 = arith.constant 5.000000e-01 : f32
    %308 = vector.broadcast %cst_62 : f32 to vector<8x16xf32>
    %309 = arith.mulf %308, %307 : vector<8x16xf32>
    %310 = arith.addf %266, %309 : vector<8x16xf32>
    %311 = vector.extract_strided_slice %9 {offsets = [27, 0], sizes = [2, 16], strides = [1, 1]} : vector<29x64xf32> to vector<2x16xf32>
    %cst_63 = arith.constant dense<0.000000e+00> : vector<8xf32>
    %312 = vector.multi_reduction <add>, %310, %cst_63 [1] : vector<8x16xf32> to vector<8xf32>
    %313 = vector.shape_cast %312 : vector<8xf32> to vector<8x1xf32>
    %cst_64 = arith.constant 1.600000e+01 : f32
    %314 = vector.broadcast %cst_64 : f32 to vector<8x1xf32>
    %315 = arith.divf %313, %314 : vector<8x1xf32>
    %316 = vector.broadcast %315 : vector<8x1xf32> to vector<8x16xf32>
    %317 = arith.subf %310, %316 : vector<8x16xf32>
    %318 = arith.mulf %317, %317 : vector<8x16xf32>
    %cst_65 = arith.constant dense<0.000000e+00> : vector<8xf32>
    %319 = vector.multi_reduction <add>, %318, %cst_65 [1] : vector<8x16xf32> to vector<8xf32>
    %320 = vector.shape_cast %319 : vector<8xf32> to vector<8x1xf32>
    %cst_66 = arith.constant 1.600000e+01 : f32
    %321 = vector.broadcast %cst_66 : f32 to vector<8x1xf32>
    %322 = arith.divf %320, %321 : vector<8x1xf32>
    %cst_67 = arith.constant 9.99999974E-6 : f32
    %323 = vector.broadcast %cst_67 : f32 to vector<8x1xf32>
    %324 = arith.addf %322, %323 : vector<8x1xf32>
    %325 = math.rsqrt %324 : vector<8x1xf32>
    %326 = vector.broadcast %325 : vector<8x1xf32> to vector<8x16xf32>
    %327 = arith.mulf %317, %326 : vector<8x16xf32>
    %328 = vector.extract_strided_slice %311 {offsets = [0, 0], sizes = [1, 16], strides = [1, 1]} : vector<2x16xf32> to vector<1x16xf32>
    %329 = vector.broadcast %328 : vector<1x16xf32> to vector<8x16xf32>
    %330 = arith.mulf %327, %329 : vector<8x16xf32>
    %331 = vector.extract_strided_slice %311 {offsets = [1, 0], sizes = [1, 16], strides = [1, 1]} : vector<2x16xf32> to vector<1x16xf32>
    %332 = vector.broadcast %331 : vector<1x16xf32> to vector<8x16xf32>
    %333 = arith.addf %330, %332 : vector<8x16xf32>
    %c0_68 = arith.constant 0 : index
    %c0_69 = arith.constant 0 : index
    %334 = vector.load %arg7[%c0_68, %c0_69] : memref<8x16xf32, #tpu.memory_space<vmem>>, vector<8x16xf32>
    tpu.vector_store %arg7[%c0_68, %c0_69], %333 {strides = array<i32>} : memref<8x16xf32, #tpu.memory_space<vmem>>, vector<8x16xf32>,
    return
  }
  func.func @transform_0(%arg0: i32, %arg1: i32) -> (i32, i32) {
    %c0_i32 = arith.constant 0 : i32
    %c0_i32_0 = arith.constant 0 : i32
    return %arg0, %c0_i32 : i32, i32
  }
  func.func @transform_1(%arg0: i32, %arg1: i32) -> (i32, i32) {
    %c0_i32 = arith.constant 0 : i32
    %c0_i32_0 = arith.constant 0 : i32
    %c0_i32_1 = arith.constant 0 : i32
    return %c0_i32, %c0_i32_0 : i32, i32
  }
  func.func @transform_2(%arg0: i32, %arg1: i32) -> (i32, i32, i32) {
    %c0_i32 = arith.constant 0 : i32
    %c0_i32_0 = arith.constant 0 : i32
    %c0_i32_1 = arith.constant 0 : i32
    return %arg1, %c0_i32, %c0_i32_0 : i32, i32, i32
  }
  func.func @transform_3(%arg0: i32, %arg1: i32) -> (i32, i32, i32) {
    %c0_i32 = arith.constant 0 : i32
    %c0_i32_0 = arith.constant 0 : i32
    %c0_i32_1 = arith.constant 0 : i32
    return %arg1, %c0_i32, %c0_i32_0 : i32, i32, i32
  }
  func.func @transform_4(%arg0: i32, %arg1: i32) -> (i32, i32, i32) {
    %c0_i32 = arith.constant 0 : i32
    %c0_i32_0 = arith.constant 0 : i32
    %c0_i32_1 = arith.constant 0 : i32
    return %arg1, %c0_i32, %c0_i32_0 : i32, i32, i32
  }
  func.func @transform_5(%arg0: i32, %arg1: i32) -> (i32, i32) {
    %c0_i32 = arith.constant 0 : i32
    %c0_i32_0 = arith.constant 0 : i32
    return %arg0, %c0_i32 : i32, i32
  }
}

</mosaic_0001>

<llo_original>
// kernel: _lambda_.8
$region0: #{_lambda_.8}
  #allocation0 [shape = 'u32[]', space=smem, size = 0x4, offset = 0x4, fixed_abs, tag = 'smem constant byte address 0x4 - core index']
  #allocation1 [shape = 'u32[72,128]{1,0:T(1,128)}', space=vmem, size = 0x9000, scoped, tag = 'internal scratch']
  %s0 = inlined_call_operand.vmem [shape: f32[72,16], index: 0, kind: input, shape index: {}]
  %s1 = inlined_call_operand.vmem [shape: f32[16,16], index: 1, kind: input, shape index: {}]
  %s2 = inlined_call_operand.vmem [shape: f32[1,16], index: 2, kind: input, shape index: {}]
  %s3 = inlined_call_operand.vmem [shape: f32[72,16], index: 3, kind: output, shape index: {}]
  %s4 = sld [smem:[#allocation0]]
  $region22: #{_lambda_.8} parent=0
    _
  %s6 = ssub.s32 1, %s4
  %s7 = scalar_select 0, %s6, %s4
  // Predicated region
  $region2: #{_lambda_.8} parent=0 // pred_check
    _
  $region3: #{_lambda_.8} parent=0 // pred_check_branch
    %9 = sbr.rel (0) target = $region5
  $region4: #{_lambda_.8} parent=0 // pred_region
    _
  $region5: #{_lambda_.8} parent=0 // pred_fallthru
    _
  // Predicated region
  $region6: #{_lambda_.8} parent=0 // pred_check
    _
  $region7: #{_lambda_.8} parent=0 // pred_check_branch
    %11 = sbr.rel (0) target = $region9
  $region8: #{_lambda_.8} parent=0 // pred_region
    _
  $region9: #{_lambda_.8} parent=0 // pred_fallthru
    _
  // Predicated region
  $region10: #{_lambda_.8} parent=0 // pred_check
    _
  $region11: #{_lambda_.8} parent=0 // pred_check_branch
    %13 = sbr.rel (0) target = $region13
  $region12: #{_lambda_.8} parent=0 // pred_region
    _
  $region13: #{_lambda_.8} parent=0 // pred_fallthru
    _
  %v14 = vld [vmem:[%s0] sm:$0xff]
  %v15 = vld [vmem:[%s0 + $0x8] sm:$0xff]
  %v16 = vld [vmem:[%s0 + $0x10] sm:$0xff]
  %v17 = vld [vmem:[%s0 + $0x18] sm:$0xff]
  %v18 = vld [vmem:[%s0 + $0x20] sm:$0xff]
  %v19 = vld [vmem:[%s0 + $0x28] sm:$0xff]
  %v20 = vld [vmem:[%s0 + $0x30] sm:$0xff]
  %v21 = vld [vmem:[%s0 + $0x38] sm:$0xff]
  %v22 = vld [vmem:[%s0 + $0x40] sm:$0xff]
  %v23 = vld [vmem:[%s1] sm:$0xff]
  %v24 = vld [vmem:[%s1 + $0x8] sm:$0xff]
  %v25 = vld [vmem:[%s2] sm:$0x1]
  %v27 = vperm.slane %v25, 0
  %vm29 = vcmask 130048
  %v31 = vsel %vm29, %v14, 0
  %v34 = vsel %vm29, %v15, 0
  %v37 = vsel %vm29, %v16, 0
  %v40 = vsel %vm29, %v17, 0
  %v43 = vsel %vm29, %v18, 0
  %v46 = vsel %vm29, %v19, 0
  %v49 = vsel %vm29, %v20, 0
  %v52 = vsel %vm29, %v21, 0
  %v55 = vsel %vm29, %v22, 0
  %57 = vmatpush.msra.mxu0 0.0
  %58 = vmatpush.msra.mxu0 0.0
  %59 = vmatpush.msra.mxu0 0.0
  %60 = vmatpush.msra.mxu0 0.0
  %61 = vmatpush.msra.mxu0 0.0
  %62 = vmatpush.msra.mxu0 0.0
  %63 = vmatpush.msra.mxu0 0.0
  %64 = vmatpush.msra.mxu0 0.0
  %65 = vmatpush.msra.mxu0 0.0
  %66 = vmatpush.msra.mxu0 0.0
  %67 = vmatpush.msra.mxu0 0.0
  %68 = vmatpush.msra.mxu0 0.0
  %69 = vmatpush.msra.mxu0 0.0
  %70 = vmatpush.msra.mxu0 0.0
  %71 = vmatpush.msra.mxu0 %v24
  %72 = vmatpush.msra.mxu0 %v23
  %73 = vmatmul.f32.gmra.mxu0 %v31
  %v74 = vpop.f32.mrf.mxu0
  %v75 = vadd.f32 %v27, %v74
  %76 = vmatmul.f32.gmra.mxu0 %v34
  %v77 = vpop.f32.mrf.mxu0
  %v78 = vadd.f32 %v27, %v77
  %79 = vmatmul.f32.gmra.mxu0 %v37
  %v80 = vpop.f32.mrf.mxu0
  %v81 = vadd.f32 %v27, %v80
  %82 = vmatmul.f32.gmra.mxu0 %v40
  %v83 = vpop.f32.mrf.mxu0
  %v84 = vadd.f32 %v27, %v83
  %85 = vmatmul.f32.gmra.mxu0 %v43
  %v86 = vpop.f32.mrf.mxu0
  %v87 = vadd.f32 %v27, %v86
  %88 = vmatmul.f32.gmra.mxu0 %v46
  %v89 = vpop.f32.mrf.mxu0
  %v90 = vadd.f32 %v27, %v89
  %91 = vmatmul.f32.gmra.mxu0 %v49
  %v92 = vpop.f32.mrf.mxu0
  %v93 = vadd.f32 %v27, %v92
  %94 = vmatmul.f32.gmra.mxu0 %v52
  %v95 = vpop.f32.mrf.mxu0
  %v96 = vadd.f32 %v27, %v95
  %97 = vmatmul.f32.gmra.mxu0 %v55
  %v98 = vpop.f32.mrf.mxu0
  %v99 = vadd.f32 %v27, %v98
  %100 = vdwg.mxu0
  %101 = vst.msk [vmem:[%s3] sm:$0xff] %vm29, %v75
  %102 = vst.msk [vmem:[%s3 + $0x8] sm:$0xff] %vm29, %v78
  %103 = vst.msk [vmem:[%s3 + $0x10] sm:$0xff] %vm29, %v81
  %104 = vst.msk [vmem:[%s3 + $0x18] sm:$0xff] %vm29, %v84
  %105 = vst.msk [vmem:[%s3 + $0x20] sm:$0xff] %vm29, %v87
  %106 = vst.msk [vmem:[%s3 + $0x28] sm:$0xff] %vm29, %v90
  %107 = vst.msk [vmem:[%s3 + $0x30] sm:$0xff] %vm29, %v93
  %108 = vst.msk [vmem:[%s3 + $0x38] sm:$0xff] %vm29, %v96
  %109 = vst.msk [vmem:[%s3 + $0x40] sm:$0xff] %vm29, %v99
  // Predicated region
  $region14: #{_lambda_.8} parent=0 // pred_check
    _
  $region15: #{_lambda_.8} parent=0 // pred_check_branch
    %111 = sbr.rel (0) target = $region17
  $region16: #{_lambda_.8} parent=0 // pred_region
    _
  $region17: #{_lambda_.8} parent=0 // pred_fallthru
    _
  // Predicated region
  $region18: #{_lambda_.8} parent=0 // pred_check
    _
  $region19: #{_lambda_.8} parent=0 // pred_check_branch
    %113 = sbr.rel (0) target = $region21
  $region20: #{_lambda_.8} parent=0 // pred_region
    _
  $region21: #{_lambda_.8} parent=0 // pred_fallthru
    _

// kernel: _lambda_.9
$region0: #{_lambda_.9}
  #allocation0 [shape = 'u32[]', space=smem, size = 0x4, offset = 0x4, fixed_abs, tag = 'smem constant byte address 0x4 - core index']
  #allocation1 [shape = 'u32[72,128]{1,0:T(1,128)}', space=vmem, size = 0x9000, scoped, tag = 'internal scratch']
  %s0 = inlined_call_operand.vmem [shape: f32[238,9], index: 0, kind: input, shape index: {}]
  %s1 = inlined_call_operand.vmem [shape: f32[9,16], index: 1, kind: input, shape index: {}]
  %s2 = inlined_call_operand.vmem [shape: f32[1,16], index: 2, kind: input, shape index: {}]
  %s3 = inlined_call_operand.vmem [shape: f32[238,16], index: 3, kind: output, shape index: {}]
  %s4 = sld [smem:[#allocation0]]
  $region22: #{_lambda_.9} parent=0
    _
  %s6 = ssub.s32 1, %s4
  %s7 = scalar_select 0, %s6, %s4
  // Predicated region
  $region2: #{_lambda_.9} parent=0 // pred_check
    _
  $region3: #{_lambda_.9} parent=0 // pred_check_branch
    %9 = sbr.rel (0) target = $region5
  $region4: #{_lambda_.9} parent=0 // pred_region
    _
  $region5: #{_lambda_.9} parent=0 // pred_fallthru
    _
  // Predicated region
  $region6: #{_lambda_.9} parent=0 // pred_check
    _
  $region7: #{_lambda_.9} parent=0 // pred_check_branch
    %11 = sbr.rel (0) target = $region9
  $region8: #{_lambda_.9} parent=0 // pred_region
    _
  $region9: #{_lambda_.9} parent=0 // pred_fallthru
    _
  // Predicated region
  $region10: #{_lambda_.9} parent=0 // pred_check
    _
  $region11: #{_lambda_.9} parent=0 // pred_check_branch
    %13 = sbr.rel (0) target = $region13
  $region12: #{_lambda_.9} parent=0 // pred_region
    _
  $region13: #{_lambda_.9} parent=0 // pred_fallthru
    _
  %v14 = vld [vmem:[%s0] sm:$0xff]
  %v15 = vld [vmem:[%s0 + $0x8] sm:$0xff]
  %v16 = vld [vmem:[%s0 + $0x10] sm:$0xff]
  %v17 = vld [vmem:[%s0 + $0x18] sm:$0xff]
  %v18 = vld [vmem:[%s0 + $0x20] sm:$0xff]
  %v19 = vld [vmem:[%s0 + $0x28] sm:$0xff]
  %v20 = vld [vmem:[%s0 + $0x30] sm:$0xff]
  %v21 = vld [vmem:[%s0 + $0x38] sm:$0xff]
  %v22 = vld [vmem:[%s0 + $0x40] sm:$0xff]
  %v23 = vld [vmem:[%s0 + $0x48] sm:$0xff]
  %v24 = vld [vmem:[%s0 + $0x50] sm:$0xff]
  %v25 = vld [vmem:[%s0 + $0x58] sm:$0xff]
  %v26 = vld [vmem:[%s0 + $0x60] sm:$0xff]
  %v27 = vld [vmem:[%s0 + $0x68] sm:$0xff]
  %v28 = vld [vmem:[%s0 + $0x70] sm:$0xff]
  %v29 = vld [vmem:[%s0 + $0x78] sm:$0xff]
  %v30 = vld [vmem:[%s0 + $0x80] sm:$0xff]
  %v31 = vld [vmem:[%s0 + $0x88] sm:$0xff]
  %v32 = vld [vmem:[%s0 + $0x90] sm:$0xff]
  %v33 = vld [vmem:[%s0 + $0x98] sm:$0xff]
  %v34 = vld [vmem:[%s0 + $0xa0] sm:$0xff]
  %v35 = vld [vmem:[%s0 + $0xa8] sm:$0xff]
  %v36 = vld [vmem:[%s0 + $0xb0] sm:$0xff]
  %v37 = vld [vmem:[%s0 + $0xb8] sm:$0xff]
  %v38 = vld [vmem:[%s0 + $0xc0] sm:$0xff]
  %v39 = vld [vmem:[%s0 + $0xc8] sm:$0xff]
  %v40 = vld [vmem:[%s0 + $0xd0] sm:$0xff]
  %v41 = vld [vmem:[%s0 + $0xd8] sm:$0xff]
  %v42 = vld [vmem:[%s0 + $0xe0] sm:$0xff]
  %v43 = vld [vmem:[%s0 + $0xe8] sm:$0x3f]
  %v44 = vld [vmem:[%s1] sm:$0xff]
  %v45 = vld [vmem:[%s1 + $0x8] sm:$0x1]
  %v46 = vld [vmem:[%s2] sm:$0x1]
  %v48 = vperm.slane %v46, 0
  %vm50 = vcmask 72704
  %v52 = vsel %vm50, %v14, 0
  %v55 = vsel %vm50, %v15, 0
  %v58 = vsel %vm50, %v16, 0
  %v61 = vsel %vm50, %v17, 0
  %v64 = vsel %vm50, %v18, 0
  %v67 = vsel %vm50, %v19, 0
  %v70 = vsel %vm50, %v20, 0
  %v73 = vsel %vm50, %v21, 0
  %v76 = vsel %vm50, %v22, 0
  %v79 = vsel %vm50, %v23, 0
  %v82 = vsel %vm50, %v24, 0
  %v85 = vsel %vm50, %v25, 0
  %v88 = vsel %vm50, %v26, 0
  %v91 = vsel %vm50, %v27, 0
  %v94 = vsel %vm50, %v28, 0
  %v97 = vsel %vm50, %v29, 0
  %v100 = vsel %vm50, %v30, 0
  %v103 = vsel %vm50, %v31, 0
  %v106 = vsel %vm50, %v32, 0
  %v109 = vsel %vm50, %v33, 0
  %v112 = vsel %vm50, %v34, 0
  %v115 = vsel %vm50, %v35, 0
  %v118 = vsel %vm50, %v36, 0
  %v121 = vsel %vm50, %v37, 0
  %v124 = vsel %vm50, %v38, 0
  %v127 = vsel %vm50, %v39, 0
  %v130 = vsel %vm50, %v40, 0
  %v133 = vsel %vm50, %v41, 0
  %v136 = vsel %vm50, %v42, 0
  %v139 = vsel %vm50, %v43, 0
  %vm141 = vcmask 1040384
  %v143 = vsel %vm141, %v45, 0
  %145 = vmatpush.msra.mxu0 0.0
  %146 = vmatpush.msra.mxu0 0.0
  %147 = vmatpush.msra.mxu0 0.0
  %148 = vmatpush.msra.mxu0 0.0
  %149 = vmatpush.msra.mxu0 0.0
  %150 = vmatpush.msra.mxu0 0.0
  %151 = vmatpush.msra.mxu0 0.0
  %152 = vmatpush.msra.mxu0 0.0
  %153 = vmatpush.msra.mxu0 0.0
  %154 = vmatpush.msra.mxu0 0.0
  %155 = vmatpush.msra.mxu0 0.0
  %156 = vmatpush.msra.mxu0 0.0
  %157 = vmatpush.msra.mxu0 0.0
  %158 = vmatpush.msra.mxu0 0.0
  %159 = vmatpush.msra.mxu0 %v143
  %160 = vmatpush.msra.mxu0 %v44
  %161 = vmatmul.f32.gmra.mxu0 %v52
  %v162 = vpop.f32.mrf.mxu0
  %v163 = vadd.f32 %v48, %v162
  %164 = vmatmul.f32.gmra.mxu0 %v55
  %v165 = vpop.f32.mrf.mxu0
  %v166 = vadd.f32 %v48, %v165
  %167 = vmatmul.f32.gmra.mxu0 %v58
  %v168 = vpop.f32.mrf.mxu0
  %v169 = vadd.f32 %v48, %v168
  %170 = vmatmul.f32.gmra.mxu0 %v61
  %v171 = vpop.f32.mrf.mxu0
  %v172 = vadd.f32 %v48, %v171
  %173 = vmatmul.f32.gmra.mxu0 %v64
  %v174 = vpop.f32.mrf.mxu0
  %v175 = vadd.f32 %v48, %v174
  %176 = vmatmul.f32.gmra.mxu0 %v67
  %v177 = vpop.f32.mrf.mxu0
  %v178 = vadd.f32 %v48, %v177
  %179 = vmatmul.f32.gmra.mxu0 %v70
  %v180 = vpop.f32.mrf.mxu0
  %v181 = vadd.f32 %v48, %v180
  %182 = vmatmul.f32.gmra.mxu0 %v73
  %v183 = vpop.f32.mrf.mxu0
  %v184 = vadd.f32 %v48, %v183
  %185 = vmatmul.f32.gmra.mxu0 %v76
  %v186 = vpop.f32.mrf.mxu0
  %v187 = vadd.f32 %v48, %v186
  %188 = vmatmul.f32.gmra.mxu0 %v79
  %v189 = vpop.f32.mrf.mxu0
  %v190 = vadd.f32 %v48, %v189
  %191 = vmatmul.f32.gmra.mxu0 %v82
  %v192 = vpop.f32.mrf.mxu0
  %v193 = vadd.f32 %v48, %v192
  %194 = vmatmul.f32.gmra.mxu0 %v85
  %v195 = vpop.f32.mrf.mxu0
  %v196 = vadd.f32 %v48, %v195
  %197 = vmatmul.f32.gmra.mxu0 %v88
  %v198 = vpop.f32.mrf.mxu0
  %v199 = vadd.f32 %v48, %v198
  %200 = vmatmul.f32.gmra.mxu0 %v91
  %v201 = vpop.f32.mrf.mxu0
  %v202 = vadd.f32 %v48, %v201
  %203 = vmatmul.f32.gmra.mxu0 %v94
  %v204 = vpop.f32.mrf.mxu0
  %v205 = vadd.f32 %v48, %v204
  %206 = vmatmul.f32.gmra.mxu0 %v97
  %v207 = vpop.f32.mrf.mxu0
  %v208 = vadd.f32 %v48, %v207
  %209 = vmatmul.f32.gmra.mxu0 %v100
  %v210 = vpop.f32.mrf.mxu0
  %v211 = vadd.f32 %v48, %v210
  %212 = vmatmul.f32.gmra.mxu0 %v103
  %v213 = vpop.f32.mrf.mxu0
  %v214 = vadd.f32 %v48, %v213
  %215 = vmatmul.f32.gmra.mxu0 %v106
  %v216 = vpop.f32.mrf.mxu0
  %v217 = vadd.f32 %v48, %v216
  %218 = vmatmul.f32.gmra.mxu0 %v109
  %v219 = vpop.f32.mrf.mxu0
  %v220 = vadd.f32 %v48, %v219
  %221 = vmatmul.f32.gmra.mxu0 %v112
  %v222 = vpop.f32.mrf.mxu0
  %v223 = vadd.f32 %v48, %v222
  %224 = vmatmul.f32.gmra.mxu0 %v115
  %v225 = vpop.f32.mrf.mxu0
  %v226 = vadd.f32 %v48, %v225
  %227 = vmatmul.f32.gmra.mxu0 %v118
  %v228 = vpop.f32.mrf.mxu0
  %v229 = vadd.f32 %v48, %v228
  %230 = vmatmul.f32.gmra.mxu0 %v121
  %v231 = vpop.f32.mrf.mxu0
  %v232 = vadd.f32 %v48, %v231
  %233 = vmatmul.f32.gmra.mxu0 %v124
  %v234 = vpop.f32.mrf.mxu0
  %v235 = vadd.f32 %v48, %v234
  %236 = vmatmul.f32.gmra.mxu0 %v127
  %v237 = vpop.f32.mrf.mxu0
  %v238 = vadd.f32 %v48, %v237
  %239 = vmatmul.f32.gmra.mxu0 %v130
  %v240 = vpop.f32.mrf.mxu0
  %v241 = vadd.f32 %v48, %v240
  %242 = vmatmul.f32.gmra.mxu0 %v133
  %v243 = vpop.f32.mrf.mxu0
  %v244 = vadd.f32 %v48, %v243
  %245 = vmatmul.f32.gmra.mxu0 %v136
  %v246 = vpop.f32.mrf.mxu0
  %v247 = vadd.f32 %v48, %v246
  %248 = vmatmul.f32.gmra.mxu0 %v139
  %v249 = vpop.f32.mrf.mxu0
  %v250 = vadd.f32 %v48, %v249
  %251 = vdwg.mxu0
  %v252 = vmax.f32 %v163, 0.0
  %v253 = vmax.f32 %v166, 0.0
  %v254 = vmax.f32 %v169, 0.0
  %v255 = vmax.f32 %v172, 0.0
  %v256 = vmax.f32 %v175, 0.0
  %v257 = vmax.f32 %v178, 0.0
  %v258 = vmax.f32 %v181, 0.0
  %v259 = vmax.f32 %v184, 0.0
  %v260 = vmax.f32 %v187, 0.0
  %v261 = vmax.f32 %v190, 0.0
  %v262 = vmax.f32 %v193, 0.0
  %v263 = vmax.f32 %v196, 0.0
  %v264 = vmax.f32 %v199, 0.0
  %v265 = vmax.f32 %v202, 0.0
  %v266 = vmax.f32 %v205, 0.0
  %v267 = vmax.f32 %v208, 0.0
  %v268 = vmax.f32 %v211, 0.0
  %v269 = vmax.f32 %v214, 0.0
  %v270 = vmax.f32 %v217, 0.0
  %v271 = vmax.f32 %v220, 0.0
  %v272 = vmax.f32 %v223, 0.0
  %v273 = vmax.f32 %v226, 0.0
  %v274 = vmax.f32 %v229, 0.0
  %v275 = vmax.f32 %v232, 0.0
  %v276 = vmax.f32 %v235, 0.0
  %v277 = vmax.f32 %v238, 0.0
  %v278 = vmax.f32 %v241, 0.0
  %v279 = vmax.f32 %v244, 0.0
  %v280 = vmax.f32 %v247, 0.0
  %v281 = vmax.f32 %v250, 0.0
  %vm282 = vcmask 130048
  %283 = vst.msk [vmem:[%s3] sm:$0xff] %vm282, %v252
  %284 = vst.msk [vmem:[%s3 + $0x8] sm:$0xff] %vm282, %v253
  %285 = vst.msk [vmem:[%s3 + $0x10] sm:$0xff] %vm282, %v254
  %286 = vst.msk [vmem:[%s3 + $0x18] sm:$0xff] %vm282, %v255
  %287 = vst.msk [vmem:[%s3 + $0x20] sm:$0xff] %vm282, %v256
  %288 = vst.msk [vmem:[%s3 + $0x28] sm:$0xff] %vm282, %v257
  %289 = vst.msk [vmem:[%s3 + $0x30] sm:$0xff] %vm282, %v258
  %290 = vst.msk [vmem:[%s3 + $0x38] sm:$0xff] %vm282, %v259
  %291 = vst.msk [vmem:[%s3 + $0x40] sm:$0xff] %vm282, %v260
  %292 = vst.msk [vmem:[%s3 + $0x48] sm:$0xff] %vm282, %v261
  %293 = vst.msk [vmem:[%s3 + $0x50] sm:$0xff] %vm282, %v262
  %294 = vst.msk [vmem:[%s3 + $0x58] sm:$0xff] %vm282, %v263
  %295 = vst.msk [vmem:[%s3 + $0x60] sm:$0xff] %vm282, %v264
  %296 = vst.msk [vmem:[%s3 + $0x68] sm:$0xff] %vm282, %v265
  %297 = vst.msk [vmem:[%s3 + $0x70] sm:$0xff] %vm282, %v266
  %298 = vst.msk [vmem:[%s3 + $0x78] sm:$0xff] %vm282, %v267
  %299 = vst.msk [vmem:[%s3 + $0x80] sm:$0xff] %vm282, %v268
  %300 = vst.msk [vmem:[%s3 + $0x88] sm:$0xff] %vm282, %v269
  %301 = vst.msk [vmem:[%s3 + $0x90] sm:$0xff] %vm282, %v270
  %302 = vst.msk [vmem:[%s3 + $0x98] sm:$0xff] %vm282, %v271
  %303 = vst.msk [vmem:[%s3 + $0xa0] sm:$0xff] %vm282, %v272
  %304 = vst.msk [vmem:[%s3 + $0xa8] sm:$0xff] %vm282, %v273
  %305 = vst.msk [vmem:[%s3 + $0xb0] sm:$0xff] %vm282, %v274
  %306 = vst.msk [vmem:[%s3 + $0xb8] sm:$0xff] %vm282, %v275
  %307 = vst.msk [vmem:[%s3 + $0xc0] sm:$0xff] %vm282, %v276
  %308 = vst.msk [vmem:[%s3 + $0xc8] sm:$0xff] %vm282, %v277
  %309 = vst.msk [vmem:[%s3 + $0xd0] sm:$0xff] %vm282, %v278
  %310 = vst.msk [vmem:[%s3 + $0xd8] sm:$0xff] %vm282, %v279
  %311 = vst.msk [vmem:[%s3 + $0xe0] sm:$0xff] %vm282, %v280
  %vm312 = vcmask 128000
  %313 = vst.msk [vmem:[%s3 + $0xe8] sm:$0x3f] %vm312, %v281
  // Predicated region
  $region14: #{_lambda_.9} parent=0 // pred_check
    _
  $region15: #{_lambda_.9} parent=0 // pred_check_branch
    %315 = sbr.rel (0) target = $region17
  $region16: #{_lambda_.9} parent=0 // pred_region
    _
  $region17: #{_lambda_.9} parent=0 // pred_fallthru
    _
  // Predicated region
  $region18: #{_lambda_.9} parent=0 // pred_check
    _
  $region19: #{_lambda_.9} parent=0 // pred_check_branch
    %317 = sbr.rel (0) target = $region21
  $region20: #{_lambda_.9} parent=0 // pred_region
    _
  $region21: #{_lambda_.9} parent=0 // pred_fallthru
    _

// kernel: _lambda_.10
$region0: #{_lambda_.10}
  #allocation0 [shape = 'u32[]', space=smem, size = 0x4, offset = 0x4, fixed_abs, tag = 'smem constant byte address 0x4 - core index']
  #allocation1 [shape = 'u32[72,128]{1,0:T(1,128)}', space=vmem, size = 0x9000, scoped, tag = 'internal scratch']
  %s0 = inlined_call_operand.vmem [shape: f32[48,144], index: 0, kind: input, shape index: {}]
  %s1 = inlined_call_operand.vmem [shape: f32[144,16], index: 1, kind: input, shape index: {}]
  %s2 = inlined_call_operand.vmem [shape: f32[1,16], index: 2, kind: input, shape index: {}]
  %s3 = inlined_call_operand.vmem [shape: f32[48,16], index: 3, kind: input, shape index: {}]
  %s4 = inlined_call_operand.vmem [shape: f32[1,16], index: 4, kind: input, shape index: {}]
  %s5 = inlined_call_operand.vmem [shape: f32[16,16], index: 5, kind: output, shape index: {}]
  %s6 = sld [smem:[#allocation0]]
  $region30: #{_lambda_.10} parent=0
    _
  %s8 = ssub.s32 1, %s6
  %s9 = scalar_select 0, %s8, %s6
  // Predicated region
  $region2: #{_lambda_.10} parent=0 // pred_check
    _
  $region3: #{_lambda_.10} parent=0 // pred_check_branch
    %11 = sbr.rel (0) target = $region5
  $region4: #{_lambda_.10} parent=0 // pred_region
    _
  $region5: #{_lambda_.10} parent=0 // pred_fallthru
    _
  // Predicated region
  $region6: #{_lambda_.10} parent=0 // pred_check
    _
  $region7: #{_lambda_.10} parent=0 // pred_check_branch
    %13 = sbr.rel (0) target = $region9
  $region8: #{_lambda_.10} parent=0 // pred_region
    _
  $region9: #{_lambda_.10} parent=0 // pred_fallthru
    _
  // Predicated region
  $region10: #{_lambda_.10} parent=0 // pred_check
    _
  $region11: #{_lambda_.10} parent=0 // pred_check_branch
    %15 = sbr.rel (0) target = $region13
  $region12: #{_lambda_.10} parent=0 // pred_region
    _
  $region13: #{_lambda_.10} parent=0 // pred_fallthru
    _
  // Predicated region
  $region14: #{_lambda_.10} parent=0 // pred_check
    _
  $region15: #{_lambda_.10} parent=0 // pred_check_branch
    %17 = sbr.rel (0) target = $region17
  $region16: #{_lambda_.10} parent=0 // pred_region
    _
  $region17: #{_lambda_.10} parent=0 // pred_fallthru
    _
  // Predicated region
  $region18: #{_lambda_.10} parent=0 // pred_check
    _
  $region19: #{_lambda_.10} parent=0 // pred_check_branch
    %19 = sbr.rel (0) target = $region21
  $region20: #{_lambda_.10} parent=0 // pred_region
    _
  $region21: #{_lambda_.10} parent=0 // pred_fallthru
    _
  %v20 = vld [vmem:[%s0] sm:$0xff]
  %v21 = vld [vmem:[%s0 + $0x8] sm:$0xff]
  %v22 = vld [vmem:[%s0 + $0x10] sm:$0xff]
  %v23 = vld [vmem:[%s0 + $0x18] sm:$0xff]
  %v24 = vld [vmem:[%s0 + $0x20] sm:$0xff]
  %v25 = vld [vmem:[%s0 + $0x28] sm:$0xff]
  %v26 = vld [vmem:[%s0 + $0x30] sm:$0xff]
  %v27 = vld [vmem:[%s0 + $0x38] sm:$0xff]
  %v28 = vld [vmem:[%s0 + $0x40] sm:$0xff]
  %v29 = vld [vmem:[%s0 + $0x48] sm:$0xff]
  %v30 = vld [vmem:[%s0 + $0x50] sm:$0xff]
  %v31 = vld [vmem:[%s0 + $0x58] sm:$0xff]
  %v32 = vld [vmem:[%s1] sm:$0xff]
  %v33 = vld [vmem:[%s1 + $0x8] sm:$0xff]
  %v34 = vld [vmem:[%s1 + $0x10] sm:$0xff]
  %v35 = vld [vmem:[%s1 + $0x18] sm:$0xff]
  %v36 = vld [vmem:[%s1 + $0x20] sm:$0xff]
  %v37 = vld [vmem:[%s1 + $0x28] sm:$0xff]
  %v38 = vld [vmem:[%s1 + $0x30] sm:$0xff]
  %v39 = vld [vmem:[%s1 + $0x38] sm:$0xff]
  %v40 = vld [vmem:[%s1 + $0x40] sm:$0xff]
  %v41 = vld [vmem:[%s1 + $0x48] sm:$0xff]
  %v42 = vld [vmem:[%s1 + $0x50] sm:$0xff]
  %v43 = vld [vmem:[%s1 + $0x58] sm:$0xff]
  %v44 = vld [vmem:[%s1 + $0x60] sm:$0xff]
  %v45 = vld [vmem:[%s1 + $0x68] sm:$0xff]
  %v46 = vld [vmem:[%s1 + $0x70] sm:$0xff]
  %v47 = vld [vmem:[%s1 + $0x78] sm:$0xff]
  %v48 = vld [vmem:[%s1 + $0x80] sm:$0xff]
  %v49 = vld [vmem:[%s1 + $0x88] sm:$0xff]
  %v50 = vld [vmem:[%s2] sm:$0x1]
  %v52 = vperm.slane %v50, 0
  %vm54 = vcmask 130048
  %v56 = vsel %vm54, %v21, 0
  %v59 = vsel %vm54, %v23, 0
  %v62 = vsel %vm54, %v25, 0
  %v65 = vsel %vm54, %v27, 0
  %v68 = vsel %vm54, %v29, 0
  %v71 = vsel %vm54, %v31, 0
  %73 = vmatpush.msra.mxu0 %v47
  %74 = vmatpush.msra.mxu0 %v46
  %75 = vmatpush.msra.mxu0 %v45
  %76 = vmatpush.msra.mxu0 %v44
  %77 = vmatpush.msra.mxu0 %v43
  %78 = vmatpush.msra.mxu0 %v42
  %79 = vmatpush.msra.mxu0 %v41
  %80 = vmatpush.msra.mxu0 %v40
  %81 = vmatpush.msra.mxu0 %v39
  %82 = vmatpush.msra.mxu0 %v38
  %83 = vmatpush.msra.mxu0 %v37
  %84 = vmatpush.msra.mxu0 %v36
  %85 = vmatpush.msra.mxu0 %v35
  %86 = vmatpush.msra.mxu0 %v34
  %87 = vmatpush.msra.mxu0 %v33
  %88 = vmatpush.msra.mxu0 %v32
  %89 = vmatmul.f32.gmra.mxu0 %v20
  %v90 = vpop.f32.mrf.mxu0
  %v91 = vadd.f32 %v52, %v90
  %92 = vmatmul.f32.gmra.mxu0 %v22
  %v93 = vpop.f32.mrf.mxu0
  %v94 = vadd.f32 %v52, %v93
  %95 = vmatmul.f32.gmra.mxu0 %v24
  %v96 = vpop.f32.mrf.mxu0
  %v97 = vadd.f32 %v52, %v96
  %98 = vmatmul.f32.gmra.mxu0 %v26
  %v99 = vpop.f32.mrf.mxu0
  %v100 = vadd.f32 %v52, %v99
  %101 = vmatmul.f32.gmra.mxu0 %v28
  %v102 = vpop.f32.mrf.mxu0
  %v103 = vadd.f32 %v52, %v102
  %104 = vmatmul.f32.gmra.mxu0 %v30
  %v105 = vpop.f32.mrf.mxu0
  %v106 = vadd.f32 %v52, %v105
  %107 = vdwg.mxu0
  %108 = vmatpush.msra.mxu0 0.0
  %109 = vmatpush.msra.mxu0 0.0
  %110 = vmatpush.msra.mxu0 0.0
  %111 = vmatpush.msra.mxu0 0.0
  %112 = vmatpush.msra.mxu0 0.0
  %113 = vmatpush.msra.mxu0 0.0
  %114 = vmatpush.msra.mxu0 0.0
  %115 = vmatpush.msra.mxu0 0.0
  %116 = vmatpush.msra.mxu0 0.0
  %117 = vmatpush.msra.mxu0 0.0
  %118 = vmatpush.msra.mxu0 0.0
  %119 = vmatpush.msra.mxu0 0.0
  %120 = vmatpush.msra.mxu0 0.0
  %121 = vmatpush.msra.mxu0 0.0
  %122 = vmatpush.msra.mxu0 %v49
  %123 = vmatpush.msra.mxu0 %v48
  %124 = vmatmul.f32.gmra.mxu0 %v56
  %v125 = vpop.f32.mrf.mxu0
  %v126 = vadd.f32 %v91, %v125
  %127 = vmatmul.f32.gmra.mxu0 %v59
  %v128 = vpop.f32.mrf.mxu0
  %v129 = vadd.f32 %v94, %v128
  %130 = vmatmul.f32.gmra.mxu0 %v62
  %v131 = vpop.f32.mrf.mxu0
  %v132 = vadd.f32 %v97, %v131
  %133 = vmatmul.f32.gmra.mxu0 %v65
  %v134 = vpop.f32.mrf.mxu0
  %v135 = vadd.f32 %v100, %v134
  %136 = vmatmul.f32.gmra.mxu0 %v68
  %v137 = vpop.f32.mrf.mxu0
  %v138 = vadd.f32 %v103, %v137
  %139 = vmatmul.f32.gmra.mxu0 %v71
  %v140 = vpop.f32.mrf.mxu0
  %v141 = vadd.f32 %v106, %v140
  %142 = vdwg.mxu0
  %v143 = vmax.f32 %v126, 0.0
  %v144 = vmax.f32 %v129, 0.0
  %v145 = vmax.f32 %v132, 0.0
  %v146 = vmax.f32 %v135, 0.0
  %v147 = vmax.f32 %v138, 0.0
  %v148 = vmax.f32 %v141, 0.0
  %v149 = vld [vmem:[%s3] sm:$0xff]
  %v150 = vld [vmem:[%s3 + $0x8] sm:$0xff]
  %v151 = vld [vmem:[%s3 + $0x10] sm:$0xff]
  %v152 = vld [vmem:[%s3 + $0x18] sm:$0xff]
  %v153 = vld [vmem:[%s3 + $0x20] sm:$0xff]
  %v154 = vld [vmem:[%s3 + $0x28] sm:$0xff]
  %v156 = vsel %vm54, %v145, 0
  %v159 = vsel %vm54, %v146, 0
  %161 = vmatpush.msra.mxu0 0.0
  %162 = vmatpush.msra.mxu0 0.0
  %163 = vmatpush.msra.mxu0 0.0
  %164 = vmatpush.msra.mxu0 0.0
  %165 = vmatpush.msra.mxu0 0.0
  %166 = vmatpush.msra.mxu0 0.0
  %167 = vmatpush.msra.mxu0 0.0
  %168 = vmatpush.msra.mxu0 0.0
  %169 = vmatpush.msra.mxu0 0.0
  %170 = vmatpush.msra.mxu0 0.0
  %171 = vmatpush.msra.mxu0 0.0
  %172 = vmatpush.msra.mxu0 0.0
  %173 = vmatpush.msra.mxu0 0.0
  %174 = vmatpush.msra.mxu0 0.0
  %175 = vmatpush.msra.mxu0 %v152
  %176 = vmatpush.msra.mxu0 %v151
  %177 = vmatmul.f32.gmra.mxu0 %v156
  %v178 = vpop.f32.mrf.mxu0
  %v179 = vadd.f32 0.0, %v178
  %180 = vmatmul.f32.gmra.mxu0 %v159
  %v181 = vpop.f32.mrf.mxu0
  %v182 = vadd.f32 0.0, %v181
  %183 = vdwg.mxu0
  %v185 = vsel %vm54, %v143, 0
  %v188 = vsel %vm54, %v144, 0
  %190 = vmatpush.msra.mxu0 0.0
  %191 = vmatpush.msra.mxu0 0.0
  %192 = vmatpush.msra.mxu0 0.0
  %193 = vmatpush.msra.mxu0 0.0
  %194 = vmatpush.msra.mxu0 0.0
  %195 = vmatpush.msra.mxu0 0.0
  %196 = vmatpush.msra.mxu0 0.0
  %197 = vmatpush.msra.mxu0 0.0
  %198 = vmatpush.msra.mxu0 0.0
  %199 = vmatpush.msra.mxu0 0.0
  %200 = vmatpush.msra.mxu0 0.0
  %201 = vmatpush.msra.mxu0 0.0
  %202 = vmatpush.msra.mxu0 0.0
  %203 = vmatpush.msra.mxu0 0.0
  %204 = vmatpush.msra.mxu0 %v150
  %205 = vmatpush.msra.mxu0 %v149
  %206 = vmatmul.f32.gmra.mxu0 %v185
  %v207 = vpop.f32.mrf.mxu0
  %v208 = vadd.f32 %v179, %v207
  %209 = vmatmul.f32.gmra.mxu0 %v188
  %v210 = vpop.f32.mrf.mxu0
  %v211 = vadd.f32 %v182, %v210
  %212 = vdwg.mxu0
  %v214 = vsel %vm54, %v147, 0
  %v217 = vsel %vm54, %v148, 0
  %219 = vmatpush.msra.mxu0 0.0
  %220 = vmatpush.msra.mxu0 0.0
  %221 = vmatpush.msra.mxu0 0.0
  %222 = vmatpush.msra.mxu0 0.0
  %223 = vmatpush.msra.mxu0 0.0
  %224 = vmatpush.msra.mxu0 0.0
  %225 = vmatpush.msra.mxu0 0.0
  %226 = vmatpush.msra.mxu0 0.0
  %227 = vmatpush.msra.mxu0 0.0
  %228 = vmatpush.msra.mxu0 0.0
  %229 = vmatpush.msra.mxu0 0.0
  %230 = vmatpush.msra.mxu0 0.0
  %231 = vmatpush.msra.mxu0 0.0
  %232 = vmatpush.msra.mxu0 0.0
  %233 = vmatpush.msra.mxu0 %v154
  %234 = vmatpush.msra.mxu0 %v153
  %235 = vmatmul.f32.gmra.mxu0 %v214
  %v236 = vpop.f32.mrf.mxu0
  %v237 = vadd.f32 0.0, %v236
  %238 = vmatmul.f32.gmra.mxu0 %v217
  %v239 = vpop.f32.mrf.mxu0
  %v240 = vadd.f32 0.0, %v239
  %241 = vdwg.mxu0
  %v242 = vadd.f32 %v208, %v237
  %v243 = vadd.f32 %v211, %v240
  %v244 = vld [vmem:[%s4] sm:$0x1]
  %v246 = vperm.slane %v244, 0
  %v248 = vadd.f32 %v242, %v246
  %v249 = vadd.f32 %v243, %v246
  %250 = vst.msk [vmem:[%s5] sm:$0xff] %vm54, %v248
  %251 = vst.msk [vmem:[%s5 + $0x8] sm:$0xff] %vm54, %v249
  // Predicated region
  $region22: #{_lambda_.10} parent=0 // pred_check
    _
  $region23: #{_lambda_.10} parent=0 // pred_check_branch
    %253 = sbr.rel (0) target = $region25
  $region24: #{_lambda_.10} parent=0 // pred_region
    _
  $region25: #{_lambda_.10} parent=0 // pred_fallthru
    _
  // Predicated region
  $region26: #{_lambda_.10} parent=0 // pred_check
    _
  $region27: #{_lambda_.10} parent=0 // pred_check_branch
    %255 = sbr.rel (0) target = $region29
  $region28: #{_lambda_.10} parent=0 // pred_region
    _
  $region29: #{_lambda_.10} parent=0 // pred_fallthru
    _

// kernel: _lambda_.13
$region0: #{_lambda_.13}
  #allocation0 [shape = 'u32[]', space=smem, size = 0x4, offset = 0x4, fixed_abs, tag = 'smem constant byte address 0x4 - core index']
  #allocation1 [shape = 'u32[72,128]{1,0:T(1,128)}', space=vmem, size = 0x9000, scoped, tag = 'internal scratch']
  %s0 = inlined_call_operand.vmem [shape: f32[16,12], index: 0, kind: input, shape index: {}]
  %s1 = inlined_call_operand.vmem [shape: f32[16,16], index: 1, kind: input, shape index: {}]
  %s2 = inlined_call_operand.vmem [shape: f32[12,16], index: 2, kind: input, shape index: {}]
  %s3 = inlined_call_operand.vmem [shape: f32[1,16], index: 3, kind: input, shape index: {}]
  %s4 = inlined_call_operand.vmem [shape: f32[16,16], index: 4, kind: output, shape index: {}]
  %s5 = sld [smem:[#allocation0]]
  $region26: #{_lambda_.13} parent=0
    _
  %s7 = ssub.s32 1, %s5
  %s8 = scalar_select 0, %s7, %s5
  // Predicated region
  $region2: #{_lambda_.13} parent=0 // pred_check
    _
  $region3: #{_lambda_.13} parent=0 // pred_check_branch
    %10 = sbr.rel (0) target = $region5
  $region4: #{_lambda_.13} parent=0 // pred_region
    _
  $region5: #{_lambda_.13} parent=0 // pred_fallthru
    _
  // Predicated region
  $region6: #{_lambda_.13} parent=0 // pred_check
    _
  $region7: #{_lambda_.13} parent=0 // pred_check_branch
    %12 = sbr.rel (0) target = $region9
  $region8: #{_lambda_.13} parent=0 // pred_region
    _
  $region9: #{_lambda_.13} parent=0 // pred_fallthru
    _
  // Predicated region
  $region10: #{_lambda_.13} parent=0 // pred_check
    _
  $region11: #{_lambda_.13} parent=0 // pred_check_branch
    %14 = sbr.rel (0) target = $region13
  $region12: #{_lambda_.13} parent=0 // pred_region
    _
  $region13: #{_lambda_.13} parent=0 // pred_fallthru
    _
  // Predicated region
  $region14: #{_lambda_.13} parent=0 // pred_check
    _
  $region15: #{_lambda_.13} parent=0 // pred_check_branch
    %16 = sbr.rel (0) target = $region17
  $region16: #{_lambda_.13} parent=0 // pred_region
    _
  $region17: #{_lambda_.13} parent=0 // pred_fallthru
    _
  %v17 = vld [vmem:[%s0] sm:$0xff]
  %v18 = vld [vmem:[%s0 + $0x8] sm:$0xff]
  %vm19 = vcmask 97280
  %v20 = vsel %vm19, %v17, -inf
  %21 = vmax.xlane.f32.xlu0 %v20
  %v22 = vpop.xlane.xlu0 %21
  %v23 = vsel %vm19, %v18, -inf
  %24 = vmax.xlane.f32.xlu0 %v23
  %v25 = vpop.xlane.xlu0 %24
  %v26 = vsub.f32 %v17, %v22
  %v27 = vsub.f32 %v18, %v25
  %v28 = vmul.f32 %v26, 1.442695
  %v29 = vpow.pop %v28
  %v30 = vmul.f32 %v27, 1.442695
  %v31 = vpow.pop %v30
  %v32 = vsel %vm19, %v29, 0.0
  %33 = vadd.xlane.f32.xlu0 %v32
  %v34 = vpop.xlane.xlu0 %33
  %v35 = vsel %vm19, %v31, 0.0
  %36 = vadd.xlane.f32.xlu0 %v35
  %v37 = vpop.xlane.xlu0 %36
  %v38 = vrcp.pop %v34
  %v39 = vrcp.pop %v37
  %v40 = vmul.f32 %v29, %v38
  %v41 = vmul.f32 %v31, %v39
  %v42 = vld [vmem:[%s2] sm:$0xff]
  %v43 = vld [vmem:[%s2 + $0x8] sm:$0xf]
  %v44 = vld [vmem:[%s3] sm:$0x1]
  %v46 = vperm.slane %v44, 0
  %v49 = vsel %vm19, %v40, 0
  %v52 = vsel %vm19, %v41, 0
  %vm54 = vcmask 1043456
  %v56 = vsel %vm54, %v43, 0
  %58 = vmatpush.msra.mxu0 0.0
  %59 = vmatpush.msra.mxu0 0.0
  %60 = vmatpush.msra.mxu0 0.0
  %61 = vmatpush.msra.mxu0 0.0
  %62 = vmatpush.msra.mxu0 0.0
  %63 = vmatpush.msra.mxu0 0.0
  %64 = vmatpush.msra.mxu0 0.0
  %65 = vmatpush.msra.mxu0 0.0
  %66 = vmatpush.msra.mxu0 0.0
  %67 = vmatpush.msra.mxu0 0.0
  %68 = vmatpush.msra.mxu0 0.0
  %69 = vmatpush.msra.mxu0 0.0
  %70 = vmatpush.msra.mxu0 0.0
  %71 = vmatpush.msra.mxu0 0.0
  %72 = vmatpush.msra.mxu0 %v56
  %73 = vmatpush.msra.mxu0 %v42
  %74 = vmatmul.f32.gmra.mxu0 %v49
  %v75 = vpop.f32.mrf.mxu0
  %v76 = vadd.f32 %v46, %v75
  %77 = vmatmul.f32.gmra.mxu0 %v52
  %v78 = vpop.f32.mrf.mxu0
  %v79 = vadd.f32 %v46, %v78
  %80 = vdwg.mxu0
  %v81 = vld [vmem:[%s1] sm:$0xff]
  %v82 = vld [vmem:[%s1 + $0x8] sm:$0xff]
  %v83 = vadd.f32 %v76, %v81
  %v84 = vadd.f32 %v79, %v82
  %vm85 = vcmask 130048
  %86 = vst.msk [vmem:[%s4] sm:$0xff] %vm85, %v83
  %87 = vst.msk [vmem:[%s4 + $0x8] sm:$0xff] %vm85, %v84
  // Predicated region
  $region18: #{_lambda_.13} parent=0 // pred_check
    _
  $region19: #{_lambda_.13} parent=0 // pred_check_branch
    %89 = sbr.rel (0) target = $region21
  $region20: #{_lambda_.13} parent=0 // pred_region
    _
  $region21: #{_lambda_.13} parent=0 // pred_fallthru
    _
  // Predicated region
  $region22: #{_lambda_.13} parent=0 // pred_check
    _
  $region23: #{_lambda_.13} parent=0 // pred_check_branch
    %91 = sbr.rel (0) target = $region25
  $region24: #{_lambda_.13} parent=0 // pred_region
    _
  $region25: #{_lambda_.13} parent=0 // pred_fallthru
    _

// kernel: _lambda_.12
$region0: #{_lambda_.12}
  #allocation0 [shape = 'u32[]', space=smem, size = 0x4, offset = 0x4, fixed_abs, tag = 'smem constant byte address 0x4 - core index']
  #allocation1 [shape = 'u32[72,128]{1,0:T(1,128)}', space=vmem, size = 0x9000, scoped, tag = 'internal scratch']
  %s0 = inlined_call_operand.vmem [shape: f32[16,16], index: 0, kind: input, shape index: {}]
  %s1 = inlined_call_operand.vmem [shape: f32[16,12], index: 1, kind: input, shape index: {}]
  %s2 = inlined_call_operand.vmem [shape: f32[1,12], index: 2, kind: input, shape index: {}]
  %s3 = inlined_call_operand.vmem [shape: f32[16,12], index: 3, kind: output, shape index: {}]
  %s4 = sld [smem:[#allocation0]]
  $region22: #{_lambda_.12} parent=0
    _
  %s6 = ssub.s32 1, %s4
  %s7 = scalar_select 0, %s6, %s4
  // Predicated region
  $region2: #{_lambda_.12} parent=0 // pred_check
    _
  $region3: #{_lambda_.12} parent=0 // pred_check_branch
    %9 = sbr.rel (0) target = $region5
  $region4: #{_lambda_.12} parent=0 // pred_region
    _
  $region5: #{_lambda_.12} parent=0 // pred_fallthru
    _
  // Predicated region
  $region6: #{_lambda_.12} parent=0 // pred_check
    _
  $region7: #{_lambda_.12} parent=0 // pred_check_branch
    %11 = sbr.rel (0) target = $region9
  $region8: #{_lambda_.12} parent=0 // pred_region
    _
  $region9: #{_lambda_.12} parent=0 // pred_fallthru
    _
  // Predicated region
  $region10: #{_lambda_.12} parent=0 // pred_check
    _
  $region11: #{_lambda_.12} parent=0 // pred_check_branch
    %13 = sbr.rel (0) target = $region13
  $region12: #{_lambda_.12} parent=0 // pred_region
    _
  $region13: #{_lambda_.12} parent=0 // pred_fallthru
    _
  %v14 = vld [vmem:[%s0] sm:$0xff]
  %v15 = vld [vmem:[%s0 + $0x8] sm:$0xff]
  %v16 = vld [vmem:[%s1] sm:$0xff]
  %v17 = vld [vmem:[%s1 + $0x8] sm:$0xff]
  %v18 = vld [vmem:[%s2] sm:$0x1]
  %v20 = vperm.slane %v18, 0
  %vm22 = vcmask 130048
  %v24 = vsel %vm22, %v14, 0
  %v27 = vsel %vm22, %v15, 0
  %29 = vmatpush.msra.mxu0 0.0
  %30 = vmatpush.msra.mxu0 0.0
  %31 = vmatpush.msra.mxu0 0.0
  %32 = vmatpush.msra.mxu0 0.0
  %33 = vmatpush.msra.mxu0 0.0
  %34 = vmatpush.msra.mxu0 0.0
  %35 = vmatpush.msra.mxu0 0.0
  %36 = vmatpush.msra.mxu0 0.0
  %37 = vmatpush.msra.mxu0 0.0
  %38 = vmatpush.msra.mxu0 0.0
  %39 = vmatpush.msra.mxu0 0.0
  %40 = vmatpush.msra.mxu0 0.0
  %41 = vmatpush.msra.mxu0 0.0
  %42 = vmatpush.msra.mxu0 0.0
  %43 = vmatpush.msra.mxu0 %v17
  %44 = vmatpush.msra.mxu0 %v16
  %45 = vmatmul.f32.gmra.mxu0 %v24
  %v46 = vpop.f32.mrf.mxu0
  %v47 = vadd.f32 %v20, %v46
  %48 = vmatmul.f32.gmra.mxu0 %v27
  %v49 = vpop.f32.mrf.mxu0
  %v50 = vadd.f32 %v20, %v49
  %51 = vdwg.mxu0
  %vm52 = vcmask 97280
  %53 = vst.msk [vmem:[%s3] sm:$0xff] %vm52, %v47
  %54 = vst.msk [vmem:[%s3 + $0x8] sm:$0xff] %vm52, %v50
  // Predicated region
  $region14: #{_lambda_.12} parent=0 // pred_check
    _
  $region15: #{_lambda_.12} parent=0 // pred_check_branch
    %56 = sbr.rel (0) target = $region17
  $region16: #{_lambda_.12} parent=0 // pred_region
    _
  $region17: #{_lambda_.12} parent=0 // pred_fallthru
    _
  // Predicated region
  $region18: #{_lambda_.12} parent=0 // pred_check
    _
  $region19: #{_lambda_.12} parent=0 // pred_check_branch
    %58 = sbr.rel (0) target = $region21
  $region20: #{_lambda_.12} parent=0 // pred_region
    _
  $region21: #{_lambda_.12} parent=0 // pred_fallthru
    _

// kernel: _lambda_.11
$region0: #{_lambda_.11}
  #allocation0 [shape = 'u32[]', space=smem, size = 0x4, offset = 0x4, fixed_abs, tag = 'smem constant byte address 0x4 - core index']
  #allocation1 [shape = 'u32[72,128]{1,0:T(1,128)}', space=vmem, size = 0x9000, scoped, tag = 'internal scratch']
  %s0 = inlined_call_operand.vmem [shape: f32[16,16], index: 0, kind: input, shape index: {}]
  %s1 = inlined_call_operand.vmem [shape: f32[8,16], index: 1, kind: input, shape index: {}]
  %s2 = inlined_call_operand.vmem [shape: f32[2,16,256], index: 2, kind: input, shape index: {}]
  %s3 = inlined_call_operand.vmem [shape: f32[2,64,32], index: 3, kind: input, shape index: {}]
  %s4 = inlined_call_operand.vmem [shape: f32[2,29,64], index: 4, kind: input, shape index: {}]
  %s5 = inlined_call_operand.vmem [shape: f32[16,16], index: 5, kind: output, shape index: {}]
  %s6 = sld [smem:[#allocation0]]
  $region57: #{_lambda_.11} parent=0
    _
  %s8 = ssub.s32 1, %s6
  %s9 = scalar_select 0, %s8, %s6
  loop: start=0, step=1, limit=6
  $region2: #{_lambda_.11} parent=0 // loop_pre_header
    _
  $region3: #{_lambda_.11} parent=0 // loop_header
    %s11 = sphi 0, %s15
    %p12 = scmp.ge.s32.totalorder %s11, 6
    %s18 = sphi 0, %s30
    %s19 = sphi 0, %s26
    %s20 = sphi 0, %s18
    %s21 = sphi 0, %s19
    %s22 = sphi 0, %s20
    %s23 = sphi 0, %s21
    %s33 = sphi 0, %s35
    %s36 = sphi 0, %s33
    %s37 = sphi 0, %s36
    %s53 = sphi 0, %s37
    %s57 = sphi 0, %s57
    %s59 = sphi 0, %s57
    %s60 = sphi 0, %s59
    %s74 = sphi 0, %s60
    %s80 = sphi 0, %s82
    %s83 = sphi 0, %s80
    %s84 = sphi 0, %s83
    %s100 = sphi 0, %s84
    %s106 = sphi 0, %s108
    %s109 = sphi 0, %s106
    %s110 = sphi 0, %s109
    %s126 = sphi 0, %s110
    %s132 = sphi 0, %s134
    %s135 = sphi 0, %s132
    %s136 = sphi 0, %s135
    %s152 = sphi 0, %s136
    %s158 = sphi 0, %s160
    %s161 = sphi 0, %s158
    %s162 = sphi 0, %s161
    %s178 = sphi 0, %s162
  $region4: #{_lambda_.11} parent=0 // loop_header_branch
    %14 = sbr.rel (%p12) target = $region8
  $region5: #{_lambda_.11} parent=0 // loop_body
    %s16 = ssub.s32 %s11, 1
    %s17 = ssub.s32 %s11, 2
    %s24 = sadd.s32 1, %s19
    %p25 = scmp.ge.s32.totalorder %s24, 2
    %s26 = scalar_select %p25, 0, %s24
    %s27 = sadd.s32 1, %s18
    %s28 = scalar_select %p25, %s27, %s18
    %p29 = scmp.ge.s32.totalorder %s28, 2
    %s30 = scalar_select %p29, 0, %s28
    %s31 = ssub.s32 %s18, %s30
    %p32 = scmp.eq.s32.totalorder %s31, 0
    %s34 = sadd.s32 %s33, 1
    %s35 = scalar_select %p32, %s33, %s34
    %p38 = pneg %p32
    %p39 = scmp.eq.s32.totalorder %s11, 3
    %p40 = por %p38, %p39
    %p41 = scmp.ne.s32.totalorder %s33, %s36
    %p42 = scmp.eq.s32.totalorder %s11, 0
    %p43 = por %p41, %p42
    %p44 = scmp.ne.s32.totalorder %s33, %s36
    %p45 = scmp.eq.s32.totalorder %s16, 3
    %p46 = por %p44, %p45
    %p47 = scmp.ne.s32.totalorder %s36, %s37
    %p48 = scmp.eq.s32.totalorder %s16, 0
    %p49 = por %p47, %p48
    %p50 = scmp.ne.s32.totalorder %s36, %s37
    %p51 = scmp.eq.s32.totalorder %s17, 3
    %p52 = por %p50, %p51
    %p54 = scmp.ne.s32.totalorder %s37, %s53
    %p55 = scmp.eq.s32.totalorder %s17, 0
    %p56 = por %p54, %p55
    %s58 = sadd.s32 %s57, 1
    %p61 = scmp.eq.s32.totalorder %s11, 3
    %p62 = scmp.ne.s32.totalorder %s57, %s59
    %p63 = scmp.eq.s32.totalorder %s11, 0
    %p64 = por %p62, %p63
    %p65 = scmp.ne.s32.totalorder %s57, %s59
    %p66 = scmp.eq.s32.totalorder %s16, 3
    %p67 = por %p65, %p66
    %p68 = scmp.ne.s32.totalorder %s59, %s60
    %p69 = scmp.eq.s32.totalorder %s16, 0
    %p70 = por %p68, %p69
    %p71 = scmp.ne.s32.totalorder %s59, %s60
    %p72 = scmp.eq.s32.totalorder %s17, 3
    %p73 = por %p71, %p72
    %p75 = scmp.ne.s32.totalorder %s60, %s74
    %p76 = scmp.eq.s32.totalorder %s17, 0
    %p77 = por %p75, %p76
    %s78 = ssub.s32 %s19, %s26
    %p79 = scmp.eq.s32.totalorder %s78, 0
    %s81 = sadd.s32 %s80, 1
    %s82 = scalar_select %p79, %s80, %s81
    %p85 = pneg %p79
    %p86 = scmp.eq.s32.totalorder %s11, 3
    %p87 = por %p85, %p86
    %p88 = scmp.ne.s32.totalorder %s80, %s83
    %p89 = scmp.eq.s32.totalorder %s11, 0
    %p90 = por %p88, %p89
    %p91 = scmp.ne.s32.totalorder %s80, %s83
    %p92 = scmp.eq.s32.totalorder %s16, 3
    %p93 = por %p91, %p92
    %p94 = scmp.ne.s32.totalorder %s83, %s84
    %p95 = scmp.eq.s32.totalorder %s16, 0
    %p96 = por %p94, %p95
    %p97 = scmp.ne.s32.totalorder %s83, %s84
    %p98 = scmp.eq.s32.totalorder %s17, 3
    %p99 = por %p97, %p98
    %p101 = scmp.ne.s32.totalorder %s84, %s100
    %p102 = scmp.eq.s32.totalorder %s17, 0
    %p103 = por %p101, %p102
    %s104 = ssub.s32 %s19, %s26
    %p105 = scmp.eq.s32.totalorder %s104, 0
    %s107 = sadd.s32 %s106, 1
    %s108 = scalar_select %p105, %s106, %s107
    %p111 = pneg %p105
    %p112 = scmp.eq.s32.totalorder %s11, 3
    %p113 = por %p111, %p112
    %p114 = scmp.ne.s32.totalorder %s106, %s109
    %p115 = scmp.eq.s32.totalorder %s11, 0
    %p116 = por %p114, %p115
    %p117 = scmp.ne.s32.totalorder %s106, %s109
    %p118 = scmp.eq.s32.totalorder %s16, 3
    %p119 = por %p117, %p118
    %p120 = scmp.ne.s32.totalorder %s109, %s110
    %p121 = scmp.eq.s32.totalorder %s16, 0
    %p122 = por %p120, %p121
    %p123 = scmp.ne.s32.totalorder %s109, %s110
    %p124 = scmp.eq.s32.totalorder %s17, 3
    %p125 = por %p123, %p124
    %p127 = scmp.ne.s32.totalorder %s110, %s126
    %p128 = scmp.eq.s32.totalorder %s17, 0
    %p129 = por %p127, %p128
    %s130 = ssub.s32 %s19, %s26
    %p131 = scmp.eq.s32.totalorder %s130, 0
    %s133 = sadd.s32 %s132, 1
    %s134 = scalar_select %p131, %s132, %s133
    %p137 = pneg %p131
    %p138 = scmp.eq.s32.totalorder %s11, 3
    %p139 = por %p137, %p138
    %p140 = scmp.ne.s32.totalorder %s132, %s135
    %p141 = scmp.eq.s32.totalorder %s11, 0
    %p142 = por %p140, %p141
    %p143 = scmp.ne.s32.totalorder %s132, %s135
    %p144 = scmp.eq.s32.totalorder %s16, 3
    %p145 = por %p143, %p144
    %p146 = scmp.ne.s32.totalorder %s135, %s136
    %p147 = scmp.eq.s32.totalorder %s16, 0
    %p148 = por %p146, %p147
    %p149 = scmp.ne.s32.totalorder %s135, %s136
    %p150 = scmp.eq.s32.totalorder %s17, 3
    %p151 = por %p149, %p150
    %p153 = scmp.ne.s32.totalorder %s136, %s152
    %p154 = scmp.eq.s32.totalorder %s17, 0
    %p155 = por %p153, %p154
    %s156 = ssub.s32 %s18, %s30
    %p157 = scmp.eq.s32.totalorder %s156, 0
    %s159 = sadd.s32 %s158, 1
    %s160 = scalar_select %p157, %s158, %s159
    %p163 = pneg %p157
    %p164 = scmp.eq.s32.totalorder %s11, 3
    %p165 = por %p163, %p164
    %p166 = scmp.ne.s32.totalorder %s158, %s161
    %p167 = scmp.eq.s32.totalorder %s11, 0
    %p168 = por %p166, %p167
    %p169 = scmp.ne.s32.totalorder %s158, %s161
    %p170 = scmp.eq.s32.totalorder %s16, 3
    %p171 = por %p169, %p170
    %p172 = scmp.ne.s32.totalorder %s161, %s162
    %p173 = scmp.eq.s32.totalorder %s16, 0
    %p174 = por %p172, %p173
    %p175 = scmp.ne.s32.totalorder %s161, %s162
    %p176 = scmp.eq.s32.totalorder %s17, 3
    %p177 = por %p175, %p176
    %p179 = scmp.ne.s32.totalorder %s162, %s178
    %p180 = scmp.eq.s32.totalorder %s17, 0
    %p181 = por %p179, %p180
    %p182 = scmp.le.s32.totalorder 1, %s11
    %p183 = scmp.lt.s32.totalorder %s11, 5
    %p184 = pnand %p182, %p183
    %p185 = pneg %p184
    // Predicated region
    $region9: #{_lambda_.11} parent=5 // pred_check
      _
    $region10: #{_lambda_.11} parent=5 // pred_check_branch
      %187 = sbr.rel (%p184) target = $region12
    $region11: #{_lambda_.11} parent=5 // pred_region
      %s188 = ssub.s32 %s11, 1
      // Predicated region
      $region13: #{_lambda_.11} parent=11 // pred_check
        %p189 = pneg %p70
      $region14: #{_lambda_.11} parent=11 // pred_check_branch
        %191 = sbr.rel (%p189) target = $region16
      $region15: #{_lambda_.11} parent=11 // pred_region
        _
      $region16: #{_lambda_.11} parent=11 // pred_fallthru
        _
    $region12: #{_lambda_.11} parent=5 // pred_fallthru
      _
    %p192 = scmp.lt.s32.totalorder %s11, 4
    // Predicated region
    $region17: #{_lambda_.11} parent=5 // pred_check
      %p193 = pneg %p192
    $region18: #{_lambda_.11} parent=5 // pred_check_branch
      %195 = sbr.rel (%p193) target = $region20
    $region19: #{_lambda_.11} parent=5 // pred_region
      // Predicated region
      $region21: #{_lambda_.11} parent=19 // pred_check
        %p196 = pneg %p43
      $region22: #{_lambda_.11} parent=19 // pred_check_branch
        %198 = sbr.rel (%p196) target = $region24
      $region23: #{_lambda_.11} parent=19 // pred_region
        %p199 = scmp.lt.s32.totalorder %s18, 1
        %s200 = scalar_select %p199, %s18, 1
        %s201 = smul.addr %s200, 8
        %s202 = scalar_lea.vmem %s0, %s201
      $region24: #{_lambda_.11} parent=19 // pred_fallthru
        _
      // Predicated region
      $region25: #{_lambda_.11} parent=19 // pred_check
        %p203 = pneg %p90
      $region26: #{_lambda_.11} parent=19 // pred_check_branch
        %205 = sbr.rel (%p203) target = $region28
      $region27: #{_lambda_.11} parent=19 // pred_region
        %p206 = scmp.lt.s32.totalorder %s19, 1
        %s207 = scalar_select %p206, %s19, 1
        %s208 = smul.addr %s207, 4
        %s209 = smul.addr %s208, 8
        %s210 = scalar_lea.vmem %s2, %s209
      $region28: #{_lambda_.11} parent=19 // pred_fallthru
        _
      // Predicated region
      $region29: #{_lambda_.11} parent=19 // pred_check
        %p211 = pneg %p116
      $region30: #{_lambda_.11} parent=19 // pred_check_branch
        %213 = sbr.rel (%p211) target = $region32
      $region31: #{_lambda_.11} parent=19 // pred_region
        %p214 = scmp.lt.s32.totalorder %s19, 1
        %s215 = scalar_select %p214, %s19, 1
        %s216 = smul.addr %s215, 8
        %s217 = smul.addr %s216, 8
        %s218 = scalar_lea.vmem %s3, %s217
      $region32: #{_lambda_.11} parent=19 // pred_fallthru
        _
      // Predicated region
      $region33: #{_lambda_.11} parent=19 // pred_check
        %p219 = pneg %p142
      $region34: #{_lambda_.11} parent=19 // pred_check_branch
        %221 = sbr.rel (%p219) target = $region36
      $region35: #{_lambda_.11} parent=19 // pred_region
        %p222 = scmp.lt.s32.totalorder %s19, 1
        %s223 = scalar_select %p222, %s19, 1
        %s224 = smul.addr %s223, 4
        %s225 = smul.addr %s224, 8
        %s226 = scalar_lea.vmem %s4, %s225
      $region36: #{_lambda_.11} parent=19 // pred_fallthru
        _
    $region20: #{_lambda_.11} parent=5 // pred_fallthru
      _
    %p227 = scmp.le.s32.totalorder 1, %s11
    %p228 = scmp.lt.s32.totalorder %s11, 5
    %p229 = pnand %p227, %p228
    %p230 = pneg %p229
    // Predicated region
    $region37: #{_lambda_.11} parent=5 // pred_check
      _
    $region38: #{_lambda_.11} parent=5 // pred_check_branch
      %232 = sbr.rel (%p229) target = $region40
    $region39: #{_lambda_.11} parent=5 // pred_region
      %s233 = ssub.s32 %s11, 1
      %p234 = scmp.lt.s32.totalorder %s20, 1
      %s235 = scalar_select %p234, %s20, 1
      %s236 = smul.addr %s235, 8
      %s237 = scalar_lea.vmem %s0, %s236
      %p238 = pneg %p49
      %p239 = pneg %p46
      %p240 = pneg %p70
      %p241 = pneg %p67
      %p242 = scmp.lt.s32.totalorder %s21, 1
      %s243 = scalar_select %p242, %s21, 1
      %s244 = smul.addr %s243, 4
      %s245 = smul.addr %s244, 8
      %s246 = scalar_lea.vmem %s2, %s245
      %p247 = pneg %p96
      %p248 = pneg %p93
      %p249 = scmp.lt.s32.totalorder %s21, 1
      %s250 = scalar_select %p249, %s21, 1
      %s251 = smul.addr %s250, 8
      %s252 = smul.addr %s251, 8
      %s253 = scalar_lea.vmem %s3, %s252
      %p254 = pneg %p122
      %p255 = pneg %p119
      %p256 = scmp.lt.s32.totalorder %s21, 1
      %s257 = scalar_select %p256, %s21, 1
      %s258 = smul.addr %s257, 4
      %s259 = smul.addr %s258, 8
      %s260 = scalar_lea.vmem %s4, %s259
      %p261 = pneg %p148
      %p262 = pneg %p145
      %p263 = pneg %p174
      %p264 = pneg %p171
      %p265 = scmp.lt.s32.totalorder %s20, 1
      %s266 = scalar_select %p265, %s20, 1
      %s267 = smul.addr %s266, 8
      %s268 = scalar_lea.vmem %s5, %s267
      %p269 = scmp.lt.s32.totalorder %s20, 1
      %s270 = scalar_select %p269, %s20, 1
      %s271 = smul.addr %s270, 8
      %s272 = scalar_lea.vmem %s0, %s271
      %p273 = scmp.lt.s32.totalorder %s21, 1
      %s274 = scalar_select %p273, %s21, 1
      %s275 = smul.addr %s274, 4
      %s276 = smul.addr %s275, 8
      %s277 = scalar_lea.vmem %s2, %s276
      %p278 = scmp.lt.s32.totalorder %s21, 1
      %s279 = scalar_select %p278, %s21, 1
      %s280 = smul.addr %s279, 8
      %s281 = smul.addr %s280, 8
      %s282 = scalar_lea.vmem %s3, %s281
      %p283 = scmp.lt.s32.totalorder %s21, 1
      %s284 = scalar_select %p283, %s21, 1
      %s285 = smul.addr %s284, 4
      %s286 = smul.addr %s285, 8
      %s287 = scalar_lea.vmem %s4, %s286
      %p288 = scmp.lt.s32.totalorder %s20, 1
      %s289 = scalar_select %p288, %s20, 1
      %s290 = smul.addr %s289, 8
      %s291 = scalar_lea.vmem %s5, %s290
      %p292 = scmp.eq.s32.totalorder %s21, 0
      // Predicated region
      $region41: #{_lambda_.11} parent=39 // pred_check
        %p293 = pneg %p292
      $region42: #{_lambda_.11} parent=39 // pred_check_branch
        %295 = sbr.rel (%p293) target = $region44
      $region43: #{_lambda_.11} parent=39 // pred_region
        %v296 = vld [vmem:[%s272] sm:$0xff]
        %vm297 = vcmask 130048
        %298 = vst.msk [vmem:[%s291] sm:$0xff] %vm297, %v296
      $region44: #{_lambda_.11} parent=39 // pred_fallthru
        _
      %v299 = vld [vmem:[%s291] sm:$0xff]
      %v300 = vld [vmem:[%s277] sm:$0xff]
      %v301 = vld [vmem:[%s277 + $0x8] sm:$0xff]
      %v302 = vld [vmem:[%s277 + $0x10] sm:$0xff]
      %v303 = vld [vmem:[%s277 + $0x18] sm:$0xff]
      %v304 = vld [vmem:[%s282] sm:$0xff]
      %v305 = vld [vmem:[%s282 + $0x8] sm:$0xff]
      %v306 = vld [vmem:[%s282 + $0x10] sm:$0xff]
      %v307 = vld [vmem:[%s282 + $0x18] sm:$0xff]
      %v308 = vld [vmem:[%s282 + $0x20] sm:$0xff]
      %v309 = vld [vmem:[%s282 + $0x28] sm:$0xff]
      %v310 = vld [vmem:[%s282 + $0x30] sm:$0xff]
      %v311 = vld [vmem:[%s282 + $0x38] sm:$0xff]
      %v312 = vld [vmem:[%s287] sm:$0xff]
      %v313 = vld [vmem:[%s287 + $0x8] sm:$0xff]
      %v314 = vld [vmem:[%s287 + $0x10] sm:$0xff]
      %v315 = vld [vmem:[%s287 + $0x18] sm:$0x1f]
      %vm316 = vcmask 130048
      %v317 = vsel %vm316, %v299, 0.0
      %318 = vadd.xlane.f32.xlu0 %v317
      %v319 = vpop.xlane.xlu0 %318
      %v320 = vrcp.pop 16.0
      %v321 = vmul.f32 16.0, %v320
      %v322 = vsub.f32 1.0, %v321
      %v323 = vmul.f32 %v320, %v322
      %v324 = vadd.f32 %v320, %v323
      %vm325 = vweird.f32 %v320
      %v326 = vsel %vm325, %v320, %v324
      %v327 = vmul.f32 %v319, %v326
      %v328 = vsub.f32 %v299, %v327
      %v329 = vmul.f32 %v328, %v328
      %v330 = vsel %vm316, %v329, 0.0
      %331 = vadd.xlane.f32.xlu0 %v330
      %v332 = vpop.xlane.xlu0 %331
      %v333 = vmul.f32 %v332, %v326
      %v334 = vadd.f32 %v333, 1e-05
      %v335 = vrsqrt.pop %v334
      %v336 = vmul.f32 %v335, %v334
      %v337 = vmul.f32 %v336, %v335
      %v338 = vmul.f32 0.5, %v337
      %v339 = vsub.f32 1.5, %v338
      %v340 = vmul.f32 %v335, %v339
      %vm341 = vweird.f32 %v334
      %vm342 = vweird.f32 %v335
      %vm343 = vmor %vm341, %vm342
      %v344 = vsel %vm343, %v335, %v340
      %v345 = vmul.f32 %v328, %v344
      %v346 = vperm.slane %v312, 0
      %v347 = vmul.f32 %v345, %v346
      %v348 = vperm.slane %v312, 1
      %v349 = vadd.f32 %v347, %v348
      %v350 = vperm.slane %v312, 2
      %v352 = vsel %vm316, %v349, 0
      %354 = vmatpush.msra.mxu0 0.0
      %355 = vmatpush.msra.mxu0 0.0
      %356 = vmatpush.msra.mxu0 0.0
      %357 = vmatpush.msra.mxu0 0.0
      %358 = vmatpush.msra.mxu0 0.0
      %359 = vmatpush.msra.mxu0 0.0
      %360 = vmatpush.msra.mxu0 0.0
      %361 = vmatpush.msra.mxu0 0.0
      %362 = vmatpush.msra.mxu0 0.0
      %363 = vmatpush.msra.mxu0 0.0
      %364 = vmatpush.msra.mxu0 0.0
      %365 = vmatpush.msra.mxu0 0.0
      %366 = vmatpush.msra.mxu0 0.0
      %367 = vmatpush.msra.mxu0 0.0
      %368 = vmatpush.msra.mxu0 %v302
      %369 = vmatpush.msra.mxu0 %v300
      %370 = vmatmul.f32.gmra.mxu0 %v352
      %v371 = vpop.f32.mrf.mxu0
      %v372 = vadd.f32 %v350, %v371
      %373 = vdwg.mxu0
      %v374 = vsub.f32 0.0, %v372
      %v375 = vmul.f32 %v374, 1.442695
      %v376 = vpow.pop %v375
      %v377 = vadd.f32 %v376, 1.0
      %v378 = vrcp.pop %v377
      %v379 = vmul.f32 %v377, %v378
      %v380 = vsub.f32 1.0, %v379
      %v381 = vmul.f32 %v378, %v380
      %v382 = vadd.f32 %v378, %v381
      %vm383 = vweird.f32 %v377
      %vm384 = vweird.f32 %v378
      %vm385 = vmor %vm383, %vm384
      %v386 = vsel %vm385, %v378, %v382
      %v387 = vand.u32 2147483647, %v377
      %vm388 = vcmp.eq.f32.partialorder %v387, 8.507059e+37
      %v389 = vand.u32 %v377, 2147483648
      %v390 = vor.u32 1.1754944e-38, %v389
      %v391 = vsel %vm388, %v390, %v386
      %v392 = vmul.f32 1.0, %v391
      %v393 = vmul.f32 %v372, %v392
      %v394 = vperm.slane %v312, 3
      %vm395 = vcmask 523264
      %v397 = vsel %vm395, %v393, 0
      %399 = vmatpush.msra.mxu0 0.0
      %400 = vmatpush.msra.mxu0 0.0
      %401 = vmatpush.msra.mxu0 0.0
      %402 = vmatpush.msra.mxu0 0.0
      %403 = vmatpush.msra.mxu0 0.0
      %404 = vmatpush.msra.mxu0 0.0
      %405 = vmatpush.msra.mxu0 0.0
      %406 = vmatpush.msra.mxu0 0.0
      %407 = vmatpush.msra.mxu0 %v311
      %408 = vmatpush.msra.mxu0 %v310
      %409 = vmatpush.msra.mxu0 %v309
      %410 = vmatpush.msra.mxu0 %v308
      %411 = vmatpush.msra.mxu0 %v307
      %412 = vmatpush.msra.mxu0 %v306
      %413 = vmatpush.msra.mxu0 %v305
      %414 = vmatpush.msra.mxu0 %v304
      %415 = vmatmul.f32.gmra.mxu0 %v397
      %v416 = vpop.f32.mrf.mxu0
      %v417 = vadd.f32 %v394, %v416
      %418 = vdwg.mxu0
      %v419 = vmul.f32 %v417, 0.5
      %v420 = vadd.f32 %v299, %v419
      %v421 = vsel %vm316, %v420, 0.0
      %422 = vadd.xlane.f32.xlu0 %v421
      %v423 = vpop.xlane.xlu0 %422
      %v424 = vmul.f32 %v423, %v326
      %v425 = vsub.f32 %v420, %v424
      %v426 = vmul.f32 %v425, %v425
      %v427 = vsel %vm316, %v426, 0.0
      %428 = vadd.xlane.f32.xlu0 %v427
      %v429 = vpop.xlane.xlu0 %428
      %v430 = vmul.f32 %v429, %v326
      %v431 = vadd.f32 %v430, 1e-05
      %v432 = vrsqrt.pop %v431
      %v433 = vmul.f32 %v432, %v431
      %v434 = vmul.f32 %v433, %v432
      %v435 = vmul.f32 0.5, %v434
      %v436 = vsub.f32 1.5, %v435
      %v437 = vmul.f32 %v432, %v436
      %vm438 = vweird.f32 %v431
      %vm439 = vweird.f32 %v432
      %vm440 = vmor %vm438, %vm439
      %v441 = vsel %vm440, %v432, %v437
      %v442 = vmul.f32 %v425, %v441
      %v443 = vperm.slane %v312, 4
      %v444 = vmul.f32 %v442, %v443
      %v445 = vperm.slane %v312, 5
      %v446 = vadd.f32 %v444, %v445
      %v447 = vperm.slane %v312, 6
      %450 = vrot.lane.b32.xlu0 %v300, 64
      %v451 = vpop.permute.xlu0 %450
      %452 = vrot.lane.b32.xlu0 %v302, 64
      %v453 = vpop.permute.xlu0 %452
      %v457 = vsel %vm316, %v446, 0
      %459 = vmatpush.msra.mxu0 0.0
      %460 = vmatpush.msra.mxu0 0.0
      %461 = vmatpush.msra.mxu0 0.0
      %462 = vmatpush.msra.mxu0 0.0
      %463 = vmatpush.msra.mxu0 0.0
      %464 = vmatpush.msra.mxu0 0.0
      %465 = vmatpush.msra.mxu0 0.0
      %466 = vmatpush.msra.mxu0 0.0
      %467 = vmatpush.msra.mxu0 0.0
      %468 = vmatpush.msra.mxu0 0.0
      %469 = vmatpush.msra.mxu0 0.0
      %470 = vmatpush.msra.mxu0 0.0
      %471 = vmatpush.msra.mxu0 0.0
      %472 = vmatpush.msra.mxu0 0.0
      %473 = vmatpush.msra.mxu0 %v453
      %474 = vmatpush.msra.mxu0 %v451
      %475 = vmatmul.f32.gmra.mxu0 %v457
      %v476 = vpop.f32.mrf.mxu0
      %v477 = vadd.f32 %v447, %v476
      %478 = vdwg.mxu0
      %v479 = vld [vmem:[%s1] sm:$0xff]
      %480 = vrot.lane.b32.xlu0 %v300, 16
      %v481 = vpop.permute.xlu0 %480
      %482 = vrot.lane.b32.xlu0 %v302, 16
      %v483 = vpop.permute.xlu0 %482
      %v487 = vsel %vm316, %v479, 0
      %489 = vmatpush.msra.mxu0 0.0
      %490 = vmatpush.msra.mxu0 0.0
      %491 = vmatpush.msra.mxu0 0.0
      %492 = vmatpush.msra.mxu0 0.0
      %493 = vmatpush.msra.mxu0 0.0
      %494 = vmatpush.msra.mxu0 0.0
      %495 = vmatpush.msra.mxu0 0.0
      %496 = vmatpush.msra.mxu0 0.0
      %497 = vmatpush.msra.mxu0 0.0
      %498 = vmatpush.msra.mxu0 0.0
      %499 = vmatpush.msra.mxu0 0.0
      %500 = vmatpush.msra.mxu0 0.0
      %501 = vmatpush.msra.mxu0 0.0
      %502 = vmatpush.msra.mxu0 0.0
      %503 = vmatpush.msra.mxu0 %v483
      %504 = vmatpush.msra.mxu0 %v481
      %505 = vmatmul.f32.gmra.mxu0 %v487
      %v506 = vpop.f32.mrf.mxu0
      %v507 = vadd.f32 0.0, %v506
      %508 = vdwg.mxu0
      %510 = vrot.lane.b32.xlu0 %v477, 120
      %v511 = vpop.permute.xlu0 %510
      %514 = vrot.lane.b32.xlu0 %v507, 120
      %v515 = vpop.permute.xlu0 %514
      %517 = vrot.lane.b32.xlu0 %v312, 120
      %v518 = vpop.permute.xlu0 %517
      %521 = vrot.lane.b32.xlu0 %v313, 120
      %v522 = vpop.permute.xlu0 %521
      %v524 = vperm.slane %v312, 7
      %v525 = vperm.slane %v518, 7
      %v526 = vadd.f32 %v477, %v524
      %v527 = vadd.f32 %v511, %v525
      %v528 = vperm.slane %v313, 0
      %v529 = vperm.slane %v522, 0
      %v530 = vadd.f32 %v477, %v528
      %v531 = vadd.f32 %v511, %v529
      %vm532 = vcmask 64512
      %v534 = vsel %vm532, %v530, 0
      %v536 = vsel %vm532, %v507, 0
      %538 = vmatpush.xpose.msra.mxu0 0.0
      %539 = vmatpush.xpose.msra.mxu0 0.0
      %540 = vmatpush.xpose.msra.mxu0 0.0
      %541 = vmatpush.xpose.msra.mxu0 0.0
      %542 = vmatpush.xpose.msra.mxu0 0.0
      %543 = vmatpush.xpose.msra.mxu0 0.0
      %544 = vmatpush.xpose.msra.mxu0 0.0
      %545 = vmatpush.xpose.msra.mxu0 0.0
      %546 = vmatpush.xpose.msra.mxu0 0.0
      %547 = vmatpush.xpose.msra.mxu0 0.0
      %548 = vmatpush.xpose.msra.mxu0 0.0
      %549 = vmatpush.xpose.msra.mxu0 0.0
      %550 = vmatpush.xpose.msra.mxu0 0.0
      %551 = vmatpush.xpose.msra.mxu0 0.0
      %552 = vmatpush.xpose.msra.mxu0 0.0
      %553 = vmatpush.xpose.msra.mxu0 %v536
      %554 = vmatmul.f32.gmra.mxu0 %v534
      %v555 = vpop.f32.mrf.mxu0
      %v556 = vadd.f32 0.0, %v555
      %557 = vdwg.mxu0
      %v559 = vsel %vm532, %v531, 0
      %v561 = vsel %vm532, %v515, 0
      %563 = vmatpush.xpose.msra.mxu0 0.0
      %564 = vmatpush.xpose.msra.mxu0 0.0
      %565 = vmatpush.xpose.msra.mxu0 0.0
      %566 = vmatpush.xpose.msra.mxu0 0.0
      %567 = vmatpush.xpose.msra.mxu0 0.0
      %568 = vmatpush.xpose.msra.mxu0 0.0
      %569 = vmatpush.xpose.msra.mxu0 0.0
      %570 = vmatpush.xpose.msra.mxu0 0.0
      %571 = vmatpush.xpose.msra.mxu0 0.0
      %572 = vmatpush.xpose.msra.mxu0 0.0
      %573 = vmatpush.xpose.msra.mxu0 0.0
      %574 = vmatpush.xpose.msra.mxu0 0.0
      %575 = vmatpush.xpose.msra.mxu0 0.0
      %576 = vmatpush.xpose.msra.mxu0 0.0
      %577 = vmatpush.xpose.msra.mxu0 0.0
      %578 = vmatpush.xpose.msra.mxu0 %v561
      %579 = vmatmul.f32.gmra.mxu0 %v559
      %v580 = vpop.f32.mrf.mxu0
      %v581 = vadd.f32 0.0, %v580
      %582 = vdwg.mxu0
      %585 = vrot.lane.b32.xlu0 %v556, 121
      %v586 = vpop.permute.xlu0 %585
      %587 = vrot.lane.b32.xlu0 %v581, 121
      %v588 = vpop.permute.xlu0 %587
      %v591 = vrot.slane %v556, 1
      %v592 = vrot.slane %v581, 1
      %593 = vrot.lane.b32.xlu0 %v591, 2
      %v594 = vpop.permute.xlu0 %593
      %595 = vrot.lane.b32.xlu0 %v592, 2
      %v596 = vpop.permute.xlu0 %595
      %vm599 = vcmask 7168
      %v600 = vsel %vm599, %v586, 0.0
      %v601 = vsel %vm599, %v588, 0.0
      %vm602 = vcmask 15360
      %v603 = vsel %vm602, %v600, %v594
      %v604 = vsel %vm602, %v601, %v596
      %605 = vrot.lane.b32.xlu0 %v556, 122
      %v606 = vpop.permute.xlu0 %605
      %607 = vrot.lane.b32.xlu0 %v581, 122
      %v608 = vpop.permute.xlu0 %607
      %611 = vrot.lane.b32.xlu0 %v591, 3
      %v612 = vpop.permute.xlu0 %611
      %613 = vrot.lane.b32.xlu0 %v592, 3
      %v614 = vpop.permute.xlu0 %613
      %v617 = vsel %vm602, %v606, 0.0
      %v618 = vsel %vm602, %v608, 0.0
      %vm619 = vcmask 23552
      %v620 = vsel %vm619, %v617, %v612
      %v621 = vsel %vm619, %v618, %v614
      %622 = vrot.lane.b32.xlu0 %v556, 123
      %v623 = vpop.permute.xlu0 %622
      %624 = vrot.lane.b32.xlu0 %v581, 123
      %v625 = vpop.permute.xlu0 %624
      %628 = vrot.lane.b32.xlu0 %v591, 4
      %v629 = vpop.permute.xlu0 %628
      %630 = vrot.lane.b32.xlu0 %v592, 4
      %v631 = vpop.permute.xlu0 %630
      %v634 = vsel %vm619, %v623, 0.0
      %v635 = vsel %vm619, %v625, 0.0
      %vm636 = vcmask 31744
      %v637 = vsel %vm636, %v634, %v629
      %v638 = vsel %vm636, %v635, %v631
      %639 = vrot.lane.b32.xlu0 %v556, 124
      %v640 = vpop.permute.xlu0 %639
      %641 = vrot.lane.b32.xlu0 %v581, 124
      %v642 = vpop.permute.xlu0 %641
      %645 = vrot.lane.b32.xlu0 %v591, 5
      %v646 = vpop.permute.xlu0 %645
      %647 = vrot.lane.b32.xlu0 %v592, 5
      %v648 = vpop.permute.xlu0 %647
      %v651 = vsel %vm636, %v640, 0.0
      %v652 = vsel %vm636, %v642, 0.0
      %vm653 = vcmask 39936
      %v654 = vsel %vm653, %v651, %v646
      %v655 = vsel %vm653, %v652, %v648
      %656 = vrot.lane.b32.xlu0 %v556, 125
      %v657 = vpop.permute.xlu0 %656
      %658 = vrot.lane.b32.xlu0 %v581, 125
      %v659 = vpop.permute.xlu0 %658
      %662 = vrot.lane.b32.xlu0 %v591, 6
      %v663 = vpop.permute.xlu0 %662
      %664 = vrot.lane.b32.xlu0 %v592, 6
      %v665 = vpop.permute.xlu0 %664
      %v668 = vsel %vm653, %v657, 0.0
      %v669 = vsel %vm653, %v659, 0.0
      %vm670 = vcmask 48128
      %v671 = vsel %vm670, %v668, %v663
      %v672 = vsel %vm670, %v669, %v665
      %673 = vrot.lane.b32.xlu0 %v556, 126
      %v674 = vpop.permute.xlu0 %673
      %675 = vrot.lane.b32.xlu0 %v581, 126
      %v676 = vpop.permute.xlu0 %675
      %679 = vrot.lane.b32.xlu0 %v591, 7
      %v680 = vpop.permute.xlu0 %679
      %681 = vrot.lane.b32.xlu0 %v592, 7
      %v682 = vpop.permute.xlu0 %681
      %v685 = vsel %vm670, %v674, 0.0
      %v686 = vsel %vm670, %v676, 0.0
      %vm687 = vcmask 56320
      %v688 = vsel %vm687, %v685, %v680
      %v689 = vsel %vm687, %v686, %v682
      %690 = vrot.lane.b32.xlu0 %v556, 127
      %v691 = vpop.permute.xlu0 %690
      %692 = vrot.lane.b32.xlu0 %v581, 127
      %v693 = vpop.permute.xlu0 %692
      %v696 = vsel %vm687, %v691, 0.0
      %v697 = vsel %vm687, %v693, 0.0
      %vm698 = vcmask 1040384
      %v699 = vsel %vm698, %v603, %v620
      %v700 = vsel %vm698, %v604, %v621
      %vm701 = vcmask 1041408
      %v702 = vsel %vm701, %v699, %v637
      %v703 = vsel %vm701, %v700, %v638
      %vm704 = vcmask 1042432
      %v705 = vsel %vm704, %v702, %v654
      %v706 = vsel %vm704, %v703, %v655
      %vm707 = vcmask 1043456
      %v708 = vsel %vm707, %v705, %v671
      %v709 = vsel %vm707, %v706, %v672
      %vm710 = vcmask 1044480
      %v711 = vsel %vm710, %v708, %v688
      %v712 = vsel %vm710, %v709, %v689
      %vm713 = vcmask 1045504
      %v714 = vsel %vm713, %v711, %v696
      %v715 = vsel %vm713, %v712, %v697
      %vm716 = vcmask 1046528
      %v717 = vsel %vm716, %v714, %v556
      %v718 = vsel %vm716, %v715, %v581
      %719 = vrot.lane.b32.xlu0 %v477, 112
      %v720 = vpop.permute.xlu0 %719
      %v722 = vsel %vm532, %v526, 0
      %v724 = vsel %vm532, %v720, 0
      %726 = vmatpush.xpose.msra.mxu0 0.0
      %727 = vmatpush.xpose.msra.mxu0 0.0
      %728 = vmatpush.xpose.msra.mxu0 0.0
      %729 = vmatpush.xpose.msra.mxu0 0.0
      %730 = vmatpush.xpose.msra.mxu0 0.0
      %731 = vmatpush.xpose.msra.mxu0 0.0
      %732 = vmatpush.xpose.msra.mxu0 0.0
      %733 = vmatpush.xpose.msra.mxu0 0.0
      %734 = vmatpush.xpose.msra.mxu0 0.0
      %735 = vmatpush.xpose.msra.mxu0 0.0
      %736 = vmatpush.xpose.msra.mxu0 0.0
      %737 = vmatpush.xpose.msra.mxu0 0.0
      %738 = vmatpush.xpose.msra.mxu0 0.0
      %739 = vmatpush.xpose.msra.mxu0 0.0
      %740 = vmatpush.xpose.msra.mxu0 0.0
      %741 = vmatpush.xpose.msra.mxu0 %v724
      %742 = vmatmul.f32.gmra.mxu0 %v722
      %v743 = vpop.f32.mrf.mxu0
      %v744 = vadd.f32 %v717, %v743
      %745 = vdwg.mxu0
      %746 = vrot.lane.b32.xlu0 %v511, 112
      %v747 = vpop.permute.xlu0 %746
      %v749 = vsel %vm532, %v527, 0
      %v751 = vsel %vm532, %v747, 0
      %753 = vmatpush.xpose.msra.mxu0 0.0
      %754 = vmatpush.xpose.msra.mxu0 0.0
      %755 = vmatpush.xpose.msra.mxu0 0.0
      %756 = vmatpush.xpose.msra.mxu0 0.0
      %757 = vmatpush.xpose.msra.mxu0 0.0
      %758 = vmatpush.xpose.msra.mxu0 0.0
      %759 = vmatpush.xpose.msra.mxu0 0.0
      %760 = vmatpush.xpose.msra.mxu0 0.0
      %761 = vmatpush.xpose.msra.mxu0 0.0
      %762 = vmatpush.xpose.msra.mxu0 0.0
      %763 = vmatpush.xpose.msra.mxu0 0.0
      %764 = vmatpush.xpose.msra.mxu0 0.0
      %765 = vmatpush.xpose.msra.mxu0 0.0
      %766 = vmatpush.xpose.msra.mxu0 0.0
      %767 = vmatpush.xpose.msra.mxu0 0.0
      %768 = vmatpush.xpose.msra.mxu0 %v751
      %769 = vmatmul.f32.gmra.mxu0 %v749
      %v770 = vpop.f32.mrf.mxu0
      %v771 = vadd.f32 %v718, %v770
      %772 = vdwg.mxu0
      %v773 = vmul.f32 %v744, 0.25
      %v774 = vmul.f32 %v771, 0.25
      %v775 = vsel %vm532, %v773, -inf
      %776 = vmax.xlane.f32.xlu0 %v775
      %v777 = vpop.xlane.xlu0 %776
      %v778 = vsel %vm532, %v774, -inf
      %779 = vmax.xlane.f32.xlu0 %v778
      %v780 = vpop.xlane.xlu0 %779
      %v781 = vsub.f32 %v773, %v777
      %v782 = vsub.f32 %v774, %v780
      %v783 = vmul.f32 %v781, 1.442695
      %v784 = vpow.pop %v783
      %v785 = vmul.f32 %v782, 1.442695
      %v786 = vpow.pop %v785
      %v787 = vsel %vm532, %v784, 0.0
      %788 = vadd.xlane.f32.xlu0 %v787
      %v789 = vpop.xlane.xlu0 %788
      %v790 = vsel %vm532, %v786, 0.0
      %791 = vadd.xlane.f32.xlu0 %v790
      %v792 = vpop.xlane.xlu0 %791
      %v793 = vrcp.pop %v789
      %v794 = vrcp.pop %v792
      %v795 = vmul.f32 %v784, %v793
      %v796 = vmul.f32 %v786, %v794
      %797 = vrot.lane.b32.xlu0 %v477, 96
      %v798 = vpop.permute.xlu0 %797
      %v801 = vsel %vm532, %v795, 0
      %803 = vmatpush.msra.mxu0 0.0
      %804 = vmatpush.msra.mxu0 0.0
      %805 = vmatpush.msra.mxu0 0.0
      %806 = vmatpush.msra.mxu0 0.0
      %807 = vmatpush.msra.mxu0 0.0
      %808 = vmatpush.msra.mxu0 0.0
      %809 = vmatpush.msra.mxu0 0.0
      %810 = vmatpush.msra.mxu0 0.0
      %811 = vmatpush.msra.mxu0 0.0
      %812 = vmatpush.msra.mxu0 0.0
      %813 = vmatpush.msra.mxu0 0.0
      %814 = vmatpush.msra.mxu0 0.0
      %815 = vmatpush.msra.mxu0 0.0
      %816 = vmatpush.msra.mxu0 0.0
      %817 = vmatpush.msra.mxu0 0.0
      %818 = vmatpush.msra.mxu0 %v798
      %819 = vmatmul.f32.gmra.mxu0 %v801
      %v820 = vpop.f32.mrf.mxu0
      %v821 = vadd.f32 0.0, %v820
      %822 = vdwg.mxu0
      %823 = vrot.lane.b32.xlu0 %v511, 96
      %v824 = vpop.permute.xlu0 %823
      %v827 = vsel %vm532, %v796, 0
      %829 = vmatpush.msra.mxu0 0.0
      %830 = vmatpush.msra.mxu0 0.0
      %831 = vmatpush.msra.mxu0 0.0
      %832 = vmatpush.msra.mxu0 0.0
      %833 = vmatpush.msra.mxu0 0.0
      %834 = vmatpush.msra.mxu0 0.0
      %835 = vmatpush.msra.mxu0 0.0
      %836 = vmatpush.msra.mxu0 0.0
      %837 = vmatpush.msra.mxu0 0.0
      %838 = vmatpush.msra.mxu0 0.0
      %839 = vmatpush.msra.mxu0 0.0
      %840 = vmatpush.msra.mxu0 0.0
      %841 = vmatpush.msra.mxu0 0.0
      %842 = vmatpush.msra.mxu0 0.0
      %843 = vmatpush.msra.mxu0 0.0
      %844 = vmatpush.msra.mxu0 %v824
      %845 = vmatmul.f32.gmra.mxu0 %v827
      %v846 = vpop.f32.mrf.mxu0
      %v847 = vadd.f32 0.0, %v846
      %848 = vdwg.mxu0
      %850 = vrot.lane.b32.xlu0 %v847, 8
      %v851 = vpop.permute.xlu0 %850
      %v853 = vsel %vm532, %v821, %v851
      %v855 = vsel %vm316, %v853, 0
      %857 = vmatpush.msra.mxu0 0.0
      %858 = vmatpush.msra.mxu0 0.0
      %859 = vmatpush.msra.mxu0 0.0
      %860 = vmatpush.msra.mxu0 0.0
      %861 = vmatpush.msra.mxu0 0.0
      %862 = vmatpush.msra.mxu0 0.0
      %863 = vmatpush.msra.mxu0 0.0
      %864 = vmatpush.msra.mxu0 0.0
      %865 = vmatpush.msra.mxu0 0.0
      %866 = vmatpush.msra.mxu0 0.0
      %867 = vmatpush.msra.mxu0 0.0
      %868 = vmatpush.msra.mxu0 0.0
      %869 = vmatpush.msra.mxu0 0.0
      %870 = vmatpush.msra.mxu0 0.0
      %871 = vmatpush.msra.mxu0 %v303
      %872 = vmatpush.msra.mxu0 %v301
      %873 = vmatmul.f32.gmra.mxu0 %v855
      %v874 = vpop.f32.mrf.mxu0
      %v875 = vadd.f32 0.0, %v874
      %876 = vdwg.mxu0
      %v877 = vadd.f32 %v420, %v875
      %v878 = vperm.slane %v313, 1
      %v879 = vadd.f32 %v877, %v878
      %v880 = vsel %vm316, %v879, 0.0
      %881 = vadd.xlane.f32.xlu0 %v880
      %v882 = vpop.xlane.xlu0 %881
      %v883 = vmul.f32 %v882, %v326
      %v884 = vsub.f32 %v879, %v883
      %v885 = vmul.f32 %v884, %v884
      %v886 = vsel %vm316, %v885, 0.0
      %887 = vadd.xlane.f32.xlu0 %v886
      %v888 = vpop.xlane.xlu0 %887
      %v889 = vmul.f32 %v888, %v326
      %v890 = vadd.f32 %v889, 1e-05
      %v891 = vrsqrt.pop %v890
      %v892 = vmul.f32 %v891, %v890
      %v893 = vmul.f32 %v892, %v891
      %v894 = vmul.f32 0.5, %v893
      %v895 = vsub.f32 1.5, %v894
      %v896 = vmul.f32 %v891, %v895
      %vm897 = vweird.f32 %v890
      %vm898 = vweird.f32 %v891
      %vm899 = vmor %vm897, %vm898
      %v900 = vsel %vm899, %v891, %v896
      %v901 = vmul.f32 %v884, %v900
      %v902 = vperm.slane %v313, 2
      %v903 = vmul.f32 %v901, %v902
      %v904 = vperm.slane %v313, 3
      %v905 = vadd.f32 %v903, %v904
      %v906 = vperm.slane %v313, 4
      %909 = vrot.lane.b32.xlu0 %v301, 112
      %v910 = vpop.permute.xlu0 %909
      %911 = vrot.lane.b32.xlu0 %v303, 112
      %v912 = vpop.permute.xlu0 %911
      %v916 = vsel %vm316, %v905, 0
      %918 = vmatpush.msra.mxu0 0.0
      %919 = vmatpush.msra.mxu0 0.0
      %920 = vmatpush.msra.mxu0 0.0
      %921 = vmatpush.msra.mxu0 0.0
      %922 = vmatpush.msra.mxu0 0.0
      %923 = vmatpush.msra.mxu0 0.0
      %924 = vmatpush.msra.mxu0 0.0
      %925 = vmatpush.msra.mxu0 0.0
      %926 = vmatpush.msra.mxu0 0.0
      %927 = vmatpush.msra.mxu0 0.0
      %928 = vmatpush.msra.mxu0 0.0
      %929 = vmatpush.msra.mxu0 0.0
      %930 = vmatpush.msra.mxu0 0.0
      %931 = vmatpush.msra.mxu0 0.0
      %932 = vmatpush.msra.mxu0 %v912
      %933 = vmatpush.msra.mxu0 %v910
      %934 = vmatmul.f32.gmra.mxu0 %v916
      %v935 = vpop.f32.mrf.mxu0
      %v936 = vadd.f32 %v906, %v935
      %937 = vdwg.mxu0
      %v938 = vsub.f32 0.0, %v936
      %v939 = vmul.f32 %v938, 1.442695
      %v940 = vpow.pop %v939
      %v941 = vadd.f32 %v940, 1.0
      %v942 = vrcp.pop %v941
      %v943 = vmul.f32 %v941, %v942
      %v944 = vsub.f32 1.0, %v943
      %v945 = vmul.f32 %v942, %v944
      %v946 = vadd.f32 %v942, %v945
      %vm947 = vweird.f32 %v941
      %vm948 = vweird.f32 %v942
      %vm949 = vmor %vm947, %vm948
      %v950 = vsel %vm949, %v942, %v946
      %v951 = vand.u32 2147483647, %v941
      %vm952 = vcmp.eq.f32.partialorder %v951, 8.507059e+37
      %v953 = vand.u32 %v941, 2147483648
      %v954 = vor.u32 1.1754944e-38, %v953
      %v955 = vsel %vm952, %v954, %v950
      %v956 = vmul.f32 1.0, %v955
      %958 = vrot.lane.b32.xlu0 %v956, 112
      %v959 = vpop.permute.xlu0 %958
      %v961 = vmul.f32 %v936, %v959
      %v963 = vrot.slane %v961, 5
      %v965 = vsel %vm704, 0.0, %v963
      %v966 = vsel %vm704, %v963, 0.0
      %v967 = vperm.slane %v313, 5
      %v968 = vmul.f32 %v965, %v967
      %v969 = vperm.slane %v313, 6
      %v970 = vmul.f32 %v965, %v969
      %v971 = vmul.f32 %v966, %v969
      %v974 = vrot.slane %v970, 1
      %v975 = vrot.slane %v971, 1
      %v976 = vsel %vm716, %v974, %v975
      %v978 = vadd.f32 %v968, %v976
      %v979 = vperm.slane %v313, 7
      %v980 = vmul.f32 %v965, %v979
      %v981 = vmul.f32 %v966, %v979
      %v984 = vrot.slane %v980, 2
      %v985 = vrot.slane %v981, 2
      %v986 = vsel %vm713, %v984, %v985
      %v988 = vadd.f32 %v978, %v986
      %v989 = vperm.slane %v314, 0
      %v990 = vmul.f32 %v965, %v989
      %v991 = vmul.f32 %v966, %v989
      %v994 = vrot.slane %v990, 3
      %v995 = vrot.slane %v991, 3
      %v996 = vsel %vm710, %v994, %v995
      %v998 = vadd.f32 %v988, %v996
      %v999 = vperm.slane %v314, 1
      %v1000 = vmul.f32 %v965, %v999
      %v1001 = vmul.f32 %v966, %v999
      %v1004 = vrot.slane %v1000, 4
      %v1005 = vrot.slane %v1001, 4
      %v1006 = vsel %vm707, %v1004, %v1005
      %v1008 = vadd.f32 %v998, %v1006
      %v1009 = vperm.slane %v314, 2
      %v1010 = vmul.f32 %v965, %v1009
      %v1011 = vmul.f32 %v966, %v1009
      %v1014 = vrot.slane %v1010, 5
      %v1015 = vrot.slane %v1011, 5
      %v1016 = vsel %vm704, %v1014, %v1015
      %v1018 = vadd.f32 %v1008, %v1016
      %v1019 = vperm.slane %v314, 3
      %v1020 = vmul.f32 %v965, %v1019
      %v1021 = vmul.f32 %v966, %v1019
      %v1024 = vrot.slane %v1020, 6
      %v1025 = vrot.slane %v1021, 6
      %v1026 = vsel %vm701, %v1024, %v1025
      %v1028 = vadd.f32 %v1018, %v1026
      %v1029 = vperm.slane %v314, 4
      %v1030 = vmul.f32 %v1028, %v1029
      %v1031 = vperm.slane %v314, 5
      %v1032 = vadd.f32 %v1030, %v1031
      %v1033 = vsub.f32 0.0, %v1032
      %v1034 = vmul.f32 %v1033, 1.442695
      %v1035 = vpow.pop %v1034
      %v1036 = vadd.f32 %v1035, 1.0
      %v1037 = vrcp.pop %v1036
      %v1038 = vmul.f32 %v1036, %v1037
      %v1039 = vsub.f32 1.0, %v1038
      %v1040 = vmul.f32 %v1037, %v1039
      %v1041 = vadd.f32 %v1037, %v1040
      %vm1042 = vweird.f32 %v1036
      %vm1043 = vweird.f32 %v1037
      %vm1044 = vmor %vm1042, %vm1043
      %v1045 = vsel %vm1044, %v1037, %v1041
      %v1046 = vand.u32 2147483647, %v1036
      %vm1047 = vcmp.eq.f32.partialorder %v1046, 8.507059e+37
      %v1048 = vand.u32 %v1036, 2147483648
      %v1049 = vor.u32 1.1754944e-38, %v1048
      %v1050 = vsel %vm1047, %v1049, %v1045
      %v1051 = vmul.f32 1.0, %v1050
      %v1052 = vmul.f32 %v1032, %v1051
      %v1053 = vperm.slane %v314, 6
      %1054 = vrot.lane.b32.xlu0 %v301, 80
      %v1055 = vpop.permute.xlu0 %1054
      %1056 = vrot.lane.b32.xlu0 %v303, 80
      %v1057 = vpop.permute.xlu0 %1056
      %v1061 = vsel %vm316, %v1052, 0
      %1063 = vmatpush.msra.mxu0 0.0
      %1064 = vmatpush.msra.mxu0 0.0
      %1065 = vmatpush.msra.mxu0 0.0
      %1066 = vmatpush.msra.mxu0 0.0
      %1067 = vmatpush.msra.mxu0 0.0
      %1068 = vmatpush.msra.mxu0 0.0
      %1069 = vmatpush.msra.mxu0 0.0
      %1070 = vmatpush.msra.mxu0 0.0
      %1071 = vmatpush.msra.mxu0 0.0
      %1072 = vmatpush.msra.mxu0 0.0
      %1073 = vmatpush.msra.mxu0 0.0
      %1074 = vmatpush.msra.mxu0 0.0
      %1075 = vmatpush.msra.mxu0 0.0
      %1076 = vmatpush.msra.mxu0 0.0
      %1077 = vmatpush.msra.mxu0 %v1057
      %1078 = vmatpush.msra.mxu0 %v1055
      %1079 = vmatmul.f32.gmra.mxu0 %v1061
      %v1080 = vpop.f32.mrf.mxu0
      %v1081 = vadd.f32 %v1053, %v1080
      %1082 = vdwg.mxu0
      %v1083 = vadd.f32 %v879, %v1081
      %v1084 = vsel %vm316, %v1083, 0.0
      %1085 = vadd.xlane.f32.xlu0 %v1084
      %v1086 = vpop.xlane.xlu0 %1085
      %v1087 = vmul.f32 %v1086, %v326
      %v1088 = vsub.f32 %v1083, %v1087
      %v1089 = vmul.f32 %v1088, %v1088
      %v1090 = vsel %vm316, %v1089, 0.0
      %1091 = vadd.xlane.f32.xlu0 %v1090
      %v1092 = vpop.xlane.xlu0 %1091
      %v1093 = vmul.f32 %v1092, %v326
      %v1094 = vadd.f32 %v1093, 1e-05
      %v1095 = vrsqrt.pop %v1094
      %v1096 = vmul.f32 %v1095, %v1094
      %v1097 = vmul.f32 %v1096, %v1095
      %v1098 = vmul.f32 0.5, %v1097
      %v1099 = vsub.f32 1.5, %v1098
      %v1100 = vmul.f32 %v1095, %v1099
      %vm1101 = vweird.f32 %v1094
      %vm1102 = vweird.f32 %v1095
      %vm1103 = vmor %vm1101, %vm1102
      %v1104 = vsel %vm1103, %v1095, %v1100
      %v1105 = vmul.f32 %v1088, %v1104
      %v1106 = vperm.slane %v314, 7
      %v1107 = vmul.f32 %v1105, %v1106
      %v1108 = vperm.slane %v315, 0
      %v1109 = vadd.f32 %v1107, %v1108
      %v1110 = vperm.slane %v315, 1
      %1111 = vrot.lane.b32.xlu0 %v301, 64
      %v1112 = vpop.permute.xlu0 %1111
      %1113 = vrot.lane.b32.xlu0 %v303, 64
      %v1114 = vpop.permute.xlu0 %1113
      %v1118 = vsel %vm316, %v1109, 0
      %1120 = vmatpush.msra.mxu0 0.0
      %1121 = vmatpush.msra.mxu0 0.0
      %1122 = vmatpush.msra.mxu0 0.0
      %1123 = vmatpush.msra.mxu0 0.0
      %1124 = vmatpush.msra.mxu0 0.0
      %1125 = vmatpush.msra.mxu0 0.0
      %1126 = vmatpush.msra.mxu0 0.0
      %1127 = vmatpush.msra.mxu0 0.0
      %1128 = vmatpush.msra.mxu0 0.0
      %1129 = vmatpush.msra.mxu0 0.0
      %1130 = vmatpush.msra.mxu0 0.0
      %1131 = vmatpush.msra.mxu0 0.0
      %1132 = vmatpush.msra.mxu0 0.0
      %1133 = vmatpush.msra.mxu0 0.0
      %1134 = vmatpush.msra.mxu0 %v1114
      %1135 = vmatpush.msra.mxu0 %v1112
      %1136 = vmatmul.f32.gmra.mxu0 %v1118
      %v1137 = vpop.f32.mrf.mxu0
      %v1138 = vadd.f32 %v1110, %v1137
      %1139 = vdwg.mxu0
      %v1140 = vsub.f32 0.0, %v1138
      %v1141 = vmul.f32 %v1140, 1.442695
      %v1142 = vpow.pop %v1141
      %v1143 = vadd.f32 %v1142, 1.0
      %v1144 = vrcp.pop %v1143
      %v1145 = vmul.f32 %v1143, %v1144
      %v1146 = vsub.f32 1.0, %v1145
      %v1147 = vmul.f32 %v1144, %v1146
      %v1148 = vadd.f32 %v1144, %v1147
      %vm1149 = vweird.f32 %v1143
      %vm1150 = vweird.f32 %v1144
      %vm1151 = vmor %vm1149, %vm1150
      %v1152 = vsel %vm1151, %v1144, %v1148
      %v1153 = vand.u32 2147483647, %v1143
      %vm1154 = vcmp.eq.f32.partialorder %v1153, 8.507059e+37
      %v1155 = vand.u32 %v1143, 2147483648
      %v1156 = vor.u32 1.1754944e-38, %v1155
      %v1157 = vsel %vm1154, %v1156, %v1152
      %v1158 = vmul.f32 1.0, %v1157
      %v1159 = vmul.f32 %v1138, %v1158
      %v1160 = vperm.slane %v315, 2
      %1169 = vrot.lane.b32.xlu0 %v304, 112
      %v1170 = vpop.permute.xlu0 %1169
      %1171 = vrot.lane.b32.xlu0 %v305, 112
      %v1172 = vpop.permute.xlu0 %1171
      %1173 = vrot.lane.b32.xlu0 %v306, 112
      %v1174 = vpop.permute.xlu0 %1173
      %1175 = vrot.lane.b32.xlu0 %v307, 112
      %v1176 = vpop.permute.xlu0 %1175
      %1177 = vrot.lane.b32.xlu0 %v308, 112
      %v1178 = vpop.permute.xlu0 %1177
      %1179 = vrot.lane.b32.xlu0 %v309, 112
      %v1180 = vpop.permute.xlu0 %1179
      %1181 = vrot.lane.b32.xlu0 %v310, 112
      %v1182 = vpop.permute.xlu0 %1181
      %1183 = vrot.lane.b32.xlu0 %v311, 112
      %v1184 = vpop.permute.xlu0 %1183
      %v1194 = vsel %vm395, %v1159, 0
      %1196 = vmatpush.msra.mxu0 0.0
      %1197 = vmatpush.msra.mxu0 0.0
      %1198 = vmatpush.msra.mxu0 0.0
      %1199 = vmatpush.msra.mxu0 0.0
      %1200 = vmatpush.msra.mxu0 0.0
      %1201 = vmatpush.msra.mxu0 0.0
      %1202 = vmatpush.msra.mxu0 0.0
      %1203 = vmatpush.msra.mxu0 0.0
      %1204 = vmatpush.msra.mxu0 %v1184
      %1205 = vmatpush.msra.mxu0 %v1182
      %1206 = vmatpush.msra.mxu0 %v1180
      %1207 = vmatpush.msra.mxu0 %v1178
      %1208 = vmatpush.msra.mxu0 %v1176
      %1209 = vmatpush.msra.mxu0 %v1174
      %1210 = vmatpush.msra.mxu0 %v1172
      %1211 = vmatpush.msra.mxu0 %v1170
      %1212 = vmatmul.f32.gmra.mxu0 %v1194
      %v1213 = vpop.f32.mrf.mxu0
      %v1214 = vadd.f32 %v1160, %v1213
      %1215 = vdwg.mxu0
      %v1216 = vmul.f32 %v1214, 0.5
      %v1217 = vadd.f32 %v1083, %v1216
      %v1218 = vsel %vm316, %v1217, 0.0
      %1219 = vadd.xlane.f32.xlu0 %v1218
      %v1220 = vpop.xlane.xlu0 %1219
      %v1221 = vmul.f32 %v1220, %v326
      %v1222 = vsub.f32 %v1217, %v1221
      %v1223 = vmul.f32 %v1222, %v1222
      %v1224 = vsel %vm316, %v1223, 0.0
      %1225 = vadd.xlane.f32.xlu0 %v1224
      %v1226 = vpop.xlane.xlu0 %1225
      %v1227 = vmul.f32 %v1226, %v326
      %v1228 = vadd.f32 %v1227, 1e-05
      %v1229 = vrsqrt.pop %v1228
      %v1230 = vmul.f32 %v1229, %v1228
      %v1231 = vmul.f32 %v1230, %v1229
      %v1232 = vmul.f32 0.5, %v1231
      %v1233 = vsub.f32 1.5, %v1232
      %v1234 = vmul.f32 %v1229, %v1233
      %vm1235 = vweird.f32 %v1228
      %vm1236 = vweird.f32 %v1229
      %vm1237 = vmor %vm1235, %vm1236
      %v1238 = vsel %vm1237, %v1229, %v1234
      %v1239 = vmul.f32 %v1222, %v1238
      %v1240 = vperm.slane %v315, 3
      %v1241 = vmul.f32 %v1239, %v1240
      %v1242 = vperm.slane %v315, 4
      %v1243 = vadd.f32 %v1241, %v1242
      %1244 = vst.msk [vmem:[%s291] sm:$0xff] %vm316, %v1243
      %p1245 = scmp.lt.s32.totalorder %s20, 1
      %s1246 = scalar_select %p1245, %s20, 1
      %s1247 = smul.addr %s1246, 8
      %s1248 = scalar_lea.vmem %s5, %s1247
      // Predicated region
      $region45: #{_lambda_.11} parent=39 // pred_check
        %p1249 = pneg %p171
      $region46: #{_lambda_.11} parent=39 // pred_check_branch
        %1251 = sbr.rel (%p1249) target = $region48
      $region47: #{_lambda_.11} parent=39 // pred_region
        _
      $region48: #{_lambda_.11} parent=39 // pred_fallthru
        _
    $region40: #{_lambda_.11} parent=5 // pred_fallthru
      _
    %p1252 = scmp.le.s32.totalorder 2, %s11
    // Predicated region
    $region49: #{_lambda_.11} parent=5 // pred_check
      %p1253 = pneg %p1252
    $region50: #{_lambda_.11} parent=5 // pred_check_branch
      %1255 = sbr.rel (%p1253) target = $region52
    $region51: #{_lambda_.11} parent=5 // pred_region
      %s1256 = ssub.s32 %s11, 2
      // Predicated region
      $region53: #{_lambda_.11} parent=51 // pred_check
        %p1257 = pneg %p177
      $region54: #{_lambda_.11} parent=51 // pred_check_branch
        %1259 = sbr.rel (%p1257) target = $region56
      $region55: #{_lambda_.11} parent=51 // pred_region
        %p1260 = scmp.lt.s32.totalorder %s22, 1
        %s1261 = scalar_select %p1260, %s22, 1
        %s1262 = smul.addr %s1261, 8
        %s1263 = scalar_lea.vmem %s5, %s1262
      $region56: #{_lambda_.11} parent=51 // pred_fallthru
        _
    $region52: #{_lambda_.11} parent=5 // pred_fallthru
      _
  $region6: #{_lambda_.11} parent=0 // loop_footer
    %s15 = sadd.s32 1, %s11
  $region7: #{_lambda_.11} parent=0 // loop_footer_branch
    %10 = sbr.rel target = $region3
  $region8: #{_lambda_.11} parent=0 // loop_exit
    _

</llo_original>
